<compile_context>
chip_gen: v7x
topology: tpu7x:2x2x1
jax: 0.10.0
libtpu: 0.0.40
codegen_flags: <defaults>
</compile_context>

<pallas_src>
import functools

import jax
import jax.numpy as jnp
from jax.experimental import pallas as pl
from jax.experimental.pallas import tpu as pltpu

_ROW_GRAIN = 16  # bf16 sublane-packing grain; harmless for f32


def _round_up(n, m):
    return ((n + m - 1) // m) * m


def _cdiv(a, b):
    return -(-a // b)


def _tpu_num_tensorcores():
    """TensorCores a single pallas_call can shard a 'parallel' grid axis over."""
    try:
        kind = jax.devices()[0].device_kind.lower()
    except Exception:
        return 1
    for tag in ("v7", "v5p", "v4"):
        if tag in kind:
            return 2  # dual-TC / megacore
    return 1  # v5e / v6e: single TensorCore


def _select_batch_tiling(batch, num_cores, block_b=None):
    """Pick (batch tile, grid steps, padded batch).

    Single-TC: as few steps as possible (one big block up to the cap) so the
    fixed per-step overhead is paid once.  Dual-TC: step count a multiple of
    num_cores so both cores get equal work under dimension_semantics=parallel.
    """
    b_aligned = _round_up(max(batch, _ROW_GRAIN), _ROW_GRAIN)
    cap = 8192 if block_b is None else max(_ROW_GRAIN,
                                           (int(block_b) // _ROW_GRAIN) * _ROW_GRAIN)
    steps = max(num_cores, _cdiv(b_aligned, cap))
    if num_cores > 1 and steps % num_cores:
        steps += num_cores - (steps % num_cores)
    bb = _round_up(_cdiv(b_aligned, steps), _ROW_GRAIN)
    return bb, steps, steps * bb


def _resident_spec(shape, const_map):
    # Weights/biases: constant index map -> fetched once, stay resident in VMEM.
    # Single-buffer them (no point double-buffering a block that never changes).
    try:
        return pl.BlockSpec(shape, const_map, pipeline_mode=pl.Buffered(1))
    except Exception:  # older JAX without pipeline_mode / Buffered
        return pl.BlockSpec(shape, const_map)


def _make_touch_encoder_kernel(precision):
    def kernel(x_ref, w1_ref, b1_ref, w2_ref, b2_ref, w3_ref, b3_ref, o_ref):
        # Layer 1: Linear(in -> hidden) + ReLU.  x stays f32 (K is tiny).
        h1 = jnp.dot(x_ref[...].astype(jnp.float32),
                     w1_ref[...].astype(jnp.float32),
                     preferred_element_type=jnp.float32, precision=precision)
        h1 = jnp.maximum(h1 + b1_ref[...], 0.0)
        # TODO(synk): Dropout(0.1) training-mode masking not implemented (identity).

        # Layer 2: Linear(hidden -> hidden) + ReLU (bf16 weights, f32 accumulate).
        h2 = jnp.dot(h1.astype(w2_ref.dtype), w2_ref[...],
                     preferred_element_type=jnp.float32, precision=precision)
        h2 = jnp.maximum(h2 + b2_ref[...], 0.0)

        # Layer 3: Linear(hidden -> out) + Tanh; cast only at the store.
        h3 = jnp.dot(h2.astype(w3_ref.dtype), w3_ref[...],
                     preferred_element_type=jnp.float32, precision=precision)
        o_ref[...] = jnp.tanh(h3 + b3_ref[...]).astype(o_ref.dtype)

    return kernel


def prepare_params(params, compute_dtype=jnp.bfloat16):
    """One-time weight packing (hoisted out of the per-call path).

    w1 stays f32 (layer-1 contraction is only input_dim deep and this lets x
    stay f32 with zero pre-kernel pad/cast ops); w2/w3 are cast to compute_dtype
    (bf16 default); biases are f32 row vectors added to the f32 accumulators.
    """
    as_row = lambda b: b.reshape(1, -1).astype(jnp.float32)
    return (
        params["w1"].astype(jnp.float32),
        as_row(params["b1"]),
        params["w2"].astype(compute_dtype),
        as_row(params["b2"]),
        params["w3"].astype(compute_dtype),
        as_row(params["b3"]),
    )


def touch_encoder_fwd(x, prepared, *, out_dtype=jnp.bfloat16, block_b=None,
                      precision=None, num_cores=None):
    """Fused forward pass. x: (B, input_dim) f32. prepared: output of prepare_params."""
    w1, b1, w2, b2, w3, b3 = prepared
    batch, in_dim = x.shape
    hidden = w1.shape[1]
    out_dim = w3.shape[1]

    if num_cores is None:
        num_cores = _tpu_num_tensorcores()
    bb, steps, b_pad = _select_batch_tiling(batch, num_cores, block_b)

    x_p = x if b_pad == batch else jnp.pad(x, ((0, b_pad - batch), (0, 0)))

    w_bytes = (w1.size * w1.dtype.itemsize + w2.size * w2.dtype.itemsize
               + w3.size * w3.dtype.itemsize
               + (b1.size + b2.size + b3.size) * 4)
    cost = pl.CostEstimate(
        flops=2 * b_pad * (in_dim * hidden + hidden * hidden + hidden * out_dim),
        transcendentals=b_pad * out_dim,  # tanh
        bytes_accessed=(b_pad * in_dim * x.dtype.itemsize
                        + b_pad * out_dim * jnp.dtype(out_dtype).itemsize
                        + w_bytes),
    )

    const = lambda i: (0, 0)
    # Raise the scoped VMEM limit only when the tile is large (v5e default is 16 MiB).
    vmem_limit = 48 * 1024 * 1024 if bb > 2048 else None

    out = pl.pallas_call(
        _make_touch_encoder_kernel(precision),
        out_shape=jax.ShapeDtypeStruct((b_pad, out_dim), out_dtype),
        grid_spec=pltpu.PrefetchScalarGridSpec(
            num_scalar_prefetch=0,
            grid=(steps,),
            in_specs=[
                pl.BlockSpec((bb, in_dim), lambda i: (i, 0)),  # x tile (streamed)
                _resident_spec((in_dim, hidden), const),       # w1 (f32, resident)
                _resident_spec((1, hidden), const),            # b1
                _resident_spec((hidden, hidden), const),       # w2
                _resident_spec((1, hidden), const),            # b2
                _resident_spec((hidden, out_dim), const),      # w3
                _resident_spec((1, out_dim), const),           # b3
            ],
            out_specs=pl.BlockSpec((bb, out_dim), lambda i: (i, 0)),
        ),
        compiler_params=pltpu.CompilerParams(
            dimension_semantics=("parallel",),  # shards batch steps across TCs on v7x
            vmem_limit_bytes=vmem_limit,
        ),
        cost_estimate=cost,
    )(x_p, w1, b1, w2, b2, w3, b3)

    return out if b_pad == batch else out[:batch]


def init_params(key, input_dim=6, hidden_dim=128, output_dim=64):
    """Deterministic synthetic initialization (PyTorch-style uniform fan-in bounds)."""
    ks = jax.random.split(key, 6)

    def lin(kw, kb, fan_in, fan_out):
        bound = 1.0 / jnp.sqrt(fan_in)
        w = jax.random.uniform(kw, (fan_in, fan_out), jnp.float32, -bound, bound)
        b = jax.random.uniform(kb, (1, fan_out), jnp.float32, -bound, bound)
        return w, b

    w1, b1 = lin(ks[0], ks[1], input_dim, hidden_dim)
    w2, b2 = lin(ks[2], ks[3], hidden_dim, hidden_dim)
    w3, b3 = lin(ks[4], ks[5], hidden_dim, output_dim)
    return {"w1": w1, "b1": b1, "w2": w2, "b2": b2, "w3": w3, "b3": b3}


def touch_encoder_ref(x, p, precision=None):
    """Pure-JAX f32 reference (Dropout = identity, matching eval semantics)."""
    dot = functools.partial(jnp.dot, precision=precision)
    h = jnp.maximum(dot(x, p["w1"]) + p["b1"], 0.0)
    h = jnp.maximum(dot(h, p["w2"]) + p["b2"], 0.0)
    return jnp.tanh(dot(h, p["w3"]) + p["b3"])


if __name__ == "__main__":
    key = jax.random.PRNGKey(0)
    k_x, k_p = jax.random.split(key)

    B, input_dim, hidden_dim, output_dim = 256, 6, 128, 64
    x = jax.random.normal(k_x, (B, input_dim), dtype=jnp.float32)
    params = init_params(k_p, input_dim, hidden_dim, output_dim)

    ref = touch_encoder_ref(x, params, precision=jax.lax.Precision.HIGHEST)

    # f32 weights + HIGHEST matmul precision: closest to the PyTorch module numerics.
    prep_f32 = prepare_params(params, compute_dtype=jnp.float32)
    out_f32 = jax.block_until_ready(
        touch_encoder_fwd(x, prep_f32, out_dtype=jnp.float32,
                          precision=jax.lax.Precision.HIGHEST))
    assert out_f32.shape == (B, output_dim), out_f32.shape
    assert jnp.allclose(out_f32, ref, atol=1e-5, rtol=1e-5), "f32 path mismatch vs reference"

    # Default fast path: bf16 weights (layers 2/3), bf16 output stream, f32 accumulation.
    prep_bf16 = prepare_params(params)  # prepared ONCE, reused for every call
    out_bf16 = jax.block_until_ready(touch_encoder_fwd(x, prep_bf16))
    assert out_bf16.shape == (B, output_dim), out_bf16.shape
    assert out_bf16.dtype == jnp.bfloat16, out_bf16.dtype
    assert jnp.allclose(out_bf16.astype(jnp.float32), ref, atol=3e-2, rtol=3e-2), \
        "bf16 path mismatch vs reference"

    print("KERNEL_OK")
</pallas_src>

<mosaic_0001>
module attributes {stable_mosaic.version = 11 : i64} {
  func.func @kernel(%arg0: i32, %arg1: memref<256x6xf32, #tpu.memory_space<vmem>>, %arg2: memref<6x128xf32, #tpu.memory_space<vmem>>, %arg3: memref<1x128xf32, #tpu.memory_space<vmem>>, %arg4: memref<128x128xf32, #tpu.memory_space<vmem>>, %arg5: memref<1x128xf32, #tpu.memory_space<vmem>>, %arg6: memref<128x64xf32, #tpu.memory_space<vmem>>, %arg7: memref<1x64xf32, #tpu.memory_space<vmem>>, %arg8: memref<256x64xf32, #tpu.memory_space<vmem>>) attributes {dimension_semantics = [#tpu.dimension_semantics<parallel>], iteration_bounds = array<i64: 1>, scalar_prefetch = 0 : i64, scratch_operands = 0 : i64, tpu.core_type = #tpu.core_type<tc>, window_params = [{transform_indices = @transform_0, window_bounds = array<i64: 256, 6>}, {pipeline_mode = #tpu.pipeline_mode<synchronous>, transform_indices = @transform_1, window_bounds = array<i64: 6, 128>}, {pipeline_mode = #tpu.pipeline_mode<synchronous>, transform_indices = @transform_2, window_bounds = array<i64: 1, 128>}, {pipeline_mode = #tpu.pipeline_mode<synchronous>, transform_indices = @transform_3, window_bounds = array<i64: 128, 128>}, {pipeline_mode = #tpu.pipeline_mode<synchronous>, transform_indices = @transform_4, window_bounds = array<i64: 1, 128>}, {pipeline_mode = #tpu.pipeline_mode<synchronous>, transform_indices = @transform_5, window_bounds = array<i64: 128, 64>}, {pipeline_mode = #tpu.pipeline_mode<synchronous>, transform_indices = @transform_6, window_bounds = array<i64: 1, 64>}, {transform_indices = @transform_7, window_bounds = array<i64: 256, 64>}]} {
    %c0 = arith.constant 0 : index
    %c0_0 = arith.constant 0 : index
    %0 = vector.load %arg1[%c0, %c0_0] : memref<256x6xf32, #tpu.memory_space<vmem>>, vector<256x6xf32>
    %c0_1 = arith.constant 0 : index
    %c0_2 = arith.constant 0 : index
    %1 = vector.load %arg2[%c0_1, %c0_2] : memref<6x128xf32, #tpu.memory_space<vmem>>, vector<6x128xf32>
    %cst = arith.constant dense<0.000000e+00> : vector<256x128xf32>
    %2 = tpu.matmul %0, %1, %cst {dimension_numbers = #tpu.dot_dimension_numbers<[1], [0], [0], [1], [0, 0, 1, 1], [], []>, precision = #tpu.contract_precision<fp32>} : vector<256x6xf32>, vector<6x128xf32>, vector<256x128xf32> -> vector<256x128xf32>
    %c0_3 = arith.constant 0 : index
    %c0_4 = arith.constant 0 : index
    %3 = vector.load %arg3[%c0_3, %c0_4] : memref<1x128xf32, #tpu.memory_space<vmem>>, vector<1x128xf32>
    %4 = vector.broadcast %3 : vector<1x128xf32> to vector<256x128xf32>
    %5 = arith.addf %2, %4 : vector<256x128xf32>
    %cst_5 = arith.constant 0.000000e+00 : f32
    %6 = vector.broadcast %cst_5 : f32 to vector<256x128xf32>
    %7 = arith.maximumf %5, %6 : vector<256x128xf32>
    %c0_6 = arith.constant 0 : index
    %c0_7 = arith.constant 0 : index
    %8 = vector.load %arg4[%c0_6, %c0_7] : memref<128x128xf32, #tpu.memory_space<vmem>>, vector<128x128xf32>
    %cst_8 = arith.constant dense<0.000000e+00> : vector<256x128xf32>
    %9 = tpu.matmul %7, %8, %cst_8 {dimension_numbers = #tpu.dot_dimension_numbers<[1], [0], [0], [1], [0, 0, 1, 1], [], []>, precision = #tpu.contract_precision<fp32>} : vector<256x128xf32>, vector<128x128xf32>, vector<256x128xf32> -> vector<256x128xf32>
    %c0_9 = arith.constant 0 : index
    %c0_10 = arith.constant 0 : index
    %10 = vector.load %arg5[%c0_9, %c0_10] : memref<1x128xf32, #tpu.memory_space<vmem>>, vector<1x128xf32>
    %11 = vector.broadcast %10 : vector<1x128xf32> to vector<256x128xf32>
    %12 = arith.addf %9, %11 : vector<256x128xf32>
    %cst_11 = arith.constant 0.000000e+00 : f32
    %13 = vector.broadcast %cst_11 : f32 to vector<256x128xf32>
    %14 = arith.maximumf %12, %13 : vector<256x128xf32>
    %c0_12 = arith.constant 0 : index
    %c0_13 = arith.constant 0 : index
    %15 = vector.load %arg6[%c0_12, %c0_13] : memref<128x64xf32, #tpu.memory_space<vmem>>, vector<128x64xf32>
    %cst_14 = arith.constant dense<0.000000e+00> : vector<256x64xf32>
    %16 = tpu.matmul %14, %15, %cst_14 {dimension_numbers = #tpu.dot_dimension_numbers<[1], [0], [0], [1], [0, 0, 1, 1], [], []>, precision = #tpu.contract_precision<fp32>} : vector<256x128xf32>, vector<128x64xf32>, vector<256x64xf32> -> vector<256x64xf32>
    %c0_15 = arith.constant 0 : index
    %c0_16 = arith.constant 0 : index
    %17 = vector.load %arg7[%c0_15, %c0_16] : memref<1x64xf32, #tpu.memory_space<vmem>>, vector<1x64xf32>
    %18 = vector.broadcast %17 : vector<1x64xf32> to vector<256x64xf32>
    %19 = arith.addf %16, %18 : vector<256x64xf32>
    %20 = math.tanh %19 : vector<256x64xf32>
    %c0_17 = arith.constant 0 : index
    %c0_18 = arith.constant 0 : index
    %21 = vector.load %arg8[%c0_17, %c0_18] : memref<256x64xf32, #tpu.memory_space<vmem>>, vector<256x64xf32>
    tpu.vector_store %arg8[%c0_17, %c0_18], %20 {strides = array<i32>} : memref<256x64xf32, #tpu.memory_space<vmem>>, vector<256x64xf32>,
    return
  }
  func.func @transform_0(%arg0: i32) -> (i32, i32) {
    %c0_i32 = arith.constant 0 : i32
    %c0_i32_0 = arith.constant 0 : i32
    return %arg0, %c0_i32 : i32, i32
  }
  func.func @transform_1(%arg0: i32) -> (i32, i32) {
    %c0_i32 = arith.constant 0 : i32
    %c0_i32_0 = arith.constant 0 : i32
    %c0_i32_1 = arith.constant 0 : i32
    return %c0_i32, %c0_i32_0 : i32, i32
  }
  func.func @transform_2(%arg0: i32) -> (i32, i32) {
    %c0_i32 = arith.constant 0 : i32
    %c0_i32_0 = arith.constant 0 : i32
    %c0_i32_1 = arith.constant 0 : i32
    return %c0_i32, %c0_i32_0 : i32, i32
  }
  func.func @transform_3(%arg0: i32) -> (i32, i32) {
    %c0_i32 = arith.constant 0 : i32
    %c0_i32_0 = arith.constant 0 : i32
    %c0_i32_1 = arith.constant 0 : i32
    return %c0_i32, %c0_i32_0 : i32, i32
  }
  func.func @transform_4(%arg0: i32) -> (i32, i32) {
    %c0_i32 = arith.constant 0 : i32
    %c0_i32_0 = arith.constant 0 : i32
    %c0_i32_1 = arith.constant 0 : i32
    return %c0_i32, %c0_i32_0 : i32, i32
  }
  func.func @transform_5(%arg0: i32) -> (i32, i32) {
    %c0_i32 = arith.constant 0 : i32
    %c0_i32_0 = arith.constant 0 : i32
    %c0_i32_1 = arith.constant 0 : i32
    return %c0_i32, %c0_i32_0 : i32, i32
  }
  func.func @transform_6(%arg0: i32) -> (i32, i32) {
    %c0_i32 = arith.constant 0 : i32
    %c0_i32_0 = arith.constant 0 : i32
    %c0_i32_1 = arith.constant 0 : i32
    return %c0_i32, %c0_i32_0 : i32, i32
  }
  func.func @transform_7(%arg0: i32) -> (i32, i32) {
    %c0_i32 = arith.constant 0 : i32
    %c0_i32_0 = arith.constant 0 : i32
    return %arg0, %c0_i32 : i32, i32
  }
}

</mosaic_0001>

<llo_original>
// kernel: tpu_custom_call.1
$region0: #{tpu_custom_call.1}
  #allocation0 [shape = 'u32[]', space=smem, size = 0x4, offset = 0x4, fixed_abs, tag = 'smem constant byte address 0x4 - core index']
  #allocation1 [shape = 'u32[144,128]{1,0:T(1,128)}', space=vmem, size = 0x12000, scoped, tag = 'internal scratch']
  %s0 = inlined_call_operand.vmem [shape: f32[256,6], index: 0, kind: input, shape index: {}]
  %s1 = inlined_call_operand.vmem [shape: f32[6,128], index: 1, kind: input, shape index: {}]
  %s2 = inlined_call_operand.vmem [shape: f32[1,128], index: 2, kind: input, shape index: {}]
  %s3 = inlined_call_operand.vmem [shape: f32[128,128], index: 3, kind: input, shape index: {}]
  %s4 = inlined_call_operand.vmem [shape: f32[1,128], index: 4, kind: input, shape index: {}]
  %s5 = inlined_call_operand.vmem [shape: f32[128,64], index: 5, kind: input, shape index: {}]
  %s6 = inlined_call_operand.vmem [shape: f32[1,64], index: 6, kind: input, shape index: {}]
  %s7 = inlined_call_operand.vmem [shape: f32[256,64], index: 7, kind: output, shape index: {}]
  %s8 = sld [smem:[#allocation0]]
  $region38: #{tpu_custom_call.1} parent=0
    _
  %s10 = ssub.s32 1, %s8
  %s11 = scalar_select 0, %s10, %s8
  // Predicated region
  $region2: #{tpu_custom_call.1} parent=0 // pred_check
    _
  $region3: #{tpu_custom_call.1} parent=0 // pred_check_branch
    %13 = sbr.rel (0) target = $region5
  $region4: #{tpu_custom_call.1} parent=0 // pred_region
    _
  $region5: #{tpu_custom_call.1} parent=0 // pred_fallthru
    _
  // Predicated region
  $region6: #{tpu_custom_call.1} parent=0 // pred_check
    _
  $region7: #{tpu_custom_call.1} parent=0 // pred_check_branch
    %15 = sbr.rel (0) target = $region9
  $region8: #{tpu_custom_call.1} parent=0 // pred_region
    _
  $region9: #{tpu_custom_call.1} parent=0 // pred_fallthru
    _
  // Predicated region
  $region10: #{tpu_custom_call.1} parent=0 // pred_check
    _
  $region11: #{tpu_custom_call.1} parent=0 // pred_check_branch
    %17 = sbr.rel (0) target = $region13
  $region12: #{tpu_custom_call.1} parent=0 // pred_region
    _
  $region13: #{tpu_custom_call.1} parent=0 // pred_fallthru
    _
  // Predicated region
  $region14: #{tpu_custom_call.1} parent=0 // pred_check
    _
  $region15: #{tpu_custom_call.1} parent=0 // pred_check_branch
    %19 = sbr.rel (0) target = $region17
  $region16: #{tpu_custom_call.1} parent=0 // pred_region
    _
  $region17: #{tpu_custom_call.1} parent=0 // pred_fallthru
    _
  // Predicated region
  $region18: #{tpu_custom_call.1} parent=0 // pred_check
    _
  $region19: #{tpu_custom_call.1} parent=0 // pred_check_branch
    %21 = sbr.rel (0) target = $region21
  $region20: #{tpu_custom_call.1} parent=0 // pred_region
    _
  $region21: #{tpu_custom_call.1} parent=0 // pred_fallthru
    _
  // Predicated region
  $region22: #{tpu_custom_call.1} parent=0 // pred_check
    _
  $region23: #{tpu_custom_call.1} parent=0 // pred_check_branch
    %23 = sbr.rel (0) target = $region25
  $region24: #{tpu_custom_call.1} parent=0 // pred_region
    _
  $region25: #{tpu_custom_call.1} parent=0 // pred_fallthru
    _
  // Predicated region
  $region26: #{tpu_custom_call.1} parent=0 // pred_check
    _
  $region27: #{tpu_custom_call.1} parent=0 // pred_check_branch
    %25 = sbr.rel (0) target = $region29
  $region28: #{tpu_custom_call.1} parent=0 // pred_region
    _
  $region29: #{tpu_custom_call.1} parent=0 // pred_fallthru
    _
  %v26 = vld [vmem:[%s0] sm:$0xff]
  %v27 = vld [vmem:[%s0 + $0x8] sm:$0xff]
  %v28 = vld [vmem:[%s0 + $0x10] sm:$0xff]
  %v29 = vld [vmem:[%s0 + $0x18] sm:$0xff]
  %v30 = vld [vmem:[%s0 + $0x20] sm:$0xff]
  %v31 = vld [vmem:[%s0 + $0x28] sm:$0xff]
  %v32 = vld [vmem:[%s0 + $0x30] sm:$0xff]
  %v33 = vld [vmem:[%s0 + $0x38] sm:$0xff]
  %v34 = vld [vmem:[%s0 + $0x40] sm:$0xff]
  %v35 = vld [vmem:[%s0 + $0x48] sm:$0xff]
  %v36 = vld [vmem:[%s0 + $0x50] sm:$0xff]
  %v37 = vld [vmem:[%s0 + $0x58] sm:$0xff]
  %v38 = vld [vmem:[%s0 + $0x60] sm:$0xff]
  %v39 = vld [vmem:[%s0 + $0x68] sm:$0xff]
  %v40 = vld [vmem:[%s0 + $0x70] sm:$0xff]
  %v41 = vld [vmem:[%s0 + $0x78] sm:$0xff]
  %v42 = vld [vmem:[%s0 + $0x80] sm:$0xff]
  %v43 = vld [vmem:[%s0 + $0x88] sm:$0xff]
  %v44 = vld [vmem:[%s0 + $0x90] sm:$0xff]
  %v45 = vld [vmem:[%s0 + $0x98] sm:$0xff]
  %v46 = vld [vmem:[%s0 + $0xa0] sm:$0xff]
  %v47 = vld [vmem:[%s0 + $0xa8] sm:$0xff]
  %v48 = vld [vmem:[%s0 + $0xb0] sm:$0xff]
  %v49 = vld [vmem:[%s0 + $0xb8] sm:$0xff]
  %v50 = vld [vmem:[%s0 + $0xc0] sm:$0xff]
  %v51 = vld [vmem:[%s0 + $0xc8] sm:$0xff]
  %v52 = vld [vmem:[%s0 + $0xd0] sm:$0xff]
  %v53 = vld [vmem:[%s0 + $0xd8] sm:$0xff]
  %v54 = vld [vmem:[%s0 + $0xe0] sm:$0xff]
  %v55 = vld [vmem:[%s0 + $0xe8] sm:$0xff]
  %v56 = vld [vmem:[%s0 + $0xf0] sm:$0xff]
  %v57 = vld [vmem:[%s0 + $0xf8] sm:$0xff]
  %v58 = vld [vmem:[%s1] sm:$0x3f]
  %v59 = vld [vmem:[%s2] sm:$0x1]
  %v61 = vlaneseq
  %v62 = vshrl.u32 %v61, 7
  %v63 = vsub.s32 0, %v62
  %v64 = vrot.slane %v59, %v63
  %vm66 = vcmask 48128
  %v68 = vsel %vm66, %v26, 0
  %v71 = vsel %vm66, %v27, 0
  %v74 = vsel %vm66, %v28, 0
  %v77 = vsel %vm66, %v29, 0
  %v80 = vsel %vm66, %v30, 0
  %v83 = vsel %vm66, %v31, 0
  %v86 = vsel %vm66, %v32, 0
  %v89 = vsel %vm66, %v33, 0
  %v92 = vsel %vm66, %v34, 0
  %v95 = vsel %vm66, %v35, 0
  %v98 = vsel %vm66, %v36, 0
  %v101 = vsel %vm66, %v37, 0
  %v104 = vsel %vm66, %v38, 0
  %v107 = vsel %vm66, %v39, 0
  %v110 = vsel %vm66, %v40, 0
  %v113 = vsel %vm66, %v41, 0
  %v116 = vsel %vm66, %v42, 0
  %v119 = vsel %vm66, %v43, 0
  %v122 = vsel %vm66, %v44, 0
  %v125 = vsel %vm66, %v45, 0
  %v128 = vsel %vm66, %v46, 0
  %v131 = vsel %vm66, %v47, 0
  %v134 = vsel %vm66, %v48, 0
  %v137 = vsel %vm66, %v49, 0
  %v140 = vsel %vm66, %v50, 0
  %v143 = vsel %vm66, %v51, 0
  %v146 = vsel %vm66, %v52, 0
  %v149 = vsel %vm66, %v53, 0
  %v152 = vsel %vm66, %v54, 0
  %v155 = vsel %vm66, %v55, 0
  %v158 = vsel %vm66, %v56, 0
  %v161 = vsel %vm66, %v57, 0
  %vm163 = vcmask 1045504
  %v165 = vsel %vm163, %v58, 0
  %167 = vmatprep.subr.mxu0 0.0
  %v168 = vand.u32 %v165, 4294901760
  %169 = vmatpush1.msra.mxu0 %v168
  %170 = vmatprep.subr.mxu0 0.0
  %171 = vmatpush1.msra.mxu0 0.0
  %172 = vmatprep.subr.mxu0 0.0
  %173 = vmatpush1.msra.mxu0 0.0
  %174 = vmatprep.subr.mxu0 0.0
  %175 = vmatpush1.msra.mxu0 0.0
  %176 = vmatprep.subr.mxu0 0.0
  %177 = vmatpush1.msra.mxu0 0.0
  %178 = vmatprep.subr.mxu0 0.0
  %179 = vmatpush1.msra.mxu0 0.0
  %180 = vmatprep.subr.mxu0 0.0
  %181 = vmatpush1.msra.mxu0 0.0
  %182 = vmatprep.subr.mxu0 0.0
  %183 = vmatpush1.msra.mxu0 0.0
  %184 = vmatprep.subr.mxu0 0.0
  %185 = vmatpush1.msra.mxu0 0.0
  %186 = vmatprep.subr.mxu0 0.0
  %187 = vmatpush1.msra.mxu0 0.0
  %188 = vmatprep.subr.mxu0 0.0
  %189 = vmatpush1.msra.mxu0 0.0
  %190 = vmatprep.subr.mxu0 0.0
  %191 = vmatpush1.msra.mxu0 0.0
  %192 = vmatprep.subr.mxu0 0.0
  %193 = vmatpush1.msra.mxu0 0.0
  %194 = vmatprep.subr.mxu0 0.0
  %195 = vmatpush1.msra.mxu0 0.0
  %196 = vmatprep.subr.mxu0 0.0
  %197 = vmatpush1.msra.mxu0 0.0
  %198 = vmatprep.subr.mxu0 0.0
  %199 = vmatpush1.msra.mxu0 0.0
  %200 = vmatprep.subr.mxu0 0.0
  %201 = vmatpush1.msra.mxu0 0.0
  %202 = vmatprep.subr.mxu0 0.0
  %203 = vmatpush1.msra.mxu0 0.0
  %204 = vmatprep.subr.mxu0 0.0
  %205 = vmatpush1.msra.mxu0 0.0
  %206 = vmatprep.subr.mxu0 0.0
  %207 = vmatpush1.msra.mxu0 0.0
  %208 = vmatprep.subr.mxu0 0.0
  %209 = vmatpush1.msra.mxu0 0.0
  %210 = vmatprep.subr.mxu0 0.0
  %211 = vmatpush1.msra.mxu0 0.0
  %212 = vmatprep.subr.mxu0 0.0
  %213 = vmatpush1.msra.mxu0 0.0
  %214 = vmatprep.subr.mxu0 0.0
  %215 = vmatpush1.msra.mxu0 0.0
  %216 = vmatprep.subr.mxu0 0.0
  %217 = vmatpush1.msra.mxu0 0.0
  %218 = vmatprep.subr.mxu0 0.0
  %219 = vmatpush1.msra.mxu0 0.0
  %220 = vmatprep.subr.mxu0 0.0
  %221 = vmatpush1.msra.mxu0 0.0
  %222 = vmatprep.subr.mxu0 0.0
  %223 = vmatpush1.msra.mxu0 0.0
  %224 = vmatprep.subr.mxu0 0.0
  %225 = vmatpush1.msra.mxu0 0.0
  %226 = vmatprep.subr.mxu0 0.0
  %227 = vmatpush1.msra.mxu0 0.0
  %228 = vmatprep.subr.mxu0 0.0
  %229 = vmatpush1.msra.mxu0 0.0
  %230 = vmatprep.subr.mxu0 0.0
  %231 = vmatpush1.msra.mxu0 0.0
  %232 = vmatprep.mubr.f32.mxu0 0.0
  %v233 = vand.u32 %v68, 4294901760
  %v234 = vsub.f32 %v68, %v233
  %v235 = vand.u32 %v234, 4294901760
  %v236 = vsub.f32 %v234, %v235
  %v237 = vand.u32 %v236, 4294901760
  %238 = vmatmul.mubr.f32.gmra.mrb[0].mxu0 %v237
  %v239 = vpop.f32.mrb[0].mxu0
  %v240 = vadd.f32 %v64, %v239
  %v241 = vpop.f32.mrb[0].mxu0
  %242 = vmatprep.mubr.f32.mxu0 0.0
  %v243 = vand.u32 %v71, 4294901760
  %v244 = vsub.f32 %v71, %v243
  %v245 = vand.u32 %v244, 4294901760
  %v246 = vsub.f32 %v244, %v245
  %v247 = vand.u32 %v246, 4294901760
  %248 = vmatmul.mubr.f32.gmra.mrb[0].mxu0 %v247
  %v249 = vpop.f32.mrb[0].mxu0
  %v250 = vadd.f32 %v64, %v249
  %v251 = vpop.f32.mrb[0].mxu0
  %252 = vmatprep.mubr.f32.mxu0 0.0
  %v253 = vand.u32 %v74, 4294901760
  %v254 = vsub.f32 %v74, %v253
  %v255 = vand.u32 %v254, 4294901760
  %v256 = vsub.f32 %v254, %v255
  %v257 = vand.u32 %v256, 4294901760
  %258 = vmatmul.mubr.f32.gmra.mrb[0].mxu0 %v257
  %v259 = vpop.f32.mrb[0].mxu0
  %v260 = vadd.f32 %v64, %v259
  %v261 = vpop.f32.mrb[0].mxu0
  %262 = vmatprep.mubr.f32.mxu0 0.0
  %v263 = vand.u32 %v77, 4294901760
  %v264 = vsub.f32 %v77, %v263
  %v265 = vand.u32 %v264, 4294901760
  %v266 = vsub.f32 %v264, %v265
  %v267 = vand.u32 %v266, 4294901760
  %268 = vmatmul.mubr.f32.gmra.mrb[0].mxu0 %v267
  %v269 = vpop.f32.mrb[0].mxu0
  %v270 = vadd.f32 %v64, %v269
  %v271 = vpop.f32.mrb[0].mxu0
  %272 = vmatprep.mubr.f32.mxu0 0.0
  %v273 = vand.u32 %v80, 4294901760
  %v274 = vsub.f32 %v80, %v273
  %v275 = vand.u32 %v274, 4294901760
  %v276 = vsub.f32 %v274, %v275
  %v277 = vand.u32 %v276, 4294901760
  %278 = vmatmul.mubr.f32.gmra.mrb[0].mxu0 %v277
  %v279 = vpop.f32.mrb[0].mxu0
  %v280 = vadd.f32 %v64, %v279
  %v281 = vpop.f32.mrb[0].mxu0
  %282 = vmatprep.mubr.f32.mxu0 0.0
  %v283 = vand.u32 %v83, 4294901760
  %v284 = vsub.f32 %v83, %v283
  %v285 = vand.u32 %v284, 4294901760
  %v286 = vsub.f32 %v284, %v285
  %v287 = vand.u32 %v286, 4294901760
  %288 = vmatmul.mubr.f32.gmra.mrb[0].mxu0 %v287
  %v289 = vpop.f32.mrb[0].mxu0
  %v290 = vadd.f32 %v64, %v289
  %v291 = vpop.f32.mrb[0].mxu0
  %292 = vmatprep.mubr.f32.mxu0 0.0
  %v293 = vand.u32 %v86, 4294901760
  %v294 = vsub.f32 %v86, %v293
  %v295 = vand.u32 %v294, 4294901760
  %v296 = vsub.f32 %v294, %v295
  %v297 = vand.u32 %v296, 4294901760
  %298 = vmatmul.mubr.f32.gmra.mrb[0].mxu0 %v297
  %v299 = vpop.f32.mrb[0].mxu0
  %v300 = vadd.f32 %v64, %v299
  %v301 = vpop.f32.mrb[0].mxu0
  %302 = vmatprep.mubr.f32.mxu0 0.0
  %v303 = vand.u32 %v89, 4294901760
  %v304 = vsub.f32 %v89, %v303
  %v305 = vand.u32 %v304, 4294901760
  %v306 = vsub.f32 %v304, %v305
  %v307 = vand.u32 %v306, 4294901760
  %308 = vmatmul.mubr.f32.gmra.mrb[0].mxu0 %v307
  %v309 = vpop.f32.mrb[0].mxu0
  %v310 = vadd.f32 %v64, %v309
  %v311 = vpop.f32.mrb[0].mxu0
  %312 = vmatprep.mubr.f32.mxu0 0.0
  %v313 = vand.u32 %v92, 4294901760
  %v314 = vsub.f32 %v92, %v313
  %v315 = vand.u32 %v314, 4294901760
  %v316 = vsub.f32 %v314, %v315
  %v317 = vand.u32 %v316, 4294901760
  %318 = vmatmul.mubr.f32.gmra.mrb[0].mxu0 %v317
  %v319 = vpop.f32.mrb[0].mxu0
  %v320 = vadd.f32 %v64, %v319
  %v321 = vpop.f32.mrb[0].mxu0
  %322 = vmatprep.mubr.f32.mxu0 0.0
  %v323 = vand.u32 %v95, 4294901760
  %v324 = vsub.f32 %v95, %v323
  %v325 = vand.u32 %v324, 4294901760
  %v326 = vsub.f32 %v324, %v325
  %v327 = vand.u32 %v326, 4294901760
  %328 = vmatmul.mubr.f32.gmra.mrb[0].mxu0 %v327
  %v329 = vpop.f32.mrb[0].mxu0
  %v330 = vadd.f32 %v64, %v329
  %v331 = vpop.f32.mrb[0].mxu0
  %332 = vmatprep.mubr.f32.mxu0 0.0
  %v333 = vand.u32 %v98, 4294901760
  %v334 = vsub.f32 %v98, %v333
  %v335 = vand.u32 %v334, 4294901760
  %v336 = vsub.f32 %v334, %v335
  %v337 = vand.u32 %v336, 4294901760
  %338 = vmatmul.mubr.f32.gmra.mrb[0].mxu0 %v337
  %v339 = vpop.f32.mrb[0].mxu0
  %v340 = vadd.f32 %v64, %v339
  %v341 = vpop.f32.mrb[0].mxu0
  %342 = vmatprep.mubr.f32.mxu0 0.0
  %v343 = vand.u32 %v101, 4294901760
  %v344 = vsub.f32 %v101, %v343
  %v345 = vand.u32 %v344, 4294901760
  %v346 = vsub.f32 %v344, %v345
  %v347 = vand.u32 %v346, 4294901760
  %348 = vmatmul.mubr.f32.gmra.mrb[0].mxu0 %v347
  %v349 = vpop.f32.mrb[0].mxu0
  %v350 = vadd.f32 %v64, %v349
  %v351 = vpop.f32.mrb[0].mxu0
  %352 = vmatprep.mubr.f32.mxu0 0.0
  %v353 = vand.u32 %v104, 4294901760
  %v354 = vsub.f32 %v104, %v353
  %v355 = vand.u32 %v354, 4294901760
  %v356 = vsub.f32 %v354, %v355
  %v357 = vand.u32 %v356, 4294901760
  %358 = vmatmul.mubr.f32.gmra.mrb[0].mxu0 %v357
  %v359 = vpop.f32.mrb[0].mxu0
  %v360 = vadd.f32 %v64, %v359
  %v361 = vpop.f32.mrb[0].mxu0
  %362 = vmatprep.mubr.f32.mxu0 0.0
  %v363 = vand.u32 %v107, 4294901760
  %v364 = vsub.f32 %v107, %v363
  %v365 = vand.u32 %v364, 4294901760
  %v366 = vsub.f32 %v364, %v365
  %v367 = vand.u32 %v366, 4294901760
  %368 = vmatmul.mubr.f32.gmra.mrb[0].mxu0 %v367
  %v369 = vpop.f32.mrb[0].mxu0
  %v370 = vadd.f32 %v64, %v369
  %v371 = vpop.f32.mrb[0].mxu0
  %372 = vmatprep.mubr.f32.mxu0 0.0
  %v373 = vand.u32 %v110, 4294901760
  %v374 = vsub.f32 %v110, %v373
  %v375 = vand.u32 %v374, 4294901760
  %v376 = vsub.f32 %v374, %v375
  %v377 = vand.u32 %v376, 4294901760
  %378 = vmatmul.mubr.f32.gmra.mrb[0].mxu0 %v377
  %v379 = vpop.f32.mrb[0].mxu0
  %v380 = vadd.f32 %v64, %v379
  %v381 = vpop.f32.mrb[0].mxu0
  %382 = vmatprep.mubr.f32.mxu0 0.0
  %v383 = vand.u32 %v113, 4294901760
  %v384 = vsub.f32 %v113, %v383
  %v385 = vand.u32 %v384, 4294901760
  %v386 = vsub.f32 %v384, %v385
  %v387 = vand.u32 %v386, 4294901760
  %388 = vmatmul.mubr.f32.gmra.mrb[0].mxu0 %v387
  %v389 = vpop.f32.mrb[0].mxu0
  %v390 = vadd.f32 %v64, %v389
  %v391 = vpop.f32.mrb[0].mxu0
  %392 = vmatprep.mubr.f32.mxu0 0.0
  %v393 = vand.u32 %v116, 4294901760
  %v394 = vsub.f32 %v116, %v393
  %v395 = vand.u32 %v394, 4294901760
  %v396 = vsub.f32 %v394, %v395
  %v397 = vand.u32 %v396, 4294901760
  %398 = vmatmul.mubr.f32.gmra.mrb[0].mxu0 %v397
  %v399 = vpop.f32.mrb[0].mxu0
  %v400 = vadd.f32 %v64, %v399
  %v401 = vpop.f32.mrb[0].mxu0
  %402 = vmatprep.mubr.f32.mxu0 0.0
  %v403 = vand.u32 %v119, 4294901760
  %v404 = vsub.f32 %v119, %v403
  %v405 = vand.u32 %v404, 4294901760
  %v406 = vsub.f32 %v404, %v405
  %v407 = vand.u32 %v406, 4294901760
  %408 = vmatmul.mubr.f32.gmra.mrb[0].mxu0 %v407
  %v409 = vpop.f32.mrb[0].mxu0
  %v410 = vadd.f32 %v64, %v409
  %v411 = vpop.f32.mrb[0].mxu0
  %412 = vmatprep.mubr.f32.mxu0 0.0
  %v413 = vand.u32 %v122, 4294901760
  %v414 = vsub.f32 %v122, %v413
  %v415 = vand.u32 %v414, 4294901760
  %v416 = vsub.f32 %v414, %v415
  %v417 = vand.u32 %v416, 4294901760
  %418 = vmatmul.mubr.f32.gmra.mrb[0].mxu0 %v417
  %v419 = vpop.f32.mrb[0].mxu0
  %v420 = vadd.f32 %v64, %v419
  %v421 = vpop.f32.mrb[0].mxu0
  %422 = vmatprep.mubr.f32.mxu0 0.0
  %v423 = vand.u32 %v125, 4294901760
  %v424 = vsub.f32 %v125, %v423
  %v425 = vand.u32 %v424, 4294901760
  %v426 = vsub.f32 %v424, %v425
  %v427 = vand.u32 %v426, 4294901760
  %428 = vmatmul.mubr.f32.gmra.mrb[0].mxu0 %v427
  %v429 = vpop.f32.mrb[0].mxu0
  %v430 = vadd.f32 %v64, %v429
  %v431 = vpop.f32.mrb[0].mxu0
  %432 = vmatprep.mubr.f32.mxu0 0.0
  %v433 = vand.u32 %v128, 4294901760
  %v434 = vsub.f32 %v128, %v433
  %v435 = vand.u32 %v434, 4294901760
  %v436 = vsub.f32 %v434, %v435
  %v437 = vand.u32 %v436, 4294901760
  %438 = vmatmul.mubr.f32.gmra.mrb[0].mxu0 %v437
  %v439 = vpop.f32.mrb[0].mxu0
  %v440 = vadd.f32 %v64, %v439
  %v441 = vpop.f32.mrb[0].mxu0
  %442 = vmatprep.mubr.f32.mxu0 0.0
  %v443 = vand.u32 %v131, 4294901760
  %v444 = vsub.f32 %v131, %v443
  %v445 = vand.u32 %v444, 4294901760
  %v446 = vsub.f32 %v444, %v445
  %v447 = vand.u32 %v446, 4294901760
  %448 = vmatmul.mubr.f32.gmra.mrb[0].mxu0 %v447
  %v449 = vpop.f32.mrb[0].mxu0
  %v450 = vadd.f32 %v64, %v449
  %v451 = vpop.f32.mrb[0].mxu0
  %452 = vmatprep.mubr.f32.mxu0 0.0
  %v453 = vand.u32 %v134, 4294901760
  %v454 = vsub.f32 %v134, %v453
  %v455 = vand.u32 %v454, 4294901760
  %v456 = vsub.f32 %v454, %v455
  %v457 = vand.u32 %v456, 4294901760
  %458 = vmatmul.mubr.f32.gmra.mrb[0].mxu0 %v457
  %v459 = vpop.f32.mrb[0].mxu0
  %v460 = vadd.f32 %v64, %v459
  %v461 = vpop.f32.mrb[0].mxu0
  %462 = vmatprep.mubr.f32.mxu0 0.0
  %v463 = vand.u32 %v137, 4294901760
  %v464 = vsub.f32 %v137, %v463
  %v465 = vand.u32 %v464, 4294901760
  %v466 = vsub.f32 %v464, %v465
  %v467 = vand.u32 %v466, 4294901760
  %468 = vmatmul.mubr.f32.gmra.mrb[0].mxu0 %v467
  %v469 = vpop.f32.mrb[0].mxu0
  %v470 = vadd.f32 %v64, %v469
  %v471 = vpop.f32.mrb[0].mxu0
  %472 = vmatprep.mubr.f32.mxu0 0.0
  %v473 = vand.u32 %v140, 4294901760
  %v474 = vsub.f32 %v140, %v473
  %v475 = vand.u32 %v474, 4294901760
  %v476 = vsub.f32 %v474, %v475
  %v477 = vand.u32 %v476, 4294901760
  %478 = vmatmul.mubr.f32.gmra.mrb[0].mxu0 %v477
  %v479 = vpop.f32.mrb[0].mxu0
  %v480 = vadd.f32 %v64, %v479
  %v481 = vpop.f32.mrb[0].mxu0
  %482 = vmatprep.mubr.f32.mxu0 0.0
  %v483 = vand.u32 %v143, 4294901760
  %v484 = vsub.f32 %v143, %v483
  %v485 = vand.u32 %v484, 4294901760
  %v486 = vsub.f32 %v484, %v485
  %v487 = vand.u32 %v486, 4294901760
  %488 = vmatmul.mubr.f32.gmra.mrb[0].mxu0 %v487
  %v489 = vpop.f32.mrb[0].mxu0
  %v490 = vadd.f32 %v64, %v489
  %v491 = vpop.f32.mrb[0].mxu0
  %492 = vmatprep.mubr.f32.mxu0 0.0
  %v493 = vand.u32 %v146, 4294901760
  %v494 = vsub.f32 %v146, %v493
  %v495 = vand.u32 %v494, 4294901760
  %v496 = vsub.f32 %v494, %v495
  %v497 = vand.u32 %v496, 4294901760
  %498 = vmatmul.mubr.f32.gmra.mrb[0].mxu0 %v497
  %v499 = vpop.f32.mrb[0].mxu0
  %v500 = vadd.f32 %v64, %v499
  %v501 = vpop.f32.mrb[0].mxu0
  %502 = vmatprep.mubr.f32.mxu0 0.0
  %v503 = vand.u32 %v149, 4294901760
  %v504 = vsub.f32 %v149, %v503
  %v505 = vand.u32 %v504, 4294901760
  %v506 = vsub.f32 %v504, %v505
  %v507 = vand.u32 %v506, 4294901760
  %508 = vmatmul.mubr.f32.gmra.mrb[0].mxu0 %v507
  %v509 = vpop.f32.mrb[0].mxu0
  %v510 = vadd.f32 %v64, %v509
  %v511 = vpop.f32.mrb[0].mxu0
  %512 = vmatprep.mubr.f32.mxu0 0.0
  %v513 = vand.u32 %v152, 4294901760
  %v514 = vsub.f32 %v152, %v513
  %v515 = vand.u32 %v514, 4294901760
  %v516 = vsub.f32 %v514, %v515
  %v517 = vand.u32 %v516, 4294901760
  %518 = vmatmul.mubr.f32.gmra.mrb[0].mxu0 %v517
  %v519 = vpop.f32.mrb[0].mxu0
  %v520 = vadd.f32 %v64, %v519
  %v521 = vpop.f32.mrb[0].mxu0
  %522 = vmatprep.mubr.f32.mxu0 0.0
  %v523 = vand.u32 %v155, 4294901760
  %v524 = vsub.f32 %v155, %v523
  %v525 = vand.u32 %v524, 4294901760
  %v526 = vsub.f32 %v524, %v525
  %v527 = vand.u32 %v526, 4294901760
  %528 = vmatmul.mubr.f32.gmra.mrb[0].mxu0 %v527
  %v529 = vpop.f32.mrb[0].mxu0
  %v530 = vadd.f32 %v64, %v529
  %v531 = vpop.f32.mrb[0].mxu0
  %532 = vmatprep.mubr.f32.mxu0 0.0
  %v533 = vand.u32 %v158, 4294901760
  %v534 = vsub.f32 %v158, %v533
  %v535 = vand.u32 %v534, 4294901760
  %v536 = vsub.f32 %v534, %v535
  %v537 = vand.u32 %v536, 4294901760
  %538 = vmatmul.mubr.f32.gmra.mrb[0].mxu0 %v537
  %v539 = vpop.f32.mrb[0].mxu0
  %v540 = vadd.f32 %v64, %v539
  %v541 = vpop.f32.mrb[0].mxu0
  %542 = vmatprep.mubr.f32.mxu0 0.0
  %v543 = vand.u32 %v161, 4294901760
  %v544 = vsub.f32 %v161, %v543
  %v545 = vand.u32 %v544, 4294901760
  %v546 = vsub.f32 %v544, %v545
  %v547 = vand.u32 %v546, 4294901760
  %548 = vmatmul.mubr.f32.gmra.mrb[0].mxu0 %v547
  %v549 = vpop.f32.mrb[0].mxu0
  %v550 = vadd.f32 %v64, %v549
  %v551 = vpop.f32.mrb[0].mxu0
  %552 = vdwg.mxu0
  %553 = vmatprep.subr.mxu0 0.0
  %v554 = vand.u32 %v165, 4294901760
  %v555 = vsub.f32 %v165, %v554
  %v556 = vand.u32 %v555, 4294901760
  %v557 = vsub.f32 %v555, %v556
  %v558 = vand.u32 %v557, 4294901760
  %559 = vmatpush1.msra.mxu0 %v558
  %560 = vmatprep.subr.mxu0 0.0
  %561 = vmatpush1.msra.mxu0 0.0
  %562 = vmatprep.subr.mxu0 0.0
  %563 = vmatpush1.msra.mxu0 0.0
  %564 = vmatprep.subr.mxu0 0.0
  %565 = vmatpush1.msra.mxu0 0.0
  %566 = vmatprep.subr.mxu0 0.0
  %567 = vmatpush1.msra.mxu0 0.0
  %568 = vmatprep.subr.mxu0 0.0
  %569 = vmatpush1.msra.mxu0 0.0
  %570 = vmatprep.subr.mxu0 0.0
  %571 = vmatpush1.msra.mxu0 0.0
  %572 = vmatprep.subr.mxu0 0.0
  %573 = vmatpush1.msra.mxu0 0.0
  %574 = vmatprep.subr.mxu0 0.0
  %575 = vmatpush1.msra.mxu0 0.0
  %576 = vmatprep.subr.mxu0 0.0
  %577 = vmatpush1.msra.mxu0 0.0
  %578 = vmatprep.subr.mxu0 0.0
  %579 = vmatpush1.msra.mxu0 0.0
  %580 = vmatprep.subr.mxu0 0.0
  %581 = vmatpush1.msra.mxu0 0.0
  %582 = vmatprep.subr.mxu0 0.0
  %583 = vmatpush1.msra.mxu0 0.0
  %584 = vmatprep.subr.mxu0 0.0
  %585 = vmatpush1.msra.mxu0 0.0
  %586 = vmatprep.subr.mxu0 0.0
  %587 = vmatpush1.msra.mxu0 0.0
  %588 = vmatprep.subr.mxu0 0.0
  %589 = vmatpush1.msra.mxu0 0.0
  %590 = vmatprep.subr.mxu0 0.0
  %591 = vmatpush1.msra.mxu0 0.0
  %592 = vmatprep.subr.mxu0 0.0
  %593 = vmatpush1.msra.mxu0 0.0
  %594 = vmatprep.subr.mxu0 0.0
  %595 = vmatpush1.msra.mxu0 0.0
  %596 = vmatprep.subr.mxu0 0.0
  %597 = vmatpush1.msra.mxu0 0.0
  %598 = vmatprep.subr.mxu0 0.0
  %599 = vmatpush1.msra.mxu0 0.0
  %600 = vmatprep.subr.mxu0 0.0
  %601 = vmatpush1.msra.mxu0 0.0
  %602 = vmatprep.subr.mxu0 0.0
  %603 = vmatpush1.msra.mxu0 0.0
  %604 = vmatprep.subr.mxu0 0.0
  %605 = vmatpush1.msra.mxu0 0.0
  %606 = vmatprep.subr.mxu0 0.0
  %607 = vmatpush1.msra.mxu0 0.0
  %608 = vmatprep.subr.mxu0 0.0
  %609 = vmatpush1.msra.mxu0 0.0
  %610 = vmatprep.subr.mxu0 0.0
  %611 = vmatpush1.msra.mxu0 0.0
  %612 = vmatprep.subr.mxu0 0.0
  %613 = vmatpush1.msra.mxu0 0.0
  %614 = vmatprep.subr.mxu0 0.0
  %615 = vmatpush1.msra.mxu0 0.0
  %616 = vmatprep.subr.mxu0 0.0
  %617 = vmatpush1.msra.mxu0 0.0
  %618 = vmatprep.subr.mxu0 0.0
  %619 = vmatpush1.msra.mxu0 0.0
  %620 = vmatprep.subr.mxu0 0.0
  %621 = vmatpush1.msra.mxu0 0.0
  %622 = vmatprep.mubr.f32.mxu0 0.0
  %v623 = vand.u32 %v68, 4294901760
  %624 = vmatmul.mubr.f32.gmra.mrb[0].mxu0 %v623
  %v625 = vpop.f32.mrb[0].mxu0
  %v626 = vadd.f32 %v240, %v625
  %v627 = vpop.f32.mrb[0].mxu0
  %628 = vmatprep.mubr.f32.mxu0 0.0
  %v629 = vand.u32 %v71, 4294901760
  %630 = vmatmul.mubr.f32.gmra.mrb[0].mxu0 %v629
  %v631 = vpop.f32.mrb[0].mxu0
  %v632 = vadd.f32 %v250, %v631
  %v633 = vpop.f32.mrb[0].mxu0
  %634 = vmatprep.mubr.f32.mxu0 0.0
  %v635 = vand.u32 %v74, 4294901760
  %636 = vmatmul.mubr.f32.gmra.mrb[0].mxu0 %v635
  %v637 = vpop.f32.mrb[0].mxu0
  %v638 = vadd.f32 %v260, %v637
  %v639 = vpop.f32.mrb[0].mxu0
  %640 = vmatprep.mubr.f32.mxu0 0.0
  %v641 = vand.u32 %v77, 4294901760
  %642 = vmatmul.mubr.f32.gmra.mrb[0].mxu0 %v641
  %v643 = vpop.f32.mrb[0].mxu0
  %v644 = vadd.f32 %v270, %v643
  %v645 = vpop.f32.mrb[0].mxu0
  %646 = vmatprep.mubr.f32.mxu0 0.0
  %v647 = vand.u32 %v80, 4294901760
  %648 = vmatmul.mubr.f32.gmra.mrb[0].mxu0 %v647
  %v649 = vpop.f32.mrb[0].mxu0
  %v650 = vadd.f32 %v280, %v649
  %v651 = vpop.f32.mrb[0].mxu0
  %652 = vmatprep.mubr.f32.mxu0 0.0
  %v653 = vand.u32 %v83, 4294901760
  %654 = vmatmul.mubr.f32.gmra.mrb[0].mxu0 %v653
  %v655 = vpop.f32.mrb[0].mxu0
  %v656 = vadd.f32 %v290, %v655
  %v657 = vpop.f32.mrb[0].mxu0
  %658 = vmatprep.mubr.f32.mxu0 0.0
  %v659 = vand.u32 %v86, 4294901760
  %660 = vmatmul.mubr.f32.gmra.mrb[0].mxu0 %v659
  %v661 = vpop.f32.mrb[0].mxu0
  %v662 = vadd.f32 %v300, %v661
  %v663 = vpop.f32.mrb[0].mxu0
  %664 = vmatprep.mubr.f32.mxu0 0.0
  %v665 = vand.u32 %v89, 4294901760
  %666 = vmatmul.mubr.f32.gmra.mrb[0].mxu0 %v665
  %v667 = vpop.f32.mrb[0].mxu0
  %v668 = vadd.f32 %v310, %v667
  %v669 = vpop.f32.mrb[0].mxu0
  %670 = vmatprep.mubr.f32.mxu0 0.0
  %v671 = vand.u32 %v92, 4294901760
  %672 = vmatmul.mubr.f32.gmra.mrb[0].mxu0 %v671
  %v673 = vpop.f32.mrb[0].mxu0
  %v674 = vadd.f32 %v320, %v673
  %v675 = vpop.f32.mrb[0].mxu0
  %676 = vmatprep.mubr.f32.mxu0 0.0
  %v677 = vand.u32 %v95, 4294901760
  %678 = vmatmul.mubr.f32.gmra.mrb[0].mxu0 %v677
  %v679 = vpop.f32.mrb[0].mxu0
  %v680 = vadd.f32 %v330, %v679
  %v681 = vpop.f32.mrb[0].mxu0
  %682 = vmatprep.mubr.f32.mxu0 0.0
  %v683 = vand.u32 %v98, 4294901760
  %684 = vmatmul.mubr.f32.gmra.mrb[0].mxu0 %v683
  %v685 = vpop.f32.mrb[0].mxu0
  %v686 = vadd.f32 %v340, %v685
  %v687 = vpop.f32.mrb[0].mxu0
  %688 = vmatprep.mubr.f32.mxu0 0.0
  %v689 = vand.u32 %v101, 4294901760
  %690 = vmatmul.mubr.f32.gmra.mrb[0].mxu0 %v689
  %v691 = vpop.f32.mrb[0].mxu0
  %v692 = vadd.f32 %v350, %v691
  %v693 = vpop.f32.mrb[0].mxu0
  %694 = vmatprep.mubr.f32.mxu0 0.0
  %v695 = vand.u32 %v104, 4294901760
  %696 = vmatmul.mubr.f32.gmra.mrb[0].mxu0 %v695
  %v697 = vpop.f32.mrb[0].mxu0
  %v698 = vadd.f32 %v360, %v697
  %v699 = vpop.f32.mrb[0].mxu0
  %700 = vmatprep.mubr.f32.mxu0 0.0
  %v701 = vand.u32 %v107, 4294901760
  %702 = vmatmul.mubr.f32.gmra.mrb[0].mxu0 %v701
  %v703 = vpop.f32.mrb[0].mxu0
  %v704 = vadd.f32 %v370, %v703
  %v705 = vpop.f32.mrb[0].mxu0
  %706 = vmatprep.mubr.f32.mxu0 0.0
  %v707 = vand.u32 %v110, 4294901760
  %708 = vmatmul.mubr.f32.gmra.mrb[0].mxu0 %v707
  %v709 = vpop.f32.mrb[0].mxu0
  %v710 = vadd.f32 %v380, %v709
  %v711 = vpop.f32.mrb[0].mxu0
  %712 = vmatprep.mubr.f32.mxu0 0.0
  %v713 = vand.u32 %v113, 4294901760
  %714 = vmatmul.mubr.f32.gmra.mrb[0].mxu0 %v713
  %v715 = vpop.f32.mrb[0].mxu0
  %v716 = vadd.f32 %v390, %v715
  %v717 = vpop.f32.mrb[0].mxu0
  %718 = vmatprep.mubr.f32.mxu0 0.0
  %v719 = vand.u32 %v116, 4294901760
  %720 = vmatmul.mubr.f32.gmra.mrb[0].mxu0 %v719
  %v721 = vpop.f32.mrb[0].mxu0
  %v722 = vadd.f32 %v400, %v721
  %v723 = vpop.f32.mrb[0].mxu0
  %724 = vmatprep.mubr.f32.mxu0 0.0
  %v725 = vand.u32 %v119, 4294901760
  %726 = vmatmul.mubr.f32.gmra.mrb[0].mxu0 %v725
  %v727 = vpop.f32.mrb[0].mxu0
  %v728 = vadd.f32 %v410, %v727
  %v729 = vpop.f32.mrb[0].mxu0
  %730 = vmatprep.mubr.f32.mxu0 0.0
  %v731 = vand.u32 %v122, 4294901760
  %732 = vmatmul.mubr.f32.gmra.mrb[0].mxu0 %v731
  %v733 = vpop.f32.mrb[0].mxu0
  %v734 = vadd.f32 %v420, %v733
  %v735 = vpop.f32.mrb[0].mxu0
  %736 = vmatprep.mubr.f32.mxu0 0.0
  %v737 = vand.u32 %v125, 4294901760
  %738 = vmatmul.mubr.f32.gmra.mrb[0].mxu0 %v737
  %v739 = vpop.f32.mrb[0].mxu0
  %v740 = vadd.f32 %v430, %v739
  %v741 = vpop.f32.mrb[0].mxu0
  %742 = vmatprep.mubr.f32.mxu0 0.0
  %v743 = vand.u32 %v128, 4294901760
  %744 = vmatmul.mubr.f32.gmra.mrb[0].mxu0 %v743
  %v745 = vpop.f32.mrb[0].mxu0
  %v746 = vadd.f32 %v440, %v745
  %v747 = vpop.f32.mrb[0].mxu0
  %748 = vmatprep.mubr.f32.mxu0 0.0
  %v749 = vand.u32 %v131, 4294901760
  %750 = vmatmul.mubr.f32.gmra.mrb[0].mxu0 %v749
  %v751 = vpop.f32.mrb[0].mxu0
  %v752 = vadd.f32 %v450, %v751
  %v753 = vpop.f32.mrb[0].mxu0
  %754 = vmatprep.mubr.f32.mxu0 0.0
  %v755 = vand.u32 %v134, 4294901760
  %756 = vmatmul.mubr.f32.gmra.mrb[0].mxu0 %v755
  %v757 = vpop.f32.mrb[0].mxu0
  %v758 = vadd.f32 %v460, %v757
  %v759 = vpop.f32.mrb[0].mxu0
  %760 = vmatprep.mubr.f32.mxu0 0.0
  %v761 = vand.u32 %v137, 4294901760
  %762 = vmatmul.mubr.f32.gmra.mrb[0].mxu0 %v761
  %v763 = vpop.f32.mrb[0].mxu0
  %v764 = vadd.f32 %v470, %v763
  %v765 = vpop.f32.mrb[0].mxu0
  %766 = vmatprep.mubr.f32.mxu0 0.0
  %v767 = vand.u32 %v140, 4294901760
  %768 = vmatmul.mubr.f32.gmra.mrb[0].mxu0 %v767
  %v769 = vpop.f32.mrb[0].mxu0
  %v770 = vadd.f32 %v480, %v769
  %v771 = vpop.f32.mrb[0].mxu0
  %772 = vmatprep.mubr.f32.mxu0 0.0
  %v773 = vand.u32 %v143, 4294901760
  %774 = vmatmul.mubr.f32.gmra.mrb[0].mxu0 %v773
  %v775 = vpop.f32.mrb[0].mxu0
  %v776 = vadd.f32 %v490, %v775
  %v777 = vpop.f32.mrb[0].mxu0
  %778 = vmatprep.mubr.f32.mxu0 0.0
  %v779 = vand.u32 %v146, 4294901760
  %780 = vmatmul.mubr.f32.gmra.mrb[0].mxu0 %v779
  %v781 = vpop.f32.mrb[0].mxu0
  %v782 = vadd.f32 %v500, %v781
  %v783 = vpop.f32.mrb[0].mxu0
  %784 = vmatprep.mubr.f32.mxu0 0.0
  %v785 = vand.u32 %v149, 4294901760
  %786 = vmatmul.mubr.f32.gmra.mrb[0].mxu0 %v785
  %v787 = vpop.f32.mrb[0].mxu0
  %v788 = vadd.f32 %v510, %v787
  %v789 = vpop.f32.mrb[0].mxu0
  %790 = vmatprep.mubr.f32.mxu0 0.0
  %v791 = vand.u32 %v152, 4294901760
  %792 = vmatmul.mubr.f32.gmra.mrb[0].mxu0 %v791
  %v793 = vpop.f32.mrb[0].mxu0
  %v794 = vadd.f32 %v520, %v793
  %v795 = vpop.f32.mrb[0].mxu0
  %796 = vmatprep.mubr.f32.mxu0 0.0
  %v797 = vand.u32 %v155, 4294901760
  %798 = vmatmul.mubr.f32.gmra.mrb[0].mxu0 %v797
  %v799 = vpop.f32.mrb[0].mxu0
  %v800 = vadd.f32 %v530, %v799
  %v801 = vpop.f32.mrb[0].mxu0
  %802 = vmatprep.mubr.f32.mxu0 0.0
  %v803 = vand.u32 %v158, 4294901760
  %804 = vmatmul.mubr.f32.gmra.mrb[0].mxu0 %v803
  %v805 = vpop.f32.mrb[0].mxu0
  %v806 = vadd.f32 %v540, %v805
  %v807 = vpop.f32.mrb[0].mxu0
  %808 = vmatprep.mubr.f32.mxu0 0.0
  %v809 = vand.u32 %v161, 4294901760
  %810 = vmatmul.mubr.f32.gmra.mrb[0].mxu0 %v809
  %v811 = vpop.f32.mrb[0].mxu0
  %v812 = vadd.f32 %v550, %v811
  %v813 = vpop.f32.mrb[0].mxu0
  %814 = vdwg.mxu0
  %815 = vmatprep.subr.mxu0 0.0
  %v816 = vand.u32 %v165, 4294901760
  %v817 = vsub.f32 %v165, %v816
  %818 = vmatpush1.msra.mxu0 %v817
  %819 = vmatprep.subr.mxu0 0.0
  %820 = vmatpush1.msra.mxu0 0.0
  %821 = vmatprep.subr.mxu0 0.0
  %822 = vmatpush1.msra.mxu0 0.0
  %823 = vmatprep.subr.mxu0 0.0
  %824 = vmatpush1.msra.mxu0 0.0
  %825 = vmatprep.subr.mxu0 0.0
  %826 = vmatpush1.msra.mxu0 0.0
  %827 = vmatprep.subr.mxu0 0.0
  %828 = vmatpush1.msra.mxu0 0.0
  %829 = vmatprep.subr.mxu0 0.0
  %830 = vmatpush1.msra.mxu0 0.0
  %831 = vmatprep.subr.mxu0 0.0
  %832 = vmatpush1.msra.mxu0 0.0
  %833 = vmatprep.subr.mxu0 0.0
  %834 = vmatpush1.msra.mxu0 0.0
  %835 = vmatprep.subr.mxu0 0.0
  %836 = vmatpush1.msra.mxu0 0.0
  %837 = vmatprep.subr.mxu0 0.0
  %838 = vmatpush1.msra.mxu0 0.0
  %839 = vmatprep.subr.mxu0 0.0
  %840 = vmatpush1.msra.mxu0 0.0
  %841 = vmatprep.subr.mxu0 0.0
  %842 = vmatpush1.msra.mxu0 0.0
  %843 = vmatprep.subr.mxu0 0.0
  %844 = vmatpush1.msra.mxu0 0.0
  %845 = vmatprep.subr.mxu0 0.0
  %846 = vmatpush1.msra.mxu0 0.0
  %847 = vmatprep.subr.mxu0 0.0
  %848 = vmatpush1.msra.mxu0 0.0
  %849 = vmatprep.subr.mxu0 0.0
  %850 = vmatpush1.msra.mxu0 0.0
  %851 = vmatprep.subr.mxu0 0.0
  %852 = vmatpush1.msra.mxu0 0.0
  %853 = vmatprep.subr.mxu0 0.0
  %854 = vmatpush1.msra.mxu0 0.0
  %855 = vmatprep.subr.mxu0 0.0
  %856 = vmatpush1.msra.mxu0 0.0
  %857 = vmatprep.subr.mxu0 0.0
  %858 = vmatpush1.msra.mxu0 0.0
  %859 = vmatprep.subr.mxu0 0.0
  %860 = vmatpush1.msra.mxu0 0.0
  %861 = vmatprep.subr.mxu0 0.0
  %862 = vmatpush1.msra.mxu0 0.0
  %863 = vmatprep.subr.mxu0 0.0
  %864 = vmatpush1.msra.mxu0 0.0
  %865 = vmatprep.subr.mxu0 0.0
  %866 = vmatpush1.msra.mxu0 0.0
  %867 = vmatprep.subr.mxu0 0.0
  %868 = vmatpush1.msra.mxu0 0.0
  %869 = vmatprep.subr.mxu0 0.0
  %870 = vmatpush1.msra.mxu0 0.0
  %871 = vmatprep.subr.mxu0 0.0
  %872 = vmatpush1.msra.mxu0 0.0
  %873 = vmatprep.subr.mxu0 0.0
  %874 = vmatpush1.msra.mxu0 0.0
  %875 = vmatprep.subr.mxu0 0.0
  %876 = vmatpush1.msra.mxu0 0.0
  %877 = vmatprep.subr.mxu0 0.0
  %878 = vmatpush1.msra.mxu0 0.0
  %879 = vmatprep.subr.mxu0 0.0
  %880 = vmatpush1.msra.mxu0 0.0
  %881 = vmatprep.mubr.f32.mxu0 0.0
  %v882 = vand.u32 %v68, 4294901760
  %v883 = vsub.f32 %v68, %v882
  %884 = vmatmul.mubr.f32.gmra.mrb[0].mxu0 %v883
  %v885 = vpop.f32.mrb[0].mxu0
  %v886 = vadd.f32 %v626, %v885
  %v887 = vpop.f32.mrb[0].mxu0
  %888 = vmatprep.mubr.f32.mxu0 0.0
  %v889 = vand.u32 %v71, 4294901760
  %v890 = vsub.f32 %v71, %v889
  %891 = vmatmul.mubr.f32.gmra.mrb[0].mxu0 %v890
  %v892 = vpop.f32.mrb[0].mxu0
  %v893 = vadd.f32 %v632, %v892
  %v894 = vpop.f32.mrb[0].mxu0
  %895 = vmatprep.mubr.f32.mxu0 0.0
  %v896 = vand.u32 %v74, 4294901760
  %v897 = vsub.f32 %v74, %v896
  %898 = vmatmul.mubr.f32.gmra.mrb[0].mxu0 %v897
  %v899 = vpop.f32.mrb[0].mxu0
  %v900 = vadd.f32 %v638, %v899
  %v901 = vpop.f32.mrb[0].mxu0
  %902 = vmatprep.mubr.f32.mxu0 0.0
  %v903 = vand.u32 %v77, 4294901760
  %v904 = vsub.f32 %v77, %v903
  %905 = vmatmul.mubr.f32.gmra.mrb[0].mxu0 %v904
  %v906 = vpop.f32.mrb[0].mxu0
  %v907 = vadd.f32 %v644, %v906
  %v908 = vpop.f32.mrb[0].mxu0
  %909 = vmatprep.mubr.f32.mxu0 0.0
  %v910 = vand.u32 %v80, 4294901760
  %v911 = vsub.f32 %v80, %v910
  %912 = vmatmul.mubr.f32.gmra.mrb[0].mxu0 %v911
  %v913 = vpop.f32.mrb[0].mxu0
  %v914 = vadd.f32 %v650, %v913
  %v915 = vpop.f32.mrb[0].mxu0
  %916 = vmatprep.mubr.f32.mxu0 0.0
  %v917 = vand.u32 %v83, 4294901760
  %v918 = vsub.f32 %v83, %v917
  %919 = vmatmul.mubr.f32.gmra.mrb[0].mxu0 %v918
  %v920 = vpop.f32.mrb[0].mxu0
  %v921 = vadd.f32 %v656, %v920
  %v922 = vpop.f32.mrb[0].mxu0
  %923 = vmatprep.mubr.f32.mxu0 0.0
  %v924 = vand.u32 %v86, 4294901760
  %v925 = vsub.f32 %v86, %v924
  %926 = vmatmul.mubr.f32.gmra.mrb[0].mxu0 %v925
  %v927 = vpop.f32.mrb[0].mxu0
  %v928 = vadd.f32 %v662, %v927
  %v929 = vpop.f32.mrb[0].mxu0
  %930 = vmatprep.mubr.f32.mxu0 0.0
  %v931 = vand.u32 %v89, 4294901760
  %v932 = vsub.f32 %v89, %v931
  %933 = vmatmul.mubr.f32.gmra.mrb[0].mxu0 %v932
  %v934 = vpop.f32.mrb[0].mxu0
  %v935 = vadd.f32 %v668, %v934
  %v936 = vpop.f32.mrb[0].mxu0
  %937 = vmatprep.mubr.f32.mxu0 0.0
  %v938 = vand.u32 %v92, 4294901760
  %v939 = vsub.f32 %v92, %v938
  %940 = vmatmul.mubr.f32.gmra.mrb[0].mxu0 %v939
  %v941 = vpop.f32.mrb[0].mxu0
  %v942 = vadd.f32 %v674, %v941
  %v943 = vpop.f32.mrb[0].mxu0
  %944 = vmatprep.mubr.f32.mxu0 0.0
  %v945 = vand.u32 %v95, 4294901760
  %v946 = vsub.f32 %v95, %v945
  %947 = vmatmul.mubr.f32.gmra.mrb[0].mxu0 %v946
  %v948 = vpop.f32.mrb[0].mxu0
  %v949 = vadd.f32 %v680, %v948
  %v950 = vpop.f32.mrb[0].mxu0
  %951 = vmatprep.mubr.f32.mxu0 0.0
  %v952 = vand.u32 %v98, 4294901760
  %v953 = vsub.f32 %v98, %v952
  %954 = vmatmul.mubr.f32.gmra.mrb[0].mxu0 %v953
  %v955 = vpop.f32.mrb[0].mxu0
  %v956 = vadd.f32 %v686, %v955
  %v957 = vpop.f32.mrb[0].mxu0
  %958 = vmatprep.mubr.f32.mxu0 0.0
  %v959 = vand.u32 %v101, 4294901760
  %v960 = vsub.f32 %v101, %v959
  %961 = vmatmul.mubr.f32.gmra.mrb[0].mxu0 %v960
  %v962 = vpop.f32.mrb[0].mxu0
  %v963 = vadd.f32 %v692, %v962
  %v964 = vpop.f32.mrb[0].mxu0
  %965 = vmatprep.mubr.f32.mxu0 0.0
  %v966 = vand.u32 %v104, 4294901760
  %v967 = vsub.f32 %v104, %v966
  %968 = vmatmul.mubr.f32.gmra.mrb[0].mxu0 %v967
  %v969 = vpop.f32.mrb[0].mxu0
  %v970 = vadd.f32 %v698, %v969
  %v971 = vpop.f32.mrb[0].mxu0
  %972 = vmatprep.mubr.f32.mxu0 0.0
  %v973 = vand.u32 %v107, 4294901760
  %v974 = vsub.f32 %v107, %v973
  %975 = vmatmul.mubr.f32.gmra.mrb[0].mxu0 %v974
  %v976 = vpop.f32.mrb[0].mxu0
  %v977 = vadd.f32 %v704, %v976
  %v978 = vpop.f32.mrb[0].mxu0
  %979 = vmatprep.mubr.f32.mxu0 0.0
  %v980 = vand.u32 %v110, 4294901760
  %v981 = vsub.f32 %v110, %v980
  %982 = vmatmul.mubr.f32.gmra.mrb[0].mxu0 %v981
  %v983 = vpop.f32.mrb[0].mxu0
  %v984 = vadd.f32 %v710, %v983
  %v985 = vpop.f32.mrb[0].mxu0
  %986 = vmatprep.mubr.f32.mxu0 0.0
  %v987 = vand.u32 %v113, 4294901760
  %v988 = vsub.f32 %v113, %v987
  %989 = vmatmul.mubr.f32.gmra.mrb[0].mxu0 %v988
  %v990 = vpop.f32.mrb[0].mxu0
  %v991 = vadd.f32 %v716, %v990
  %v992 = vpop.f32.mrb[0].mxu0
  %993 = vmatprep.mubr.f32.mxu0 0.0
  %v994 = vand.u32 %v116, 4294901760
  %v995 = vsub.f32 %v116, %v994
  %996 = vmatmul.mubr.f32.gmra.mrb[0].mxu0 %v995
  %v997 = vpop.f32.mrb[0].mxu0
  %v998 = vadd.f32 %v722, %v997
  %v999 = vpop.f32.mrb[0].mxu0
  %1000 = vmatprep.mubr.f32.mxu0 0.0
  %v1001 = vand.u32 %v119, 4294901760
  %v1002 = vsub.f32 %v119, %v1001
  %1003 = vmatmul.mubr.f32.gmra.mrb[0].mxu0 %v1002
  %v1004 = vpop.f32.mrb[0].mxu0
  %v1005 = vadd.f32 %v728, %v1004
  %v1006 = vpop.f32.mrb[0].mxu0
  %1007 = vmatprep.mubr.f32.mxu0 0.0
  %v1008 = vand.u32 %v122, 4294901760
  %v1009 = vsub.f32 %v122, %v1008
  %1010 = vmatmul.mubr.f32.gmra.mrb[0].mxu0 %v1009
  %v1011 = vpop.f32.mrb[0].mxu0
  %v1012 = vadd.f32 %v734, %v1011
  %v1013 = vpop.f32.mrb[0].mxu0
  %1014 = vmatprep.mubr.f32.mxu0 0.0
  %v1015 = vand.u32 %v125, 4294901760
  %v1016 = vsub.f32 %v125, %v1015
  %1017 = vmatmul.mubr.f32.gmra.mrb[0].mxu0 %v1016
  %v1018 = vpop.f32.mrb[0].mxu0
  %v1019 = vadd.f32 %v740, %v1018
  %v1020 = vpop.f32.mrb[0].mxu0
  %1021 = vmatprep.mubr.f32.mxu0 0.0
  %v1022 = vand.u32 %v128, 4294901760
  %v1023 = vsub.f32 %v128, %v1022
  %1024 = vmatmul.mubr.f32.gmra.mrb[0].mxu0 %v1023
  %v1025 = vpop.f32.mrb[0].mxu0
  %v1026 = vadd.f32 %v746, %v1025
  %v1027 = vpop.f32.mrb[0].mxu0
  %1028 = vmatprep.mubr.f32.mxu0 0.0
  %v1029 = vand.u32 %v131, 4294901760
  %v1030 = vsub.f32 %v131, %v1029
  %1031 = vmatmul.mubr.f32.gmra.mrb[0].mxu0 %v1030
  %v1032 = vpop.f32.mrb[0].mxu0
  %v1033 = vadd.f32 %v752, %v1032
  %v1034 = vpop.f32.mrb[0].mxu0
  %1035 = vmatprep.mubr.f32.mxu0 0.0
  %v1036 = vand.u32 %v134, 4294901760
  %v1037 = vsub.f32 %v134, %v1036
  %1038 = vmatmul.mubr.f32.gmra.mrb[0].mxu0 %v1037
  %v1039 = vpop.f32.mrb[0].mxu0
  %v1040 = vadd.f32 %v758, %v1039
  %v1041 = vpop.f32.mrb[0].mxu0
  %1042 = vmatprep.mubr.f32.mxu0 0.0
  %v1043 = vand.u32 %v137, 4294901760
  %v1044 = vsub.f32 %v137, %v1043
  %1045 = vmatmul.mubr.f32.gmra.mrb[0].mxu0 %v1044
  %v1046 = vpop.f32.mrb[0].mxu0
  %v1047 = vadd.f32 %v764, %v1046
  %v1048 = vpop.f32.mrb[0].mxu0
  %1049 = vmatprep.mubr.f32.mxu0 0.0
  %v1050 = vand.u32 %v140, 4294901760
  %v1051 = vsub.f32 %v140, %v1050
  %1052 = vmatmul.mubr.f32.gmra.mrb[0].mxu0 %v1051
  %v1053 = vpop.f32.mrb[0].mxu0
  %v1054 = vadd.f32 %v770, %v1053
  %v1055 = vpop.f32.mrb[0].mxu0
  %1056 = vmatprep.mubr.f32.mxu0 0.0
  %v1057 = vand.u32 %v143, 4294901760
  %v1058 = vsub.f32 %v143, %v1057
  %1059 = vmatmul.mubr.f32.gmra.mrb[0].mxu0 %v1058
  %v1060 = vpop.f32.mrb[0].mxu0
  %v1061 = vadd.f32 %v776, %v1060
  %v1062 = vpop.f32.mrb[0].mxu0
  %1063 = vmatprep.mubr.f32.mxu0 0.0
  %v1064 = vand.u32 %v146, 4294901760
  %v1065 = vsub.f32 %v146, %v1064
  %1066 = vmatmul.mubr.f32.gmra.mrb[0].mxu0 %v1065
  %v1067 = vpop.f32.mrb[0].mxu0
  %v1068 = vadd.f32 %v782, %v1067
  %v1069 = vpop.f32.mrb[0].mxu0
  %1070 = vmatprep.mubr.f32.mxu0 0.0
  %v1071 = vand.u32 %v149, 4294901760
  %v1072 = vsub.f32 %v149, %v1071
  %1073 = vmatmul.mubr.f32.gmra.mrb[0].mxu0 %v1072
  %v1074 = vpop.f32.mrb[0].mxu0
  %v1075 = vadd.f32 %v788, %v1074
  %v1076 = vpop.f32.mrb[0].mxu0
  %1077 = vmatprep.mubr.f32.mxu0 0.0
  %v1078 = vand.u32 %v152, 4294901760
  %v1079 = vsub.f32 %v152, %v1078
  %1080 = vmatmul.mubr.f32.gmra.mrb[0].mxu0 %v1079
  %v1081 = vpop.f32.mrb[0].mxu0
  %v1082 = vadd.f32 %v794, %v1081
  %v1083 = vpop.f32.mrb[0].mxu0
  %1084 = vmatprep.mubr.f32.mxu0 0.0
  %v1085 = vand.u32 %v155, 4294901760
  %v1086 = vsub.f32 %v155, %v1085
  %1087 = vmatmul.mubr.f32.gmra.mrb[0].mxu0 %v1086
  %v1088 = vpop.f32.mrb[0].mxu0
  %v1089 = vadd.f32 %v800, %v1088
  %v1090 = vpop.f32.mrb[0].mxu0
  %1091 = vmatprep.mubr.f32.mxu0 0.0
  %v1092 = vand.u32 %v158, 4294901760
  %v1093 = vsub.f32 %v158, %v1092
  %1094 = vmatmul.mubr.f32.gmra.mrb[0].mxu0 %v1093
  %v1095 = vpop.f32.mrb[0].mxu0
  %v1096 = vadd.f32 %v806, %v1095
  %v1097 = vpop.f32.mrb[0].mxu0
  %1098 = vmatprep.mubr.f32.mxu0 0.0
  %v1099 = vand.u32 %v161, 4294901760
  %v1100 = vsub.f32 %v161, %v1099
  %1101 = vmatmul.mubr.f32.gmra.mrb[0].mxu0 %v1100
  %v1102 = vpop.f32.mrb[0].mxu0
  %v1103 = vadd.f32 %v812, %v1102
  %v1104 = vpop.f32.mrb[0].mxu0
  %1105 = vdwg.mxu0
  %1106 = vmatprep.subr.mxu0 0.0
  %v1107 = vand.u32 %v165, 4294901760
  %1108 = vmatpush1.msra.mxu0 %v1107
  %1109 = vmatprep.subr.mxu0 0.0
  %1110 = vmatpush1.msra.mxu0 0.0
  %1111 = vmatprep.subr.mxu0 0.0
  %1112 = vmatpush1.msra.mxu0 0.0
  %1113 = vmatprep.subr.mxu0 0.0
  %1114 = vmatpush1.msra.mxu0 0.0
  %1115 = vmatprep.subr.mxu0 0.0
  %1116 = vmatpush1.msra.mxu0 0.0
  %1117 = vmatprep.subr.mxu0 0.0
  %1118 = vmatpush1.msra.mxu0 0.0
  %1119 = vmatprep.subr.mxu0 0.0
  %1120 = vmatpush1.msra.mxu0 0.0
  %1121 = vmatprep.subr.mxu0 0.0
  %1122 = vmatpush1.msra.mxu0 0.0
  %1123 = vmatprep.subr.mxu0 0.0
  %1124 = vmatpush1.msra.mxu0 0.0
  %1125 = vmatprep.subr.mxu0 0.0
  %1126 = vmatpush1.msra.mxu0 0.0
  %1127 = vmatprep.subr.mxu0 0.0
  %1128 = vmatpush1.msra.mxu0 0.0
  %1129 = vmatprep.subr.mxu0 0.0
  %1130 = vmatpush1.msra.mxu0 0.0
  %1131 = vmatprep.subr.mxu0 0.0
  %1132 = vmatpush1.msra.mxu0 0.0
  %1133 = vmatprep.subr.mxu0 0.0
  %1134 = vmatpush1.msra.mxu0 0.0
  %1135 = vmatprep.subr.mxu0 0.0
  %1136 = vmatpush1.msra.mxu0 0.0
  %1137 = vmatprep.subr.mxu0 0.0
  %1138 = vmatpush1.msra.mxu0 0.0
  %1139 = vmatprep.subr.mxu0 0.0
  %1140 = vmatpush1.msra.mxu0 0.0
  %1141 = vmatprep.subr.mxu0 0.0
  %1142 = vmatpush1.msra.mxu0 0.0
  %1143 = vmatprep.subr.mxu0 0.0
  %1144 = vmatpush1.msra.mxu0 0.0
  %1145 = vmatprep.subr.mxu0 0.0
  %1146 = vmatpush1.msra.mxu0 0.0
  %1147 = vmatprep.subr.mxu0 0.0
  %1148 = vmatpush1.msra.mxu0 0.0
  %1149 = vmatprep.subr.mxu0 0.0
  %1150 = vmatpush1.msra.mxu0 0.0
  %1151 = vmatprep.subr.mxu0 0.0
  %1152 = vmatpush1.msra.mxu0 0.0
  %1153 = vmatprep.subr.mxu0 0.0
  %1154 = vmatpush1.msra.mxu0 0.0
  %1155 = vmatprep.subr.mxu0 0.0
  %1156 = vmatpush1.msra.mxu0 0.0
  %1157 = vmatprep.subr.mxu0 0.0
  %1158 = vmatpush1.msra.mxu0 0.0
  %1159 = vmatprep.subr.mxu0 0.0
  %1160 = vmatpush1.msra.mxu0 0.0
  %1161 = vmatprep.subr.mxu0 0.0
  %1162 = vmatpush1.msra.mxu0 0.0
  %1163 = vmatprep.subr.mxu0 0.0
  %1164 = vmatpush1.msra.mxu0 0.0
  %1165 = vmatprep.subr.mxu0 0.0
  %1166 = vmatpush1.msra.mxu0 0.0
  %1167 = vmatprep.subr.mxu0 0.0
  %1168 = vmatpush1.msra.mxu0 0.0
  %1169 = vmatprep.subr.mxu0 0.0
  %1170 = vmatpush1.msra.mxu0 0.0
  %1171 = vmatprep.mubr.f32.mxu0 0.0
  %v1172 = vand.u32 %v68, 4294901760
  %v1173 = vsub.f32 %v68, %v1172
  %v1174 = vand.u32 %v1173, 4294901760
  %1175 = vmatmul.mubr.f32.gmra.mrb[0].mxu0 %v1174
  %v1176 = vpop.f32.mrb[0].mxu0
  %v1177 = vadd.f32 %v886, %v1176
  %v1178 = vpop.f32.mrb[0].mxu0
  %1179 = vmatprep.mubr.f32.mxu0 0.0
  %v1180 = vand.u32 %v71, 4294901760
  %v1181 = vsub.f32 %v71, %v1180
  %v1182 = vand.u32 %v1181, 4294901760
  %1183 = vmatmul.mubr.f32.gmra.mrb[0].mxu0 %v1182
  %v1184 = vpop.f32.mrb[0].mxu0
  %v1185 = vadd.f32 %v893, %v1184
  %v1186 = vpop.f32.mrb[0].mxu0
  %1187 = vmatprep.mubr.f32.mxu0 0.0
  %v1188 = vand.u32 %v74, 4294901760
  %v1189 = vsub.f32 %v74, %v1188
  %v1190 = vand.u32 %v1189, 4294901760
  %1191 = vmatmul.mubr.f32.gmra.mrb[0].mxu0 %v1190
  %v1192 = vpop.f32.mrb[0].mxu0
  %v1193 = vadd.f32 %v900, %v1192
  %v1194 = vpop.f32.mrb[0].mxu0
  %1195 = vmatprep.mubr.f32.mxu0 0.0
  %v1196 = vand.u32 %v77, 4294901760
  %v1197 = vsub.f32 %v77, %v1196
  %v1198 = vand.u32 %v1197, 4294901760
  %1199 = vmatmul.mubr.f32.gmra.mrb[0].mxu0 %v1198
  %v1200 = vpop.f32.mrb[0].mxu0
  %v1201 = vadd.f32 %v907, %v1200
  %v1202 = vpop.f32.mrb[0].mxu0
  %1203 = vmatprep.mubr.f32.mxu0 0.0
  %v1204 = vand.u32 %v80, 4294901760
  %v1205 = vsub.f32 %v80, %v1204
  %v1206 = vand.u32 %v1205, 4294901760
  %1207 = vmatmul.mubr.f32.gmra.mrb[0].mxu0 %v1206
  %v1208 = vpop.f32.mrb[0].mxu0
  %v1209 = vadd.f32 %v914, %v1208
  %v1210 = vpop.f32.mrb[0].mxu0
  %1211 = vmatprep.mubr.f32.mxu0 0.0
  %v1212 = vand.u32 %v83, 4294901760
  %v1213 = vsub.f32 %v83, %v1212
  %v1214 = vand.u32 %v1213, 4294901760
  %1215 = vmatmul.mubr.f32.gmra.mrb[0].mxu0 %v1214
  %v1216 = vpop.f32.mrb[0].mxu0
  %v1217 = vadd.f32 %v921, %v1216
  %v1218 = vpop.f32.mrb[0].mxu0
  %1219 = vmatprep.mubr.f32.mxu0 0.0
  %v1220 = vand.u32 %v86, 4294901760
  %v1221 = vsub.f32 %v86, %v1220
  %v1222 = vand.u32 %v1221, 4294901760
  %1223 = vmatmul.mubr.f32.gmra.mrb[0].mxu0 %v1222
  %v1224 = vpop.f32.mrb[0].mxu0
  %v1225 = vadd.f32 %v928, %v1224
  %v1226 = vpop.f32.mrb[0].mxu0
  %1227 = vmatprep.mubr.f32.mxu0 0.0
  %v1228 = vand.u32 %v89, 4294901760
  %v1229 = vsub.f32 %v89, %v1228
  %v1230 = vand.u32 %v1229, 4294901760
  %1231 = vmatmul.mubr.f32.gmra.mrb[0].mxu0 %v1230
  %v1232 = vpop.f32.mrb[0].mxu0
  %v1233 = vadd.f32 %v935, %v1232
  %v1234 = vpop.f32.mrb[0].mxu0
  %1235 = vmatprep.mubr.f32.mxu0 0.0
  %v1236 = vand.u32 %v92, 4294901760
  %v1237 = vsub.f32 %v92, %v1236
  %v1238 = vand.u32 %v1237, 4294901760
  %1239 = vmatmul.mubr.f32.gmra.mrb[0].mxu0 %v1238
  %v1240 = vpop.f32.mrb[0].mxu0
  %v1241 = vadd.f32 %v942, %v1240
  %v1242 = vpop.f32.mrb[0].mxu0
  %1243 = vmatprep.mubr.f32.mxu0 0.0
  %v1244 = vand.u32 %v95, 4294901760
  %v1245 = vsub.f32 %v95, %v1244
  %v1246 = vand.u32 %v1245, 4294901760
  %1247 = vmatmul.mubr.f32.gmra.mrb[0].mxu0 %v1246
  %v1248 = vpop.f32.mrb[0].mxu0
  %v1249 = vadd.f32 %v949, %v1248
  %v1250 = vpop.f32.mrb[0].mxu0
  %1251 = vmatprep.mubr.f32.mxu0 0.0
  %v1252 = vand.u32 %v98, 4294901760
  %v1253 = vsub.f32 %v98, %v1252
  %v1254 = vand.u32 %v1253, 4294901760
  %1255 = vmatmul.mubr.f32.gmra.mrb[0].mxu0 %v1254
  %v1256 = vpop.f32.mrb[0].mxu0
  %v1257 = vadd.f32 %v956, %v1256
  %v1258 = vpop.f32.mrb[0].mxu0
  %1259 = vmatprep.mubr.f32.mxu0 0.0
  %v1260 = vand.u32 %v101, 4294901760
  %v1261 = vsub.f32 %v101, %v1260
  %v1262 = vand.u32 %v1261, 4294901760
  %1263 = vmatmul.mubr.f32.gmra.mrb[0].mxu0 %v1262
  %v1264 = vpop.f32.mrb[0].mxu0
  %v1265 = vadd.f32 %v963, %v1264
  %v1266 = vpop.f32.mrb[0].mxu0
  %1267 = vmatprep.mubr.f32.mxu0 0.0
  %v1268 = vand.u32 %v104, 4294901760
  %v1269 = vsub.f32 %v104, %v1268
  %v1270 = vand.u32 %v1269, 4294901760
  %1271 = vmatmul.mubr.f32.gmra.mrb[0].mxu0 %v1270
  %v1272 = vpop.f32.mrb[0].mxu0
  %v1273 = vadd.f32 %v970, %v1272
  %v1274 = vpop.f32.mrb[0].mxu0
  %1275 = vmatprep.mubr.f32.mxu0 0.0
  %v1276 = vand.u32 %v107, 4294901760
  %v1277 = vsub.f32 %v107, %v1276
  %v1278 = vand.u32 %v1277, 4294901760
  %1279 = vmatmul.mubr.f32.gmra.mrb[0].mxu0 %v1278
  %v1280 = vpop.f32.mrb[0].mxu0
  %v1281 = vadd.f32 %v977, %v1280
  %v1282 = vpop.f32.mrb[0].mxu0
  %1283 = vmatprep.mubr.f32.mxu0 0.0
  %v1284 = vand.u32 %v110, 4294901760
  %v1285 = vsub.f32 %v110, %v1284
  %v1286 = vand.u32 %v1285, 4294901760
  %1287 = vmatmul.mubr.f32.gmra.mrb[0].mxu0 %v1286
  %v1288 = vpop.f32.mrb[0].mxu0
  %v1289 = vadd.f32 %v984, %v1288
  %v1290 = vpop.f32.mrb[0].mxu0
  %1291 = vmatprep.mubr.f32.mxu0 0.0
  %v1292 = vand.u32 %v113, 4294901760
  %v1293 = vsub.f32 %v113, %v1292
  %v1294 = vand.u32 %v1293, 4294901760
  %1295 = vmatmul.mubr.f32.gmra.mrb[0].mxu0 %v1294
  %v1296 = vpop.f32.mrb[0].mxu0
  %v1297 = vadd.f32 %v991, %v1296
  %v1298 = vpop.f32.mrb[0].mxu0
  %1299 = vmatprep.mubr.f32.mxu0 0.0
  %v1300 = vand.u32 %v116, 4294901760
  %v1301 = vsub.f32 %v116, %v1300
  %v1302 = vand.u32 %v1301, 4294901760
  %1303 = vmatmul.mubr.f32.gmra.mrb[0].mxu0 %v1302
  %v1304 = vpop.f32.mrb[0].mxu0
  %v1305 = vadd.f32 %v998, %v1304
  %v1306 = vpop.f32.mrb[0].mxu0
  %1307 = vmatprep.mubr.f32.mxu0 0.0
  %v1308 = vand.u32 %v119, 4294901760
  %v1309 = vsub.f32 %v119, %v1308
  %v1310 = vand.u32 %v1309, 4294901760
  %1311 = vmatmul.mubr.f32.gmra.mrb[0].mxu0 %v1310
  %v1312 = vpop.f32.mrb[0].mxu0
  %v1313 = vadd.f32 %v1005, %v1312
  %v1314 = vpop.f32.mrb[0].mxu0
  %1315 = vmatprep.mubr.f32.mxu0 0.0
  %v1316 = vand.u32 %v122, 4294901760
  %v1317 = vsub.f32 %v122, %v1316
  %v1318 = vand.u32 %v1317, 4294901760
  %1319 = vmatmul.mubr.f32.gmra.mrb[0].mxu0 %v1318
  %v1320 = vpop.f32.mrb[0].mxu0
  %v1321 = vadd.f32 %v1012, %v1320
  %v1322 = vpop.f32.mrb[0].mxu0
  %1323 = vmatprep.mubr.f32.mxu0 0.0
  %v1324 = vand.u32 %v125, 4294901760
  %v1325 = vsub.f32 %v125, %v1324
  %v1326 = vand.u32 %v1325, 4294901760
  %1327 = vmatmul.mubr.f32.gmra.mrb[0].mxu0 %v1326
  %v1328 = vpop.f32.mrb[0].mxu0
  %v1329 = vadd.f32 %v1019, %v1328
  %v1330 = vpop.f32.mrb[0].mxu0
  %1331 = vmatprep.mubr.f32.mxu0 0.0
  %v1332 = vand.u32 %v128, 4294901760
  %v1333 = vsub.f32 %v128, %v1332
  %v1334 = vand.u32 %v1333, 4294901760
  %1335 = vmatmul.mubr.f32.gmra.mrb[0].mxu0 %v1334
  %v1336 = vpop.f32.mrb[0].mxu0
  %v1337 = vadd.f32 %v1026, %v1336
  %v1338 = vpop.f32.mrb[0].mxu0
  %1339 = vmatprep.mubr.f32.mxu0 0.0
  %v1340 = vand.u32 %v131, 4294901760
  %v1341 = vsub.f32 %v131, %v1340
  %v1342 = vand.u32 %v1341, 4294901760
  %1343 = vmatmul.mubr.f32.gmra.mrb[0].mxu0 %v1342
  %v1344 = vpop.f32.mrb[0].mxu0
  %v1345 = vadd.f32 %v1033, %v1344
  %v1346 = vpop.f32.mrb[0].mxu0
  %1347 = vmatprep.mubr.f32.mxu0 0.0
  %v1348 = vand.u32 %v134, 4294901760
  %v1349 = vsub.f32 %v134, %v1348
  %v1350 = vand.u32 %v1349, 4294901760
  %1351 = vmatmul.mubr.f32.gmra.mrb[0].mxu0 %v1350
  %v1352 = vpop.f32.mrb[0].mxu0
  %v1353 = vadd.f32 %v1040, %v1352
  %v1354 = vpop.f32.mrb[0].mxu0
  %1355 = vmatprep.mubr.f32.mxu0 0.0
  %v1356 = vand.u32 %v137, 4294901760
  %v1357 = vsub.f32 %v137, %v1356
  %v1358 = vand.u32 %v1357, 4294901760
  %1359 = vmatmul.mubr.f32.gmra.mrb[0].mxu0 %v1358
  %v1360 = vpop.f32.mrb[0].mxu0
  %v1361 = vadd.f32 %v1047, %v1360
  %v1362 = vpop.f32.mrb[0].mxu0
  %1363 = vmatprep.mubr.f32.mxu0 0.0
  %v1364 = vand.u32 %v140, 4294901760
  %v1365 = vsub.f32 %v140, %v1364
  %v1366 = vand.u32 %v1365, 4294901760
  %1367 = vmatmul.mubr.f32.gmra.mrb[0].mxu0 %v1366
  %v1368 = vpop.f32.mrb[0].mxu0
  %v1369 = vadd.f32 %v1054, %v1368
  %v1370 = vpop.f32.mrb[0].mxu0
  %1371 = vmatprep.mubr.f32.mxu0 0.0
  %v1372 = vand.u32 %v143, 4294901760
  %v1373 = vsub.f32 %v143, %v1372
  %v1374 = vand.u32 %v1373, 4294901760
  %1375 = vmatmul.mubr.f32.gmra.mrb[0].mxu0 %v1374
  %v1376 = vpop.f32.mrb[0].mxu0
  %v1377 = vadd.f32 %v1061, %v1376
  %v1378 = vpop.f32.mrb[0].mxu0
  %1379 = vmatprep.mubr.f32.mxu0 0.0
  %v1380 = vand.u32 %v146, 4294901760
  %v1381 = vsub.f32 %v146, %v1380
  %v1382 = vand.u32 %v1381, 4294901760
  %1383 = vmatmul.mubr.f32.gmra.mrb[0].mxu0 %v1382
  %v1384 = vpop.f32.mrb[0].mxu0
  %v1385 = vadd.f32 %v1068, %v1384
  %v1386 = vpop.f32.mrb[0].mxu0
  %1387 = vmatprep.mubr.f32.mxu0 0.0
  %v1388 = vand.u32 %v149, 4294901760
  %v1389 = vsub.f32 %v149, %v1388
  %v1390 = vand.u32 %v1389, 4294901760
  %1391 = vmatmul.mubr.f32.gmra.mrb[0].mxu0 %v1390
  %v1392 = vpop.f32.mrb[0].mxu0
  %v1393 = vadd.f32 %v1075, %v1392
  %v1394 = vpop.f32.mrb[0].mxu0
  %1395 = vmatprep.mubr.f32.mxu0 0.0
  %v1396 = vand.u32 %v152, 4294901760
  %v1397 = vsub.f32 %v152, %v1396
  %v1398 = vand.u32 %v1397, 4294901760
  %1399 = vmatmul.mubr.f32.gmra.mrb[0].mxu0 %v1398
  %v1400 = vpop.f32.mrb[0].mxu0
  %v1401 = vadd.f32 %v1082, %v1400
  %v1402 = vpop.f32.mrb[0].mxu0
  %1403 = vmatprep.mubr.f32.mxu0 0.0
  %v1404 = vand.u32 %v155, 4294901760
  %v1405 = vsub.f32 %v155, %v1404
  %v1406 = vand.u32 %v1405, 4294901760
  %1407 = vmatmul.mubr.f32.gmra.mrb[0].mxu0 %v1406
  %v1408 = vpop.f32.mrb[0].mxu0
  %v1409 = vadd.f32 %v1089, %v1408
  %v1410 = vpop.f32.mrb[0].mxu0
  %1411 = vmatprep.mubr.f32.mxu0 0.0
  %v1412 = vand.u32 %v158, 4294901760
  %v1413 = vsub.f32 %v158, %v1412
  %v1414 = vand.u32 %v1413, 4294901760
  %1415 = vmatmul.mubr.f32.gmra.mrb[0].mxu0 %v1414
  %v1416 = vpop.f32.mrb[0].mxu0
  %v1417 = vadd.f32 %v1096, %v1416
  %v1418 = vpop.f32.mrb[0].mxu0
  %1419 = vmatprep.mubr.f32.mxu0 0.0
  %v1420 = vand.u32 %v161, 4294901760
  %v1421 = vsub.f32 %v161, %v1420
  %v1422 = vand.u32 %v1421, 4294901760
  %1423 = vmatmul.mubr.f32.gmra.mrb[0].mxu0 %v1422
  %v1424 = vpop.f32.mrb[0].mxu0
  %v1425 = vadd.f32 %v1103, %v1424
  %v1426 = vpop.f32.mrb[0].mxu0
  %1427 = vdwg.mxu0
  %1428 = vmatprep.subr.mxu0 0.0
  %v1429 = vand.u32 %v165, 4294901760
  %v1430 = vsub.f32 %v165, %v1429
  %v1431 = vand.u32 %v1430, 4294901760
  %1432 = vmatpush1.msra.mxu0 %v1431
  %1433 = vmatprep.subr.mxu0 0.0
  %1434 = vmatpush1.msra.mxu0 0.0
  %1435 = vmatprep.subr.mxu0 0.0
  %1436 = vmatpush1.msra.mxu0 0.0
  %1437 = vmatprep.subr.mxu0 0.0
  %1438 = vmatpush1.msra.mxu0 0.0
  %1439 = vmatprep.subr.mxu0 0.0
  %1440 = vmatpush1.msra.mxu0 0.0
  %1441 = vmatprep.subr.mxu0 0.0
  %1442 = vmatpush1.msra.mxu0 0.0
  %1443 = vmatprep.subr.mxu0 0.0
  %1444 = vmatpush1.msra.mxu0 0.0
  %1445 = vmatprep.subr.mxu0 0.0
  %1446 = vmatpush1.msra.mxu0 0.0
  %1447 = vmatprep.subr.mxu0 0.0
  %1448 = vmatpush1.msra.mxu0 0.0
  %1449 = vmatprep.subr.mxu0 0.0
  %1450 = vmatpush1.msra.mxu0 0.0
  %1451 = vmatprep.subr.mxu0 0.0
  %1452 = vmatpush1.msra.mxu0 0.0
  %1453 = vmatprep.subr.mxu0 0.0
  %1454 = vmatpush1.msra.mxu0 0.0
  %1455 = vmatprep.subr.mxu0 0.0
  %1456 = vmatpush1.msra.mxu0 0.0
  %1457 = vmatprep.subr.mxu0 0.0
  %1458 = vmatpush1.msra.mxu0 0.0
  %1459 = vmatprep.subr.mxu0 0.0
  %1460 = vmatpush1.msra.mxu0 0.0
  %1461 = vmatprep.subr.mxu0 0.0
  %1462 = vmatpush1.msra.mxu0 0.0
  %1463 = vmatprep.subr.mxu0 0.0
  %1464 = vmatpush1.msra.mxu0 0.0
  %1465 = vmatprep.subr.mxu0 0.0
  %1466 = vmatpush1.msra.mxu0 0.0
  %1467 = vmatprep.subr.mxu0 0.0
  %1468 = vmatpush1.msra.mxu0 0.0
  %1469 = vmatprep.subr.mxu0 0.0
  %1470 = vmatpush1.msra.mxu0 0.0
  %1471 = vmatprep.subr.mxu0 0.0
  %1472 = vmatpush1.msra.mxu0 0.0
  %1473 = vmatprep.subr.mxu0 0.0
  %1474 = vmatpush1.msra.mxu0 0.0
  %1475 = vmatprep.subr.mxu0 0.0
  %1476 = vmatpush1.msra.mxu0 0.0
  %1477 = vmatprep.subr.mxu0 0.0
  %1478 = vmatpush1.msra.mxu0 0.0
  %1479 = vmatprep.subr.mxu0 0.0
  %1480 = vmatpush1.msra.mxu0 0.0
  %1481 = vmatprep.subr.mxu0 0.0
  %1482 = vmatpush1.msra.mxu0 0.0
  %1483 = vmatprep.subr.mxu0 0.0
  %1484 = vmatpush1.msra.mxu0 0.0
  %1485 = vmatprep.subr.mxu0 0.0
  %1486 = vmatpush1.msra.mxu0 0.0
  %1487 = vmatprep.subr.mxu0 0.0
  %1488 = vmatpush1.msra.mxu0 0.0
  %1489 = vmatprep.subr.mxu0 0.0
  %1490 = vmatpush1.msra.mxu0 0.0
  %1491 = vmatprep.subr.mxu0 0.0
  %1492 = vmatpush1.msra.mxu0 0.0
  %1493 = vmatprep.subr.mxu0 0.0
  %1494 = vmatpush1.msra.mxu0 0.0
  %1495 = vmatprep.mubr.f32.mxu0 0.0
  %v1496 = vand.u32 %v68, 4294901760
  %1497 = vmatmul.mubr.f32.gmra.mrb[0].mxu0 %v1496
  %v1498 = vpop.f32.mrb[0].mxu0
  %v1499 = vadd.f32 %v1177, %v1498
  %v1500 = vpop.f32.mrb[0].mxu0
  %1501 = vmatprep.mubr.f32.mxu0 0.0
  %v1502 = vand.u32 %v71, 4294901760
  %1503 = vmatmul.mubr.f32.gmra.mrb[0].mxu0 %v1502
  %v1504 = vpop.f32.mrb[0].mxu0
  %v1505 = vadd.f32 %v1185, %v1504
  %v1506 = vpop.f32.mrb[0].mxu0
  %1507 = vmatprep.mubr.f32.mxu0 0.0
  %v1508 = vand.u32 %v74, 4294901760
  %1509 = vmatmul.mubr.f32.gmra.mrb[0].mxu0 %v1508
  %v1510 = vpop.f32.mrb[0].mxu0
  %v1511 = vadd.f32 %v1193, %v1510
  %v1512 = vpop.f32.mrb[0].mxu0
  %1513 = vmatprep.mubr.f32.mxu0 0.0
  %v1514 = vand.u32 %v77, 4294901760
  %1515 = vmatmul.mubr.f32.gmra.mrb[0].mxu0 %v1514
  %v1516 = vpop.f32.mrb[0].mxu0
  %v1517 = vadd.f32 %v1201, %v1516
  %v1518 = vpop.f32.mrb[0].mxu0
  %1519 = vmatprep.mubr.f32.mxu0 0.0
  %v1520 = vand.u32 %v80, 4294901760
  %1521 = vmatmul.mubr.f32.gmra.mrb[0].mxu0 %v1520
  %v1522 = vpop.f32.mrb[0].mxu0
  %v1523 = vadd.f32 %v1209, %v1522
  %v1524 = vpop.f32.mrb[0].mxu0
  %1525 = vmatprep.mubr.f32.mxu0 0.0
  %v1526 = vand.u32 %v83, 4294901760
  %1527 = vmatmul.mubr.f32.gmra.mrb[0].mxu0 %v1526
  %v1528 = vpop.f32.mrb[0].mxu0
  %v1529 = vadd.f32 %v1217, %v1528
  %v1530 = vpop.f32.mrb[0].mxu0
  %1531 = vmatprep.mubr.f32.mxu0 0.0
  %v1532 = vand.u32 %v86, 4294901760
  %1533 = vmatmul.mubr.f32.gmra.mrb[0].mxu0 %v1532
  %v1534 = vpop.f32.mrb[0].mxu0
  %v1535 = vadd.f32 %v1225, %v1534
  %v1536 = vpop.f32.mrb[0].mxu0
  %1537 = vmatprep.mubr.f32.mxu0 0.0
  %v1538 = vand.u32 %v89, 4294901760
  %1539 = vmatmul.mubr.f32.gmra.mrb[0].mxu0 %v1538
  %v1540 = vpop.f32.mrb[0].mxu0
  %v1541 = vadd.f32 %v1233, %v1540
  %v1542 = vpop.f32.mrb[0].mxu0
  %1543 = vmatprep.mubr.f32.mxu0 0.0
  %v1544 = vand.u32 %v92, 4294901760
  %1545 = vmatmul.mubr.f32.gmra.mrb[0].mxu0 %v1544
  %v1546 = vpop.f32.mrb[0].mxu0
  %v1547 = vadd.f32 %v1241, %v1546
  %v1548 = vpop.f32.mrb[0].mxu0
  %1549 = vmatprep.mubr.f32.mxu0 0.0
  %v1550 = vand.u32 %v95, 4294901760
  %1551 = vmatmul.mubr.f32.gmra.mrb[0].mxu0 %v1550
  %v1552 = vpop.f32.mrb[0].mxu0
  %v1553 = vadd.f32 %v1249, %v1552
  %v1554 = vpop.f32.mrb[0].mxu0
  %1555 = vmatprep.mubr.f32.mxu0 0.0
  %v1556 = vand.u32 %v98, 4294901760
  %1557 = vmatmul.mubr.f32.gmra.mrb[0].mxu0 %v1556
  %v1558 = vpop.f32.mrb[0].mxu0
  %v1559 = vadd.f32 %v1257, %v1558
  %v1560 = vpop.f32.mrb[0].mxu0
  %1561 = vmatprep.mubr.f32.mxu0 0.0
  %v1562 = vand.u32 %v101, 4294901760
  %1563 = vmatmul.mubr.f32.gmra.mrb[0].mxu0 %v1562
  %v1564 = vpop.f32.mrb[0].mxu0
  %v1565 = vadd.f32 %v1265, %v1564
  %v1566 = vpop.f32.mrb[0].mxu0
  %1567 = vmatprep.mubr.f32.mxu0 0.0
  %v1568 = vand.u32 %v104, 4294901760
  %1569 = vmatmul.mubr.f32.gmra.mrb[0].mxu0 %v1568
  %v1570 = vpop.f32.mrb[0].mxu0
  %v1571 = vadd.f32 %v1273, %v1570
  %v1572 = vpop.f32.mrb[0].mxu0
  %1573 = vmatprep.mubr.f32.mxu0 0.0
  %v1574 = vand.u32 %v107, 4294901760
  %1575 = vmatmul.mubr.f32.gmra.mrb[0].mxu0 %v1574
  %v1576 = vpop.f32.mrb[0].mxu0
  %v1577 = vadd.f32 %v1281, %v1576
  %v1578 = vpop.f32.mrb[0].mxu0
  %1579 = vmatprep.mubr.f32.mxu0 0.0
  %v1580 = vand.u32 %v110, 4294901760
  %1581 = vmatmul.mubr.f32.gmra.mrb[0].mxu0 %v1580
  %v1582 = vpop.f32.mrb[0].mxu0
  %v1583 = vadd.f32 %v1289, %v1582
  %v1584 = vpop.f32.mrb[0].mxu0
  %1585 = vmatprep.mubr.f32.mxu0 0.0
  %v1586 = vand.u32 %v113, 4294901760
  %1587 = vmatmul.mubr.f32.gmra.mrb[0].mxu0 %v1586
  %v1588 = vpop.f32.mrb[0].mxu0
  %v1589 = vadd.f32 %v1297, %v1588
  %v1590 = vpop.f32.mrb[0].mxu0
  %1591 = vmatprep.mubr.f32.mxu0 0.0
  %v1592 = vand.u32 %v116, 4294901760
  %1593 = vmatmul.mubr.f32.gmra.mrb[0].mxu0 %v1592
  %v1594 = vpop.f32.mrb[0].mxu0
  %v1595 = vadd.f32 %v1305, %v1594
  %v1596 = vpop.f32.mrb[0].mxu0
  %1597 = vmatprep.mubr.f32.mxu0 0.0
  %v1598 = vand.u32 %v119, 4294901760
  %1599 = vmatmul.mubr.f32.gmra.mrb[0].mxu0 %v1598
  %v1600 = vpop.f32.mrb[0].mxu0
  %v1601 = vadd.f32 %v1313, %v1600
  %v1602 = vpop.f32.mrb[0].mxu0
  %1603 = vmatprep.mubr.f32.mxu0 0.0
  %v1604 = vand.u32 %v122, 4294901760
  %1605 = vmatmul.mubr.f32.gmra.mrb[0].mxu0 %v1604
  %v1606 = vpop.f32.mrb[0].mxu0
  %v1607 = vadd.f32 %v1321, %v1606
  %v1608 = vpop.f32.mrb[0].mxu0
  %1609 = vmatprep.mubr.f32.mxu0 0.0
  %v1610 = vand.u32 %v125, 4294901760
  %1611 = vmatmul.mubr.f32.gmra.mrb[0].mxu0 %v1610
  %v1612 = vpop.f32.mrb[0].mxu0
  %v1613 = vadd.f32 %v1329, %v1612
  %v1614 = vpop.f32.mrb[0].mxu0
  %1615 = vmatprep.mubr.f32.mxu0 0.0
  %v1616 = vand.u32 %v128, 4294901760
  %1617 = vmatmul.mubr.f32.gmra.mrb[0].mxu0 %v1616
  %v1618 = vpop.f32.mrb[0].mxu0
  %v1619 = vadd.f32 %v1337, %v1618
  %v1620 = vpop.f32.mrb[0].mxu0
  %1621 = vmatprep.mubr.f32.mxu0 0.0
  %v1622 = vand.u32 %v131, 4294901760
  %1623 = vmatmul.mubr.f32.gmra.mrb[0].mxu0 %v1622
  %v1624 = vpop.f32.mrb[0].mxu0
  %v1625 = vadd.f32 %v1345, %v1624
  %v1626 = vpop.f32.mrb[0].mxu0
  %1627 = vmatprep.mubr.f32.mxu0 0.0
  %v1628 = vand.u32 %v134, 4294901760
  %1629 = vmatmul.mubr.f32.gmra.mrb[0].mxu0 %v1628
  %v1630 = vpop.f32.mrb[0].mxu0
  %v1631 = vadd.f32 %v1353, %v1630
  %v1632 = vpop.f32.mrb[0].mxu0
  %1633 = vmatprep.mubr.f32.mxu0 0.0
  %v1634 = vand.u32 %v137, 4294901760
  %1635 = vmatmul.mubr.f32.gmra.mrb[0].mxu0 %v1634
  %v1636 = vpop.f32.mrb[0].mxu0
  %v1637 = vadd.f32 %v1361, %v1636
  %v1638 = vpop.f32.mrb[0].mxu0
  %1639 = vmatprep.mubr.f32.mxu0 0.0
  %v1640 = vand.u32 %v140, 4294901760
  %1641 = vmatmul.mubr.f32.gmra.mrb[0].mxu0 %v1640
  %v1642 = vpop.f32.mrb[0].mxu0
  %v1643 = vadd.f32 %v1369, %v1642
  %v1644 = vpop.f32.mrb[0].mxu0
  %1645 = vmatprep.mubr.f32.mxu0 0.0
  %v1646 = vand.u32 %v143, 4294901760
  %1647 = vmatmul.mubr.f32.gmra.mrb[0].mxu0 %v1646
  %v1648 = vpop.f32.mrb[0].mxu0
  %v1649 = vadd.f32 %v1377, %v1648
  %v1650 = vpop.f32.mrb[0].mxu0
  %1651 = vmatprep.mubr.f32.mxu0 0.0
  %v1652 = vand.u32 %v146, 4294901760
  %1653 = vmatmul.mubr.f32.gmra.mrb[0].mxu0 %v1652
  %v1654 = vpop.f32.mrb[0].mxu0
  %v1655 = vadd.f32 %v1385, %v1654
  %v1656 = vpop.f32.mrb[0].mxu0
  %1657 = vmatprep.mubr.f32.mxu0 0.0
  %v1658 = vand.u32 %v149, 4294901760
  %1659 = vmatmul.mubr.f32.gmra.mrb[0].mxu0 %v1658
  %v1660 = vpop.f32.mrb[0].mxu0
  %v1661 = vadd.f32 %v1393, %v1660
  %v1662 = vpop.f32.mrb[0].mxu0
  %1663 = vmatprep.mubr.f32.mxu0 0.0
  %v1664 = vand.u32 %v152, 4294901760
  %1665 = vmatmul.mubr.f32.gmra.mrb[0].mxu0 %v1664
  %v1666 = vpop.f32.mrb[0].mxu0
  %v1667 = vadd.f32 %v1401, %v1666
  %v1668 = vpop.f32.mrb[0].mxu0
  %1669 = vmatprep.mubr.f32.mxu0 0.0
  %v1670 = vand.u32 %v155, 4294901760
  %1671 = vmatmul.mubr.f32.gmra.mrb[0].mxu0 %v1670
  %v1672 = vpop.f32.mrb[0].mxu0
  %v1673 = vadd.f32 %v1409, %v1672
  %v1674 = vpop.f32.mrb[0].mxu0
  %1675 = vmatprep.mubr.f32.mxu0 0.0
  %v1676 = vand.u32 %v158, 4294901760
  %1677 = vmatmul.mubr.f32.gmra.mrb[0].mxu0 %v1676
  %v1678 = vpop.f32.mrb[0].mxu0
  %v1679 = vadd.f32 %v1417, %v1678
  %v1680 = vpop.f32.mrb[0].mxu0
  %1681 = vmatprep.mubr.f32.mxu0 0.0
  %v1682 = vand.u32 %v161, 4294901760
  %1683 = vmatmul.mubr.f32.gmra.mrb[0].mxu0 %v1682
  %v1684 = vpop.f32.mrb[0].mxu0
  %v1685 = vadd.f32 %v1425, %v1684
  %v1686 = vpop.f32.mrb[0].mxu0
  %1687 = vdwg.mxu0
  %1688 = vmatprep.subr.mxu0 0.0
  %v1689 = vand.u32 %v165, 4294901760
  %1690 = vmatpush1.msra.mxu0 %v1689
  %1691 = vmatprep.subr.mxu0 0.0
  %1692 = vmatpush1.msra.mxu0 0.0
  %1693 = vmatprep.subr.mxu0 0.0
  %1694 = vmatpush1.msra.mxu0 0.0
  %1695 = vmatprep.subr.mxu0 0.0
  %1696 = vmatpush1.msra.mxu0 0.0
  %1697 = vmatprep.subr.mxu0 0.0
  %1698 = vmatpush1.msra.mxu0 0.0
  %1699 = vmatprep.subr.mxu0 0.0
  %1700 = vmatpush1.msra.mxu0 0.0
  %1701 = vmatprep.subr.mxu0 0.0
  %1702 = vmatpush1.msra.mxu0 0.0
  %1703 = vmatprep.subr.mxu0 0.0
  %1704 = vmatpush1.msra.mxu0 0.0
  %1705 = vmatprep.subr.mxu0 0.0
  %1706 = vmatpush1.msra.mxu0 0.0
  %1707 = vmatprep.subr.mxu0 0.0
  %1708 = vmatpush1.msra.mxu0 0.0
  %1709 = vmatprep.subr.mxu0 0.0
  %1710 = vmatpush1.msra.mxu0 0.0
  %1711 = vmatprep.subr.mxu0 0.0
  %1712 = vmatpush1.msra.mxu0 0.0
  %1713 = vmatprep.subr.mxu0 0.0
  %1714 = vmatpush1.msra.mxu0 0.0
  %1715 = vmatprep.subr.mxu0 0.0
  %1716 = vmatpush1.msra.mxu0 0.0
  %1717 = vmatprep.subr.mxu0 0.0
  %1718 = vmatpush1.msra.mxu0 0.0
  %1719 = vmatprep.subr.mxu0 0.0
  %1720 = vmatpush1.msra.mxu0 0.0
  %1721 = vmatprep.subr.mxu0 0.0
  %1722 = vmatpush1.msra.mxu0 0.0
  %1723 = vmatprep.subr.mxu0 0.0
  %1724 = vmatpush1.msra.mxu0 0.0
  %1725 = vmatprep.subr.mxu0 0.0
  %1726 = vmatpush1.msra.mxu0 0.0
  %1727 = vmatprep.subr.mxu0 0.0
  %1728 = vmatpush1.msra.mxu0 0.0
  %1729 = vmatprep.subr.mxu0 0.0
  %1730 = vmatpush1.msra.mxu0 0.0
  %1731 = vmatprep.subr.mxu0 0.0
  %1732 = vmatpush1.msra.mxu0 0.0
  %1733 = vmatprep.subr.mxu0 0.0
  %1734 = vmatpush1.msra.mxu0 0.0
  %1735 = vmatprep.subr.mxu0 0.0
  %1736 = vmatpush1.msra.mxu0 0.0
  %1737 = vmatprep.subr.mxu0 0.0
  %1738 = vmatpush1.msra.mxu0 0.0
  %1739 = vmatprep.subr.mxu0 0.0
  %1740 = vmatpush1.msra.mxu0 0.0
  %1741 = vmatprep.subr.mxu0 0.0
  %1742 = vmatpush1.msra.mxu0 0.0
  %1743 = vmatprep.subr.mxu0 0.0
  %1744 = vmatpush1.msra.mxu0 0.0
  %1745 = vmatprep.subr.mxu0 0.0
  %1746 = vmatpush1.msra.mxu0 0.0
  %1747 = vmatprep.subr.mxu0 0.0
  %1748 = vmatpush1.msra.mxu0 0.0
  %1749 = vmatprep.subr.mxu0 0.0
  %1750 = vmatpush1.msra.mxu0 0.0
  %1751 = vmatprep.subr.mxu0 0.0
  %1752 = vmatpush1.msra.mxu0 0.0
  %1753 = vmatprep.mubr.f32.mxu0 0.0
  %v1754 = vand.u32 %v68, 4294901760
  %1755 = vmatmul.mubr.f32.gmra.mrb[0].mxu0 %v1754
  %v1756 = vpop.f32.mrb[0].mxu0
  %v1757 = vadd.f32 %v1499, %v1756
  %v1758 = vpop.f32.mrb[0].mxu0
  %1759 = vmatprep.mubr.f32.mxu0 0.0
  %v1760 = vand.u32 %v71, 4294901760
  %1761 = vmatmul.mubr.f32.gmra.mrb[0].mxu0 %v1760
  %v1762 = vpop.f32.mrb[0].mxu0
  %v1763 = vadd.f32 %v1505, %v1762
  %v1764 = vpop.f32.mrb[0].mxu0
  %1765 = vmatprep.mubr.f32.mxu0 0.0
  %v1766 = vand.u32 %v74, 4294901760
  %1767 = vmatmul.mubr.f32.gmra.mrb[0].mxu0 %v1766
  %v1768 = vpop.f32.mrb[0].mxu0
  %v1769 = vadd.f32 %v1511, %v1768
  %v1770 = vpop.f32.mrb[0].mxu0
  %1771 = vmatprep.mubr.f32.mxu0 0.0
  %v1772 = vand.u32 %v77, 4294901760
  %1773 = vmatmul.mubr.f32.gmra.mrb[0].mxu0 %v1772
  %v1774 = vpop.f32.mrb[0].mxu0
  %v1775 = vadd.f32 %v1517, %v1774
  %v1776 = vpop.f32.mrb[0].mxu0
  %1777 = vmatprep.mubr.f32.mxu0 0.0
  %v1778 = vand.u32 %v80, 4294901760
  %1779 = vmatmul.mubr.f32.gmra.mrb[0].mxu0 %v1778
  %v1780 = vpop.f32.mrb[0].mxu0
  %v1781 = vadd.f32 %v1523, %v1780
  %v1782 = vpop.f32.mrb[0].mxu0
  %1783 = vmatprep.mubr.f32.mxu0 0.0
  %v1784 = vand.u32 %v83, 4294901760
  %1785 = vmatmul.mubr.f32.gmra.mrb[0].mxu0 %v1784
  %v1786 = vpop.f32.mrb[0].mxu0
  %v1787 = vadd.f32 %v1529, %v1786
  %v1788 = vpop.f32.mrb[0].mxu0
  %1789 = vmatprep.mubr.f32.mxu0 0.0
  %v1790 = vand.u32 %v86, 4294901760
  %1791 = vmatmul.mubr.f32.gmra.mrb[0].mxu0 %v1790
  %v1792 = vpop.f32.mrb[0].mxu0
  %v1793 = vadd.f32 %v1535, %v1792
  %v1794 = vpop.f32.mrb[0].mxu0
  %1795 = vmatprep.mubr.f32.mxu0 0.0
  %v1796 = vand.u32 %v89, 4294901760
  %1797 = vmatmul.mubr.f32.gmra.mrb[0].mxu0 %v1796
  %v1798 = vpop.f32.mrb[0].mxu0
  %v1799 = vadd.f32 %v1541, %v1798
  %v1800 = vpop.f32.mrb[0].mxu0
  %1801 = vmatprep.mubr.f32.mxu0 0.0
  %v1802 = vand.u32 %v92, 4294901760
  %1803 = vmatmul.mubr.f32.gmra.mrb[0].mxu0 %v1802
  %v1804 = vpop.f32.mrb[0].mxu0
  %v1805 = vadd.f32 %v1547, %v1804
  %v1806 = vpop.f32.mrb[0].mxu0
  %1807 = vmatprep.mubr.f32.mxu0 0.0
  %v1808 = vand.u32 %v95, 4294901760
  %1809 = vmatmul.mubr.f32.gmra.mrb[0].mxu0 %v1808
  %v1810 = vpop.f32.mrb[0].mxu0
  %v1811 = vadd.f32 %v1553, %v1810
  %v1812 = vpop.f32.mrb[0].mxu0
  %1813 = vmatprep.mubr.f32.mxu0 0.0
  %v1814 = vand.u32 %v98, 4294901760
  %1815 = vmatmul.mubr.f32.gmra.mrb[0].mxu0 %v1814
  %v1816 = vpop.f32.mrb[0].mxu0
  %v1817 = vadd.f32 %v1559, %v1816
  %v1818 = vpop.f32.mrb[0].mxu0
  %1819 = vmatprep.mubr.f32.mxu0 0.0
  %v1820 = vand.u32 %v101, 4294901760
  %1821 = vmatmul.mubr.f32.gmra.mrb[0].mxu0 %v1820
  %v1822 = vpop.f32.mrb[0].mxu0
  %v1823 = vadd.f32 %v1565, %v1822
  %v1824 = vpop.f32.mrb[0].mxu0
  %1825 = vmatprep.mubr.f32.mxu0 0.0
  %v1826 = vand.u32 %v104, 4294901760
  %1827 = vmatmul.mubr.f32.gmra.mrb[0].mxu0 %v1826
  %v1828 = vpop.f32.mrb[0].mxu0
  %v1829 = vadd.f32 %v1571, %v1828
  %v1830 = vpop.f32.mrb[0].mxu0
  %1831 = vmatprep.mubr.f32.mxu0 0.0
  %v1832 = vand.u32 %v107, 4294901760
  %1833 = vmatmul.mubr.f32.gmra.mrb[0].mxu0 %v1832
  %v1834 = vpop.f32.mrb[0].mxu0
  %v1835 = vadd.f32 %v1577, %v1834
  %v1836 = vpop.f32.mrb[0].mxu0
  %1837 = vmatprep.mubr.f32.mxu0 0.0
  %v1838 = vand.u32 %v110, 4294901760
  %1839 = vmatmul.mubr.f32.gmra.mrb[0].mxu0 %v1838
  %v1840 = vpop.f32.mrb[0].mxu0
  %v1841 = vadd.f32 %v1583, %v1840
  %v1842 = vpop.f32.mrb[0].mxu0
  %1843 = vmatprep.mubr.f32.mxu0 0.0
  %v1844 = vand.u32 %v113, 4294901760
  %1845 = vmatmul.mubr.f32.gmra.mrb[0].mxu0 %v1844
  %v1846 = vpop.f32.mrb[0].mxu0
  %v1847 = vadd.f32 %v1589, %v1846
  %v1848 = vpop.f32.mrb[0].mxu0
  %1849 = vmatprep.mubr.f32.mxu0 0.0
  %v1850 = vand.u32 %v116, 4294901760
  %1851 = vmatmul.mubr.f32.gmra.mrb[0].mxu0 %v1850
  %v1852 = vpop.f32.mrb[0].mxu0
  %v1853 = vadd.f32 %v1595, %v1852
  %v1854 = vpop.f32.mrb[0].mxu0
  %1855 = vmatprep.mubr.f32.mxu0 0.0
  %v1856 = vand.u32 %v119, 4294901760
  %1857 = vmatmul.mubr.f32.gmra.mrb[0].mxu0 %v1856
  %v1858 = vpop.f32.mrb[0].mxu0
  %v1859 = vadd.f32 %v1601, %v1858
  %v1860 = vpop.f32.mrb[0].mxu0
  %1861 = vmatprep.mubr.f32.mxu0 0.0
  %v1862 = vand.u32 %v122, 4294901760
  %1863 = vmatmul.mubr.f32.gmra.mrb[0].mxu0 %v1862
  %v1864 = vpop.f32.mrb[0].mxu0
  %v1865 = vadd.f32 %v1607, %v1864
  %v1866 = vpop.f32.mrb[0].mxu0
  %1867 = vmatprep.mubr.f32.mxu0 0.0
  %v1868 = vand.u32 %v125, 4294901760
  %1869 = vmatmul.mubr.f32.gmra.mrb[0].mxu0 %v1868
  %v1870 = vpop.f32.mrb[0].mxu0
  %v1871 = vadd.f32 %v1613, %v1870
  %v1872 = vpop.f32.mrb[0].mxu0
  %1873 = vmatprep.mubr.f32.mxu0 0.0
  %v1874 = vand.u32 %v128, 4294901760
  %1875 = vmatmul.mubr.f32.gmra.mrb[0].mxu0 %v1874
  %v1876 = vpop.f32.mrb[0].mxu0
  %v1877 = vadd.f32 %v1619, %v1876
  %v1878 = vpop.f32.mrb[0].mxu0
  %1879 = vmatprep.mubr.f32.mxu0 0.0
  %v1880 = vand.u32 %v131, 4294901760
  %1881 = vmatmul.mubr.f32.gmra.mrb[0].mxu0 %v1880
  %v1882 = vpop.f32.mrb[0].mxu0
  %v1883 = vadd.f32 %v1625, %v1882
  %v1884 = vpop.f32.mrb[0].mxu0
  %1885 = vmatprep.mubr.f32.mxu0 0.0
  %v1886 = vand.u32 %v134, 4294901760
  %1887 = vmatmul.mubr.f32.gmra.mrb[0].mxu0 %v1886
  %v1888 = vpop.f32.mrb[0].mxu0
  %v1889 = vadd.f32 %v1631, %v1888
  %v1890 = vpop.f32.mrb[0].mxu0
  %1891 = vmatprep.mubr.f32.mxu0 0.0
  %v1892 = vand.u32 %v137, 4294901760
  %1893 = vmatmul.mubr.f32.gmra.mrb[0].mxu0 %v1892
  %v1894 = vpop.f32.mrb[0].mxu0
  %v1895 = vadd.f32 %v1637, %v1894
  %v1896 = vpop.f32.mrb[0].mxu0
  %1897 = vmatprep.mubr.f32.mxu0 0.0
  %v1898 = vand.u32 %v140, 4294901760
  %1899 = vmatmul.mubr.f32.gmra.mrb[0].mxu0 %v1898
  %v1900 = vpop.f32.mrb[0].mxu0
  %v1901 = vadd.f32 %v1643, %v1900
  %v1902 = vpop.f32.mrb[0].mxu0
  %1903 = vmatprep.mubr.f32.mxu0 0.0
  %v1904 = vand.u32 %v143, 4294901760
  %1905 = vmatmul.mubr.f32.gmra.mrb[0].mxu0 %v1904
  %v1906 = vpop.f32.mrb[0].mxu0
  %v1907 = vadd.f32 %v1649, %v1906
  %v1908 = vpop.f32.mrb[0].mxu0
  %1909 = vmatprep.mubr.f32.mxu0 0.0
  %v1910 = vand.u32 %v146, 4294901760
  %1911 = vmatmul.mubr.f32.gmra.mrb[0].mxu0 %v1910
  %v1912 = vpop.f32.mrb[0].mxu0
  %v1913 = vadd.f32 %v1655, %v1912
  %v1914 = vpop.f32.mrb[0].mxu0
  %1915 = vmatprep.mubr.f32.mxu0 0.0
  %v1916 = vand.u32 %v149, 4294901760
  %1917 = vmatmul.mubr.f32.gmra.mrb[0].mxu0 %v1916
  %v1918 = vpop.f32.mrb[0].mxu0
  %v1919 = vadd.f32 %v1661, %v1918
  %v1920 = vpop.f32.mrb[0].mxu0
  %1921 = vmatprep.mubr.f32.mxu0 0.0
  %v1922 = vand.u32 %v152, 4294901760
  %1923 = vmatmul.mubr.f32.gmra.mrb[0].mxu0 %v1922
  %v1924 = vpop.f32.mrb[0].mxu0
  %v1925 = vadd.f32 %v1667, %v1924
  %v1926 = vpop.f32.mrb[0].mxu0
  %1927 = vmatprep.mubr.f32.mxu0 0.0
  %v1928 = vand.u32 %v155, 4294901760
  %1929 = vmatmul.mubr.f32.gmra.mrb[0].mxu0 %v1928
  %v1930 = vpop.f32.mrb[0].mxu0
  %v1931 = vadd.f32 %v1673, %v1930
  %v1932 = vpop.f32.mrb[0].mxu0
  %1933 = vmatprep.mubr.f32.mxu0 0.0
  %v1934 = vand.u32 %v158, 4294901760
  %1935 = vmatmul.mubr.f32.gmra.mrb[0].mxu0 %v1934
  %v1936 = vpop.f32.mrb[0].mxu0
  %v1937 = vadd.f32 %v1679, %v1936
  %v1938 = vpop.f32.mrb[0].mxu0
  %1939 = vmatprep.mubr.f32.mxu0 0.0
  %v1940 = vand.u32 %v161, 4294901760
  %1941 = vmatmul.mubr.f32.gmra.mrb[0].mxu0 %v1940
  %v1942 = vpop.f32.mrb[0].mxu0
  %v1943 = vadd.f32 %v1685, %v1942
  %v1944 = vpop.f32.mrb[0].mxu0
  %1945 = vdwg.mxu0
  %v1946 = vmax.f32 %v1757, 0.0
  %v1947 = vmax.f32 %v1763, 0.0
  %v1948 = vmax.f32 %v1769, 0.0
  %v1949 = vmax.f32 %v1775, 0.0
  %v1950 = vmax.f32 %v1781, 0.0
  %v1951 = vmax.f32 %v1787, 0.0
  %v1952 = vmax.f32 %v1793, 0.0
  %v1953 = vmax.f32 %v1799, 0.0
  %v1954 = vmax.f32 %v1805, 0.0
  %v1955 = vmax.f32 %v1811, 0.0
  %v1956 = vmax.f32 %v1817, 0.0
  %v1957 = vmax.f32 %v1823, 0.0
  %v1958 = vmax.f32 %v1829, 0.0
  %v1959 = vmax.f32 %v1835, 0.0
  %v1960 = vmax.f32 %v1841, 0.0
  %v1961 = vmax.f32 %v1847, 0.0
  %v1962 = vmax.f32 %v1853, 0.0
  %v1963 = vmax.f32 %v1859, 0.0
  %v1964 = vmax.f32 %v1865, 0.0
  %v1965 = vmax.f32 %v1871, 0.0
  %v1966 = vmax.f32 %v1877, 0.0
  %v1967 = vmax.f32 %v1883, 0.0
  %v1968 = vmax.f32 %v1889, 0.0
  %v1969 = vmax.f32 %v1895, 0.0
  %v1970 = vmax.f32 %v1901, 0.0
  %v1971 = vmax.f32 %v1907, 0.0
  %v1972 = vmax.f32 %v1913, 0.0
  %v1973 = vmax.f32 %v1919, 0.0
  %v1974 = vmax.f32 %v1925, 0.0
  %v1975 = vmax.f32 %v1931, 0.0
  %v1976 = vmax.f32 %v1937, 0.0
  %v1977 = vmax.f32 %v1943, 0.0
  %v1978 = vld [vmem:[%s3] sm:$0xff]
  %v1979 = vld [vmem:[%s3 + $0x8] sm:$0xff]
  %v1980 = vld [vmem:[%s3 + $0x10] sm:$0xff]
  %v1981 = vld [vmem:[%s3 + $0x18] sm:$0xff]
  %v1982 = vld [vmem:[%s3 + $0x20] sm:$0xff]
  %v1983 = vld [vmem:[%s3 + $0x28] sm:$0xff]
  %v1984 = vld [vmem:[%s3 + $0x30] sm:$0xff]
  %v1985 = vld [vmem:[%s3 + $0x38] sm:$0xff]
  %v1986 = vld [vmem:[%s3 + $0x40] sm:$0xff]
  %v1987 = vld [vmem:[%s3 + $0x48] sm:$0xff]
  %v1988 = vld [vmem:[%s3 + $0x50] sm:$0xff]
  %v1989 = vld [vmem:[%s3 + $0x58] sm:$0xff]
  %v1990 = vld [vmem:[%s3 + $0x60] sm:$0xff]
  %v1991 = vld [vmem:[%s3 + $0x68] sm:$0xff]
  %v1992 = vld [vmem:[%s3 + $0x70] sm:$0xff]
  %v1993 = vld [vmem:[%s3 + $0x78] sm:$0xff]
  %v1994 = vld [vmem:[%s4] sm:$0x1]
  %v1996 = vlaneseq
  %v1997 = vshrl.u32 %v1996, 7
  %v1998 = vsub.s32 0, %v1997
  %v1999 = vrot.slane %v1994, %v1998
  %2001 = vmatprep.subr.mxu0 0.0
  %v2002 = vand.u32 %v1978, 4294901760
  %2003 = vmatpush1.msra.mxu0 %v2002
  %2004 = vmatprep.subr.mxu0 0.0
  %v2005 = vand.u32 %v1979, 4294901760
  %2006 = vmatpush1.msra.mxu0 %v2005
  %2007 = vmatprep.subr.mxu0 0.0
  %v2008 = vand.u32 %v1980, 4294901760
  %2009 = vmatpush1.msra.mxu0 %v2008
  %2010 = vmatprep.subr.mxu0 0.0
  %v2011 = vand.u32 %v1981, 4294901760
  %2012 = vmatpush1.msra.mxu0 %v2011
  %2013 = vmatprep.subr.mxu0 0.0
  %v2014 = vand.u32 %v1982, 4294901760
  %2015 = vmatpush1.msra.mxu0 %v2014
  %2016 = vmatprep.subr.mxu0 0.0
  %v2017 = vand.u32 %v1983, 4294901760
  %2018 = vmatpush1.msra.mxu0 %v2017
  %2019 = vmatprep.subr.mxu0 0.0
  %v2020 = vand.u32 %v1984, 4294901760
  %2021 = vmatpush1.msra.mxu0 %v2020
  %2022 = vmatprep.subr.mxu0 0.0
  %v2023 = vand.u32 %v1985, 4294901760
  %2024 = vmatpush1.msra.mxu0 %v2023
  %2025 = vmatprep.subr.mxu0 0.0
  %v2026 = vand.u32 %v1986, 4294901760
  %2027 = vmatpush1.msra.mxu0 %v2026
  %2028 = vmatprep.subr.mxu0 0.0
  %v2029 = vand.u32 %v1987, 4294901760
  %2030 = vmatpush1.msra.mxu0 %v2029
  %2031 = vmatprep.subr.mxu0 0.0
  %v2032 = vand.u32 %v1988, 4294901760
  %2033 = vmatpush1.msra.mxu0 %v2032
  %2034 = vmatprep.subr.mxu0 0.0
  %v2035 = vand.u32 %v1989, 4294901760
  %2036 = vmatpush1.msra.mxu0 %v2035
  %2037 = vmatprep.subr.mxu0 0.0
  %v2038 = vand.u32 %v1990, 4294901760
  %2039 = vmatpush1.msra.mxu0 %v2038
  %2040 = vmatprep.subr.mxu0 0.0
  %v2041 = vand.u32 %v1991, 4294901760
  %2042 = vmatpush1.msra.mxu0 %v2041
  %2043 = vmatprep.subr.mxu0 0.0
  %v2044 = vand.u32 %v1992, 4294901760
  %2045 = vmatpush1.msra.mxu0 %v2044
  %2046 = vmatprep.subr.mxu0 0.0
  %v2047 = vand.u32 %v1993, 4294901760
  %2048 = vmatpush1.msra.mxu0 %v2047
  %2049 = vmatprep.subr.mxu0 0.0
  %2050 = vmatpush1.msra.mxu0 0.0
  %2051 = vmatprep.subr.mxu0 0.0
  %2052 = vmatpush1.msra.mxu0 0.0
  %2053 = vmatprep.subr.mxu0 0.0
  %2054 = vmatpush1.msra.mxu0 0.0
  %2055 = vmatprep.subr.mxu0 0.0
  %2056 = vmatpush1.msra.mxu0 0.0
  %2057 = vmatprep.subr.mxu0 0.0
  %2058 = vmatpush1.msra.mxu0 0.0
  %2059 = vmatprep.subr.mxu0 0.0
  %2060 = vmatpush1.msra.mxu0 0.0
  %2061 = vmatprep.subr.mxu0 0.0
  %2062 = vmatpush1.msra.mxu0 0.0
  %2063 = vmatprep.subr.mxu0 0.0
  %2064 = vmatpush1.msra.mxu0 0.0
  %2065 = vmatprep.subr.mxu0 0.0
  %2066 = vmatpush1.msra.mxu0 0.0
  %2067 = vmatprep.subr.mxu0 0.0
  %2068 = vmatpush1.msra.mxu0 0.0
  %2069 = vmatprep.subr.mxu0 0.0
  %2070 = vmatpush1.msra.mxu0 0.0
  %2071 = vmatprep.subr.mxu0 0.0
  %2072 = vmatpush1.msra.mxu0 0.0
  %2073 = vmatprep.subr.mxu0 0.0
  %2074 = vmatpush1.msra.mxu0 0.0
  %2075 = vmatprep.subr.mxu0 0.0
  %2076 = vmatpush1.msra.mxu0 0.0
  %2077 = vmatprep.subr.mxu0 0.0
  %2078 = vmatpush1.msra.mxu0 0.0
  %2079 = vmatprep.subr.mxu0 0.0
  %2080 = vmatpush1.msra.mxu0 0.0
  %2081 = vmatprep.mubr.f32.mxu0 0.0
  %v2082 = vand.u32 %v1946, 4294901760
  %v2083 = vsub.f32 %v1946, %v2082
  %v2084 = vand.u32 %v2083, 4294901760
  %v2085 = vsub.f32 %v2083, %v2084
  %v2086 = vand.u32 %v2085, 4294901760
  %2087 = vmatmul.mubr.f32.gmra.mrb[0].mxu0 %v2086
  %v2088 = vpop.f32.mrb[0].mxu0
  %v2089 = vadd.f32 %v1999, %v2088
  %v2090 = vpop.f32.mrb[0].mxu0
  %2091 = vmatprep.mubr.f32.mxu0 0.0
  %v2092 = vand.u32 %v1947, 4294901760
  %v2093 = vsub.f32 %v1947, %v2092
  %v2094 = vand.u32 %v2093, 4294901760
  %v2095 = vsub.f32 %v2093, %v2094
  %v2096 = vand.u32 %v2095, 4294901760
  %2097 = vmatmul.mubr.f32.gmra.mrb[0].mxu0 %v2096
  %v2098 = vpop.f32.mrb[0].mxu0
  %v2099 = vadd.f32 %v1999, %v2098
  %v2100 = vpop.f32.mrb[0].mxu0
  %2101 = vmatprep.mubr.f32.mxu0 0.0
  %v2102 = vand.u32 %v1948, 4294901760
  %v2103 = vsub.f32 %v1948, %v2102
  %v2104 = vand.u32 %v2103, 4294901760
  %v2105 = vsub.f32 %v2103, %v2104
  %v2106 = vand.u32 %v2105, 4294901760
  %2107 = vmatmul.mubr.f32.gmra.mrb[0].mxu0 %v2106
  %v2108 = vpop.f32.mrb[0].mxu0
  %v2109 = vadd.f32 %v1999, %v2108
  %v2110 = vpop.f32.mrb[0].mxu0
  %2111 = vmatprep.mubr.f32.mxu0 0.0
  %v2112 = vand.u32 %v1949, 4294901760
  %v2113 = vsub.f32 %v1949, %v2112
  %v2114 = vand.u32 %v2113, 4294901760
  %v2115 = vsub.f32 %v2113, %v2114
  %v2116 = vand.u32 %v2115, 4294901760
  %2117 = vmatmul.mubr.f32.gmra.mrb[0].mxu0 %v2116
  %v2118 = vpop.f32.mrb[0].mxu0
  %v2119 = vadd.f32 %v1999, %v2118
  %v2120 = vpop.f32.mrb[0].mxu0
  %2121 = vmatprep.mubr.f32.mxu0 0.0
  %v2122 = vand.u32 %v1950, 4294901760
  %v2123 = vsub.f32 %v1950, %v2122
  %v2124 = vand.u32 %v2123, 4294901760
  %v2125 = vsub.f32 %v2123, %v2124
  %v2126 = vand.u32 %v2125, 4294901760
  %2127 = vmatmul.mubr.f32.gmra.mrb[0].mxu0 %v2126
  %v2128 = vpop.f32.mrb[0].mxu0
  %v2129 = vadd.f32 %v1999, %v2128
  %v2130 = vpop.f32.mrb[0].mxu0
  %2131 = vmatprep.mubr.f32.mxu0 0.0
  %v2132 = vand.u32 %v1951, 4294901760
  %v2133 = vsub.f32 %v1951, %v2132
  %v2134 = vand.u32 %v2133, 4294901760
  %v2135 = vsub.f32 %v2133, %v2134
  %v2136 = vand.u32 %v2135, 4294901760
  %2137 = vmatmul.mubr.f32.gmra.mrb[0].mxu0 %v2136
  %v2138 = vpop.f32.mrb[0].mxu0
  %v2139 = vadd.f32 %v1999, %v2138
  %v2140 = vpop.f32.mrb[0].mxu0
  %2141 = vmatprep.mubr.f32.mxu0 0.0
  %v2142 = vand.u32 %v1952, 4294901760
  %v2143 = vsub.f32 %v1952, %v2142
  %v2144 = vand.u32 %v2143, 4294901760
  %v2145 = vsub.f32 %v2143, %v2144
  %v2146 = vand.u32 %v2145, 4294901760
  %2147 = vmatmul.mubr.f32.gmra.mrb[0].mxu0 %v2146
  %v2148 = vpop.f32.mrb[0].mxu0
  %v2149 = vadd.f32 %v1999, %v2148
  %v2150 = vpop.f32.mrb[0].mxu0
  %2151 = vmatprep.mubr.f32.mxu0 0.0
  %v2152 = vand.u32 %v1953, 4294901760
  %v2153 = vsub.f32 %v1953, %v2152
  %v2154 = vand.u32 %v2153, 4294901760
  %v2155 = vsub.f32 %v2153, %v2154
  %v2156 = vand.u32 %v2155, 4294901760
  %2157 = vmatmul.mubr.f32.gmra.mrb[0].mxu0 %v2156
  %v2158 = vpop.f32.mrb[0].mxu0
  %v2159 = vadd.f32 %v1999, %v2158
  %v2160 = vpop.f32.mrb[0].mxu0
  %2161 = vmatprep.mubr.f32.mxu0 0.0
  %v2162 = vand.u32 %v1954, 4294901760
  %v2163 = vsub.f32 %v1954, %v2162
  %v2164 = vand.u32 %v2163, 4294901760
  %v2165 = vsub.f32 %v2163, %v2164
  %v2166 = vand.u32 %v2165, 4294901760
  %2167 = vmatmul.mubr.f32.gmra.mrb[0].mxu0 %v2166
  %v2168 = vpop.f32.mrb[0].mxu0
  %v2169 = vadd.f32 %v1999, %v2168
  %v2170 = vpop.f32.mrb[0].mxu0
  %2171 = vmatprep.mubr.f32.mxu0 0.0
  %v2172 = vand.u32 %v1955, 4294901760
  %v2173 = vsub.f32 %v1955, %v2172
  %v2174 = vand.u32 %v2173, 4294901760
  %v2175 = vsub.f32 %v2173, %v2174
  %v2176 = vand.u32 %v2175, 4294901760
  %2177 = vmatmul.mubr.f32.gmra.mrb[0].mxu0 %v2176
  %v2178 = vpop.f32.mrb[0].mxu0
  %v2179 = vadd.f32 %v1999, %v2178
  %v2180 = vpop.f32.mrb[0].mxu0
  %2181 = vmatprep.mubr.f32.mxu0 0.0
  %v2182 = vand.u32 %v1956, 4294901760
  %v2183 = vsub.f32 %v1956, %v2182
  %v2184 = vand.u32 %v2183, 4294901760
  %v2185 = vsub.f32 %v2183, %v2184
  %v2186 = vand.u32 %v2185, 4294901760
  %2187 = vmatmul.mubr.f32.gmra.mrb[0].mxu0 %v2186
  %v2188 = vpop.f32.mrb[0].mxu0
  %v2189 = vadd.f32 %v1999, %v2188
  %v2190 = vpop.f32.mrb[0].mxu0
  %2191 = vmatprep.mubr.f32.mxu0 0.0
  %v2192 = vand.u32 %v1957, 4294901760
  %v2193 = vsub.f32 %v1957, %v2192
  %v2194 = vand.u32 %v2193, 4294901760
  %v2195 = vsub.f32 %v2193, %v2194
  %v2196 = vand.u32 %v2195, 4294901760
  %2197 = vmatmul.mubr.f32.gmra.mrb[0].mxu0 %v2196
  %v2198 = vpop.f32.mrb[0].mxu0
  %v2199 = vadd.f32 %v1999, %v2198
  %v2200 = vpop.f32.mrb[0].mxu0
  %2201 = vmatprep.mubr.f32.mxu0 0.0
  %v2202 = vand.u32 %v1958, 4294901760
  %v2203 = vsub.f32 %v1958, %v2202
  %v2204 = vand.u32 %v2203, 4294901760
  %v2205 = vsub.f32 %v2203, %v2204
  %v2206 = vand.u32 %v2205, 4294901760
  %2207 = vmatmul.mubr.f32.gmra.mrb[0].mxu0 %v2206
  %v2208 = vpop.f32.mrb[0].mxu0
  %v2209 = vadd.f32 %v1999, %v2208
  %v2210 = vpop.f32.mrb[0].mxu0
  %2211 = vmatprep.mubr.f32.mxu0 0.0
  %v2212 = vand.u32 %v1959, 4294901760
  %v2213 = vsub.f32 %v1959, %v2212
  %v2214 = vand.u32 %v2213, 4294901760
  %v2215 = vsub.f32 %v2213, %v2214
  %v2216 = vand.u32 %v2215, 4294901760
  %2217 = vmatmul.mubr.f32.gmra.mrb[0].mxu0 %v2216
  %v2218 = vpop.f32.mrb[0].mxu0
  %v2219 = vadd.f32 %v1999, %v2218
  %v2220 = vpop.f32.mrb[0].mxu0
  %2221 = vmatprep.mubr.f32.mxu0 0.0
  %v2222 = vand.u32 %v1960, 4294901760
  %v2223 = vsub.f32 %v1960, %v2222
  %v2224 = vand.u32 %v2223, 4294901760
  %v2225 = vsub.f32 %v2223, %v2224
  %v2226 = vand.u32 %v2225, 4294901760
  %2227 = vmatmul.mubr.f32.gmra.mrb[0].mxu0 %v2226
  %v2228 = vpop.f32.mrb[0].mxu0
  %v2229 = vadd.f32 %v1999, %v2228
  %v2230 = vpop.f32.mrb[0].mxu0
  %2231 = vmatprep.mubr.f32.mxu0 0.0
  %v2232 = vand.u32 %v1961, 4294901760
  %v2233 = vsub.f32 %v1961, %v2232
  %v2234 = vand.u32 %v2233, 4294901760
  %v2235 = vsub.f32 %v2233, %v2234
  %v2236 = vand.u32 %v2235, 4294901760
  %2237 = vmatmul.mubr.f32.gmra.mrb[0].mxu0 %v2236
  %v2238 = vpop.f32.mrb[0].mxu0
  %v2239 = vadd.f32 %v1999, %v2238
  %v2240 = vpop.f32.mrb[0].mxu0
  %2241 = vmatprep.mubr.f32.mxu0 0.0
  %v2242 = vand.u32 %v1962, 4294901760
  %v2243 = vsub.f32 %v1962, %v2242
  %v2244 = vand.u32 %v2243, 4294901760
  %v2245 = vsub.f32 %v2243, %v2244
  %v2246 = vand.u32 %v2245, 4294901760
  %2247 = vmatmul.mubr.f32.gmra.mrb[0].mxu0 %v2246
  %v2248 = vpop.f32.mrb[0].mxu0
  %v2249 = vadd.f32 %v1999, %v2248
  %v2250 = vpop.f32.mrb[0].mxu0
  %2251 = vmatprep.mubr.f32.mxu0 0.0
  %v2252 = vand.u32 %v1963, 4294901760
  %v2253 = vsub.f32 %v1963, %v2252
  %v2254 = vand.u32 %v2253, 4294901760
  %v2255 = vsub.f32 %v2253, %v2254
  %v2256 = vand.u32 %v2255, 4294901760
  %2257 = vmatmul.mubr.f32.gmra.mrb[0].mxu0 %v2256
  %v2258 = vpop.f32.mrb[0].mxu0
  %v2259 = vadd.f32 %v1999, %v2258
  %v2260 = vpop.f32.mrb[0].mxu0
  %2261 = vmatprep.mubr.f32.mxu0 0.0
  %v2262 = vand.u32 %v1964, 4294901760
  %v2263 = vsub.f32 %v1964, %v2262
  %v2264 = vand.u32 %v2263, 4294901760
  %v2265 = vsub.f32 %v2263, %v2264
  %v2266 = vand.u32 %v2265, 4294901760
  %2267 = vmatmul.mubr.f32.gmra.mrb[0].mxu0 %v2266
  %v2268 = vpop.f32.mrb[0].mxu0
  %v2269 = vadd.f32 %v1999, %v2268
  %v2270 = vpop.f32.mrb[0].mxu0
  %2271 = vmatprep.mubr.f32.mxu0 0.0
  %v2272 = vand.u32 %v1965, 4294901760
  %v2273 = vsub.f32 %v1965, %v2272
  %v2274 = vand.u32 %v2273, 4294901760
  %v2275 = vsub.f32 %v2273, %v2274
  %v2276 = vand.u32 %v2275, 4294901760
  %2277 = vmatmul.mubr.f32.gmra.mrb[0].mxu0 %v2276
  %v2278 = vpop.f32.mrb[0].mxu0
  %v2279 = vadd.f32 %v1999, %v2278
  %v2280 = vpop.f32.mrb[0].mxu0
  %2281 = vmatprep.mubr.f32.mxu0 0.0
  %v2282 = vand.u32 %v1966, 4294901760
  %v2283 = vsub.f32 %v1966, %v2282
  %v2284 = vand.u32 %v2283, 4294901760
  %v2285 = vsub.f32 %v2283, %v2284
  %v2286 = vand.u32 %v2285, 4294901760
  %2287 = vmatmul.mubr.f32.gmra.mrb[0].mxu0 %v2286
  %v2288 = vpop.f32.mrb[0].mxu0
  %v2289 = vadd.f32 %v1999, %v2288
  %v2290 = vpop.f32.mrb[0].mxu0
  %2291 = vmatprep.mubr.f32.mxu0 0.0
  %v2292 = vand.u32 %v1967, 4294901760
  %v2293 = vsub.f32 %v1967, %v2292
  %v2294 = vand.u32 %v2293, 4294901760
  %v2295 = vsub.f32 %v2293, %v2294
  %v2296 = vand.u32 %v2295, 4294901760
  %2297 = vmatmul.mubr.f32.gmra.mrb[0].mxu0 %v2296
  %v2298 = vpop.f32.mrb[0].mxu0
  %v2299 = vadd.f32 %v1999, %v2298
  %v2300 = vpop.f32.mrb[0].mxu0
  %2301 = vmatprep.mubr.f32.mxu0 0.0
  %v2302 = vand.u32 %v1968, 4294901760
  %v2303 = vsub.f32 %v1968, %v2302
  %v2304 = vand.u32 %v2303, 4294901760
  %v2305 = vsub.f32 %v2303, %v2304
  %v2306 = vand.u32 %v2305, 4294901760
  %2307 = vmatmul.mubr.f32.gmra.mrb[0].mxu0 %v2306
  %v2308 = vpop.f32.mrb[0].mxu0
  %v2309 = vadd.f32 %v1999, %v2308
  %v2310 = vpop.f32.mrb[0].mxu0
  %2311 = vmatprep.mubr.f32.mxu0 0.0
  %v2312 = vand.u32 %v1969, 4294901760
  %v2313 = vsub.f32 %v1969, %v2312
  %v2314 = vand.u32 %v2313, 4294901760
  %v2315 = vsub.f32 %v2313, %v2314
  %v2316 = vand.u32 %v2315, 4294901760
  %2317 = vmatmul.mubr.f32.gmra.mrb[0].mxu0 %v2316
  %v2318 = vpop.f32.mrb[0].mxu0
  %v2319 = vadd.f32 %v1999, %v2318
  %v2320 = vpop.f32.mrb[0].mxu0
  %2321 = vmatprep.mubr.f32.mxu0 0.0
  %v2322 = vand.u32 %v1970, 4294901760
  %v2323 = vsub.f32 %v1970, %v2322
  %v2324 = vand.u32 %v2323, 4294901760
  %v2325 = vsub.f32 %v2323, %v2324
  %v2326 = vand.u32 %v2325, 4294901760
  %2327 = vmatmul.mubr.f32.gmra.mrb[0].mxu0 %v2326
  %v2328 = vpop.f32.mrb[0].mxu0
  %v2329 = vadd.f32 %v1999, %v2328
  %v2330 = vpop.f32.mrb[0].mxu0
  %2331 = vmatprep.mubr.f32.mxu0 0.0
  %v2332 = vand.u32 %v1971, 4294901760
  %v2333 = vsub.f32 %v1971, %v2332
  %v2334 = vand.u32 %v2333, 4294901760
  %v2335 = vsub.f32 %v2333, %v2334
  %v2336 = vand.u32 %v2335, 4294901760
  %2337 = vmatmul.mubr.f32.gmra.mrb[0].mxu0 %v2336
  %v2338 = vpop.f32.mrb[0].mxu0
  %v2339 = vadd.f32 %v1999, %v2338
  %v2340 = vpop.f32.mrb[0].mxu0
  %2341 = vmatprep.mubr.f32.mxu0 0.0
  %v2342 = vand.u32 %v1972, 4294901760
  %v2343 = vsub.f32 %v1972, %v2342
  %v2344 = vand.u32 %v2343, 4294901760
  %v2345 = vsub.f32 %v2343, %v2344
  %v2346 = vand.u32 %v2345, 4294901760
  %2347 = vmatmul.mubr.f32.gmra.mrb[0].mxu0 %v2346
  %v2348 = vpop.f32.mrb[0].mxu0
  %v2349 = vadd.f32 %v1999, %v2348
  %v2350 = vpop.f32.mrb[0].mxu0
  %2351 = vmatprep.mubr.f32.mxu0 0.0
  %v2352 = vand.u32 %v1973, 4294901760
  %v2353 = vsub.f32 %v1973, %v2352
  %v2354 = vand.u32 %v2353, 4294901760
  %v2355 = vsub.f32 %v2353, %v2354
  %v2356 = vand.u32 %v2355, 4294901760
  %2357 = vmatmul.mubr.f32.gmra.mrb[0].mxu0 %v2356
  %v2358 = vpop.f32.mrb[0].mxu0
  %v2359 = vadd.f32 %v1999, %v2358
  %v2360 = vpop.f32.mrb[0].mxu0
  %2361 = vmatprep.mubr.f32.mxu0 0.0
  %v2362 = vand.u32 %v1974, 4294901760
  %v2363 = vsub.f32 %v1974, %v2362
  %v2364 = vand.u32 %v2363, 4294901760
  %v2365 = vsub.f32 %v2363, %v2364
  %v2366 = vand.u32 %v2365, 4294901760
  %2367 = vmatmul.mubr.f32.gmra.mrb[0].mxu0 %v2366
  %v2368 = vpop.f32.mrb[0].mxu0
  %v2369 = vadd.f32 %v1999, %v2368
  %v2370 = vpop.f32.mrb[0].mxu0
  %2371 = vmatprep.mubr.f32.mxu0 0.0
  %v2372 = vand.u32 %v1975, 4294901760
  %v2373 = vsub.f32 %v1975, %v2372
  %v2374 = vand.u32 %v2373, 4294901760
  %v2375 = vsub.f32 %v2373, %v2374
  %v2376 = vand.u32 %v2375, 4294901760
  %2377 = vmatmul.mubr.f32.gmra.mrb[0].mxu0 %v2376
  %v2378 = vpop.f32.mrb[0].mxu0
  %v2379 = vadd.f32 %v1999, %v2378
  %v2380 = vpop.f32.mrb[0].mxu0
  %2381 = vmatprep.mubr.f32.mxu0 0.0
  %v2382 = vand.u32 %v1976, 4294901760
  %v2383 = vsub.f32 %v1976, %v2382
  %v2384 = vand.u32 %v2383, 4294901760
  %v2385 = vsub.f32 %v2383, %v2384
  %v2386 = vand.u32 %v2385, 4294901760
  %2387 = vmatmul.mubr.f32.gmra.mrb[0].mxu0 %v2386
  %v2388 = vpop.f32.mrb[0].mxu0
  %v2389 = vadd.f32 %v1999, %v2388
  %v2390 = vpop.f32.mrb[0].mxu0
  %2391 = vmatprep.mubr.f32.mxu0 0.0
  %v2392 = vand.u32 %v1977, 4294901760
  %v2393 = vsub.f32 %v1977, %v2392
  %v2394 = vand.u32 %v2393, 4294901760
  %v2395 = vsub.f32 %v2393, %v2394
  %v2396 = vand.u32 %v2395, 4294901760
  %2397 = vmatmul.mubr.f32.gmra.mrb[0].mxu0 %v2396
  %v2398 = vpop.f32.mrb[0].mxu0
  %v2399 = vadd.f32 %v1999, %v2398
  %v2400 = vpop.f32.mrb[0].mxu0
  %2401 = vdwg.mxu0
  %2402 = vmatprep.subr.mxu0 0.0
  %v2403 = vand.u32 %v1978, 4294901760
  %v2404 = vsub.f32 %v1978, %v2403
  %v2405 = vand.u32 %v2404, 4294901760
  %v2406 = vsub.f32 %v2404, %v2405
  %v2407 = vand.u32 %v2406, 4294901760
  %2408 = vmatpush1.msra.mxu0 %v2407
  %2409 = vmatprep.subr.mxu0 0.0
  %v2410 = vand.u32 %v1979, 4294901760
  %v2411 = vsub.f32 %v1979, %v2410
  %v2412 = vand.u32 %v2411, 4294901760
  %v2413 = vsub.f32 %v2411, %v2412
  %v2414 = vand.u32 %v2413, 4294901760
  %2415 = vmatpush1.msra.mxu0 %v2414
  %2416 = vmatprep.subr.mxu0 0.0
  %v2417 = vand.u32 %v1980, 4294901760
  %v2418 = vsub.f32 %v1980, %v2417
  %v2419 = vand.u32 %v2418, 4294901760
  %v2420 = vsub.f32 %v2418, %v2419
  %v2421 = vand.u32 %v2420, 4294901760
  %2422 = vmatpush1.msra.mxu0 %v2421
  %2423 = vmatprep.subr.mxu0 0.0
  %v2424 = vand.u32 %v1981, 4294901760
  %v2425 = vsub.f32 %v1981, %v2424
  %v2426 = vand.u32 %v2425, 4294901760
  %v2427 = vsub.f32 %v2425, %v2426
  %v2428 = vand.u32 %v2427, 4294901760
  %2429 = vmatpush1.msra.mxu0 %v2428
  %2430 = vmatprep.subr.mxu0 0.0
  %v2431 = vand.u32 %v1982, 4294901760
  %v2432 = vsub.f32 %v1982, %v2431
  %v2433 = vand.u32 %v2432, 4294901760
  %v2434 = vsub.f32 %v2432, %v2433
  %v2435 = vand.u32 %v2434, 4294901760
  %2436 = vmatpush1.msra.mxu0 %v2435
  %2437 = vmatprep.subr.mxu0 0.0
  %v2438 = vand.u32 %v1983, 4294901760
  %v2439 = vsub.f32 %v1983, %v2438
  %v2440 = vand.u32 %v2439, 4294901760
  %v2441 = vsub.f32 %v2439, %v2440
  %v2442 = vand.u32 %v2441, 4294901760
  %2443 = vmatpush1.msra.mxu0 %v2442
  %2444 = vmatprep.subr.mxu0 0.0
  %v2445 = vand.u32 %v1984, 4294901760
  %v2446 = vsub.f32 %v1984, %v2445
  %v2447 = vand.u32 %v2446, 4294901760
  %v2448 = vsub.f32 %v2446, %v2447
  %v2449 = vand.u32 %v2448, 4294901760
  %2450 = vmatpush1.msra.mxu0 %v2449
  %2451 = vmatprep.subr.mxu0 0.0
  %v2452 = vand.u32 %v1985, 4294901760
  %v2453 = vsub.f32 %v1985, %v2452
  %v2454 = vand.u32 %v2453, 4294901760
  %v2455 = vsub.f32 %v2453, %v2454
  %v2456 = vand.u32 %v2455, 4294901760
  %2457 = vmatpush1.msra.mxu0 %v2456
  %2458 = vmatprep.subr.mxu0 0.0
  %v2459 = vand.u32 %v1986, 4294901760
  %v2460 = vsub.f32 %v1986, %v2459
  %v2461 = vand.u32 %v2460, 4294901760
  %v2462 = vsub.f32 %v2460, %v2461
  %v2463 = vand.u32 %v2462, 4294901760
  %2464 = vmatpush1.msra.mxu0 %v2463
  %2465 = vmatprep.subr.mxu0 0.0
  %v2466 = vand.u32 %v1987, 4294901760
  %v2467 = vsub.f32 %v1987, %v2466
  %v2468 = vand.u32 %v2467, 4294901760
  %v2469 = vsub.f32 %v2467, %v2468
  %v2470 = vand.u32 %v2469, 4294901760
  %2471 = vmatpush1.msra.mxu0 %v2470
  %2472 = vmatprep.subr.mxu0 0.0
  %v2473 = vand.u32 %v1988, 4294901760
  %v2474 = vsub.f32 %v1988, %v2473
  %v2475 = vand.u32 %v2474, 4294901760
  %v2476 = vsub.f32 %v2474, %v2475
  %v2477 = vand.u32 %v2476, 4294901760
  %2478 = vmatpush1.msra.mxu0 %v2477
  %2479 = vmatprep.subr.mxu0 0.0
  %v2480 = vand.u32 %v1989, 4294901760
  %v2481 = vsub.f32 %v1989, %v2480
  %v2482 = vand.u32 %v2481, 4294901760
  %v2483 = vsub.f32 %v2481, %v2482
  %v2484 = vand.u32 %v2483, 4294901760
  %2485 = vmatpush1.msra.mxu0 %v2484
  %2486 = vmatprep.subr.mxu0 0.0
  %v2487 = vand.u32 %v1990, 4294901760
  %v2488 = vsub.f32 %v1990, %v2487
  %v2489 = vand.u32 %v2488, 4294901760
  %v2490 = vsub.f32 %v2488, %v2489
  %v2491 = vand.u32 %v2490, 4294901760
  %2492 = vmatpush1.msra.mxu0 %v2491
  %2493 = vmatprep.subr.mxu0 0.0
  %v2494 = vand.u32 %v1991, 4294901760
  %v2495 = vsub.f32 %v1991, %v2494
  %v2496 = vand.u32 %v2495, 4294901760
  %v2497 = vsub.f32 %v2495, %v2496
  %v2498 = vand.u32 %v2497, 4294901760
  %2499 = vmatpush1.msra.mxu0 %v2498
  %2500 = vmatprep.subr.mxu0 0.0
  %v2501 = vand.u32 %v1992, 4294901760
  %v2502 = vsub.f32 %v1992, %v2501
  %v2503 = vand.u32 %v2502, 4294901760
  %v2504 = vsub.f32 %v2502, %v2503
  %v2505 = vand.u32 %v2504, 4294901760
  %2506 = vmatpush1.msra.mxu0 %v2505
  %2507 = vmatprep.subr.mxu0 0.0
  %v2508 = vand.u32 %v1993, 4294901760
  %v2509 = vsub.f32 %v1993, %v2508
  %v2510 = vand.u32 %v2509, 4294901760
  %v2511 = vsub.f32 %v2509, %v2510
  %v2512 = vand.u32 %v2511, 4294901760
  %2513 = vmatpush1.msra.mxu0 %v2512
  %2514 = vmatprep.subr.mxu0 0.0
  %2515 = vmatpush1.msra.mxu0 0.0
  %2516 = vmatprep.subr.mxu0 0.0
  %2517 = vmatpush1.msra.mxu0 0.0
  %2518 = vmatprep.subr.mxu0 0.0
  %2519 = vmatpush1.msra.mxu0 0.0
  %2520 = vmatprep.subr.mxu0 0.0
  %2521 = vmatpush1.msra.mxu0 0.0
  %2522 = vmatprep.subr.mxu0 0.0
  %2523 = vmatpush1.msra.mxu0 0.0
  %2524 = vmatprep.subr.mxu0 0.0
  %2525 = vmatpush1.msra.mxu0 0.0
  %2526 = vmatprep.subr.mxu0 0.0
  %2527 = vmatpush1.msra.mxu0 0.0
  %2528 = vmatprep.subr.mxu0 0.0
  %2529 = vmatpush1.msra.mxu0 0.0
  %2530 = vmatprep.subr.mxu0 0.0
  %2531 = vmatpush1.msra.mxu0 0.0
  %2532 = vmatprep.subr.mxu0 0.0
  %2533 = vmatpush1.msra.mxu0 0.0
  %2534 = vmatprep.subr.mxu0 0.0
  %2535 = vmatpush1.msra.mxu0 0.0
  %2536 = vmatprep.subr.mxu0 0.0
  %2537 = vmatpush1.msra.mxu0 0.0
  %2538 = vmatprep.subr.mxu0 0.0
  %2539 = vmatpush1.msra.mxu0 0.0
  %2540 = vmatprep.subr.mxu0 0.0
  %2541 = vmatpush1.msra.mxu0 0.0
  %2542 = vmatprep.subr.mxu0 0.0
  %2543 = vmatpush1.msra.mxu0 0.0
  %2544 = vmatprep.subr.mxu0 0.0
  %2545 = vmatpush1.msra.mxu0 0.0
  %2546 = vmatprep.mubr.f32.mxu0 0.0
  %v2547 = vand.u32 %v1946, 4294901760
  %2548 = vmatmul.mubr.f32.gmra.mrb[0].mxu0 %v2547
  %v2549 = vpop.f32.mrb[0].mxu0
  %v2550 = vadd.f32 %v2089, %v2549
  %v2551 = vpop.f32.mrb[0].mxu0
  %2552 = vmatprep.mubr.f32.mxu0 0.0
  %v2553 = vand.u32 %v1947, 4294901760
  %2554 = vmatmul.mubr.f32.gmra.mrb[0].mxu0 %v2553
  %v2555 = vpop.f32.mrb[0].mxu0
  %v2556 = vadd.f32 %v2099, %v2555
  %v2557 = vpop.f32.mrb[0].mxu0
  %2558 = vmatprep.mubr.f32.mxu0 0.0
  %v2559 = vand.u32 %v1948, 4294901760
  %2560 = vmatmul.mubr.f32.gmra.mrb[0].mxu0 %v2559
  %v2561 = vpop.f32.mrb[0].mxu0
  %v2562 = vadd.f32 %v2109, %v2561
  %v2563 = vpop.f32.mrb[0].mxu0
  %2564 = vmatprep.mubr.f32.mxu0 0.0
  %v2565 = vand.u32 %v1949, 4294901760
  %2566 = vmatmul.mubr.f32.gmra.mrb[0].mxu0 %v2565
  %v2567 = vpop.f32.mrb[0].mxu0
  %v2568 = vadd.f32 %v2119, %v2567
  %v2569 = vpop.f32.mrb[0].mxu0
  %2570 = vmatprep.mubr.f32.mxu0 0.0
  %v2571 = vand.u32 %v1950, 4294901760
  %2572 = vmatmul.mubr.f32.gmra.mrb[0].mxu0 %v2571
  %v2573 = vpop.f32.mrb[0].mxu0
  %v2574 = vadd.f32 %v2129, %v2573
  %v2575 = vpop.f32.mrb[0].mxu0
  %2576 = vmatprep.mubr.f32.mxu0 0.0
  %v2577 = vand.u32 %v1951, 4294901760
  %2578 = vmatmul.mubr.f32.gmra.mrb[0].mxu0 %v2577
  %v2579 = vpop.f32.mrb[0].mxu0
  %v2580 = vadd.f32 %v2139, %v2579
  %v2581 = vpop.f32.mrb[0].mxu0
  %2582 = vmatprep.mubr.f32.mxu0 0.0
  %v2583 = vand.u32 %v1952, 4294901760
  %2584 = vmatmul.mubr.f32.gmra.mrb[0].mxu0 %v2583
  %v2585 = vpop.f32.mrb[0].mxu0
  %v2586 = vadd.f32 %v2149, %v2585
  %v2587 = vpop.f32.mrb[0].mxu0
  %2588 = vmatprep.mubr.f32.mxu0 0.0
  %v2589 = vand.u32 %v1953, 4294901760
  %2590 = vmatmul.mubr.f32.gmra.mrb[0].mxu0 %v2589
  %v2591 = vpop.f32.mrb[0].mxu0
  %v2592 = vadd.f32 %v2159, %v2591
  %v2593 = vpop.f32.mrb[0].mxu0
  %2594 = vmatprep.mubr.f32.mxu0 0.0
  %v2595 = vand.u32 %v1954, 4294901760
  %2596 = vmatmul.mubr.f32.gmra.mrb[0].mxu0 %v2595
  %v2597 = vpop.f32.mrb[0].mxu0
  %v2598 = vadd.f32 %v2169, %v2597
  %v2599 = vpop.f32.mrb[0].mxu0
  %2600 = vmatprep.mubr.f32.mxu0 0.0
  %v2601 = vand.u32 %v1955, 4294901760
  %2602 = vmatmul.mubr.f32.gmra.mrb[0].mxu0 %v2601
  %v2603 = vpop.f32.mrb[0].mxu0
  %v2604 = vadd.f32 %v2179, %v2603
  %v2605 = vpop.f32.mrb[0].mxu0
  %2606 = vmatprep.mubr.f32.mxu0 0.0
  %v2607 = vand.u32 %v1956, 4294901760
  %2608 = vmatmul.mubr.f32.gmra.mrb[0].mxu0 %v2607
  %v2609 = vpop.f32.mrb[0].mxu0
  %v2610 = vadd.f32 %v2189, %v2609
  %v2611 = vpop.f32.mrb[0].mxu0
  %2612 = vmatprep.mubr.f32.mxu0 0.0
  %v2613 = vand.u32 %v1957, 4294901760
  %2614 = vmatmul.mubr.f32.gmra.mrb[0].mxu0 %v2613
  %v2615 = vpop.f32.mrb[0].mxu0
  %v2616 = vadd.f32 %v2199, %v2615
  %v2617 = vpop.f32.mrb[0].mxu0
  %2618 = vmatprep.mubr.f32.mxu0 0.0
  %v2619 = vand.u32 %v1958, 4294901760
  %2620 = vmatmul.mubr.f32.gmra.mrb[0].mxu0 %v2619
  %v2621 = vpop.f32.mrb[0].mxu0
  %v2622 = vadd.f32 %v2209, %v2621
  %v2623 = vpop.f32.mrb[0].mxu0
  %2624 = vmatprep.mubr.f32.mxu0 0.0
  %v2625 = vand.u32 %v1959, 4294901760
  %2626 = vmatmul.mubr.f32.gmra.mrb[0].mxu0 %v2625
  %v2627 = vpop.f32.mrb[0].mxu0
  %v2628 = vadd.f32 %v2219, %v2627
  %v2629 = vpop.f32.mrb[0].mxu0
  %2630 = vmatprep.mubr.f32.mxu0 0.0
  %v2631 = vand.u32 %v1960, 4294901760
  %2632 = vmatmul.mubr.f32.gmra.mrb[0].mxu0 %v2631
  %v2633 = vpop.f32.mrb[0].mxu0
  %v2634 = vadd.f32 %v2229, %v2633
  %v2635 = vpop.f32.mrb[0].mxu0
  %2636 = vmatprep.mubr.f32.mxu0 0.0
  %v2637 = vand.u32 %v1961, 4294901760
  %2638 = vmatmul.mubr.f32.gmra.mrb[0].mxu0 %v2637
  %v2639 = vpop.f32.mrb[0].mxu0
  %v2640 = vadd.f32 %v2239, %v2639
  %v2641 = vpop.f32.mrb[0].mxu0
  %2642 = vmatprep.mubr.f32.mxu0 0.0
  %v2643 = vand.u32 %v1962, 4294901760
  %2644 = vmatmul.mubr.f32.gmra.mrb[0].mxu0 %v2643
  %v2645 = vpop.f32.mrb[0].mxu0
  %v2646 = vadd.f32 %v2249, %v2645
  %v2647 = vpop.f32.mrb[0].mxu0
  %2648 = vmatprep.mubr.f32.mxu0 0.0
  %v2649 = vand.u32 %v1963, 4294901760
  %2650 = vmatmul.mubr.f32.gmra.mrb[0].mxu0 %v2649
  %v2651 = vpop.f32.mrb[0].mxu0
  %v2652 = vadd.f32 %v2259, %v2651
  %v2653 = vpop.f32.mrb[0].mxu0
  %2654 = vmatprep.mubr.f32.mxu0 0.0
  %v2655 = vand.u32 %v1964, 4294901760
  %2656 = vmatmul.mubr.f32.gmra.mrb[0].mxu0 %v2655
  %v2657 = vpop.f32.mrb[0].mxu0
  %v2658 = vadd.f32 %v2269, %v2657
  %v2659 = vpop.f32.mrb[0].mxu0
  %2660 = vmatprep.mubr.f32.mxu0 0.0
  %v2661 = vand.u32 %v1965, 4294901760
  %2662 = vmatmul.mubr.f32.gmra.mrb[0].mxu0 %v2661
  %v2663 = vpop.f32.mrb[0].mxu0
  %v2664 = vadd.f32 %v2279, %v2663
  %v2665 = vpop.f32.mrb[0].mxu0
  %2666 = vmatprep.mubr.f32.mxu0 0.0
  %v2667 = vand.u32 %v1966, 4294901760
  %2668 = vmatmul.mubr.f32.gmra.mrb[0].mxu0 %v2667
  %v2669 = vpop.f32.mrb[0].mxu0
  %v2670 = vadd.f32 %v2289, %v2669
  %v2671 = vpop.f32.mrb[0].mxu0
  %2672 = vmatprep.mubr.f32.mxu0 0.0
  %v2673 = vand.u32 %v1967, 4294901760
  %2674 = vmatmul.mubr.f32.gmra.mrb[0].mxu0 %v2673
  %v2675 = vpop.f32.mrb[0].mxu0
  %v2676 = vadd.f32 %v2299, %v2675
  %v2677 = vpop.f32.mrb[0].mxu0
  %2678 = vmatprep.mubr.f32.mxu0 0.0
  %v2679 = vand.u32 %v1968, 4294901760
  %2680 = vmatmul.mubr.f32.gmra.mrb[0].mxu0 %v2679
  %v2681 = vpop.f32.mrb[0].mxu0
  %v2682 = vadd.f32 %v2309, %v2681
  %v2683 = vpop.f32.mrb[0].mxu0
  %2684 = vmatprep.mubr.f32.mxu0 0.0
  %v2685 = vand.u32 %v1969, 4294901760
  %2686 = vmatmul.mubr.f32.gmra.mrb[0].mxu0 %v2685
  %v2687 = vpop.f32.mrb[0].mxu0
  %v2688 = vadd.f32 %v2319, %v2687
  %v2689 = vpop.f32.mrb[0].mxu0
  %2690 = vmatprep.mubr.f32.mxu0 0.0
  %v2691 = vand.u32 %v1970, 4294901760
  %2692 = vmatmul.mubr.f32.gmra.mrb[0].mxu0 %v2691
  %v2693 = vpop.f32.mrb[0].mxu0
  %v2694 = vadd.f32 %v2329, %v2693
  %v2695 = vpop.f32.mrb[0].mxu0
  %2696 = vmatprep.mubr.f32.mxu0 0.0
  %v2697 = vand.u32 %v1971, 4294901760
  %2698 = vmatmul.mubr.f32.gmra.mrb[0].mxu0 %v2697
  %v2699 = vpop.f32.mrb[0].mxu0
  %v2700 = vadd.f32 %v2339, %v2699
  %v2701 = vpop.f32.mrb[0].mxu0
  %2702 = vmatprep.mubr.f32.mxu0 0.0
  %v2703 = vand.u32 %v1972, 4294901760
  %2704 = vmatmul.mubr.f32.gmra.mrb[0].mxu0 %v2703
  %v2705 = vpop.f32.mrb[0].mxu0
  %v2706 = vadd.f32 %v2349, %v2705
  %v2707 = vpop.f32.mrb[0].mxu0
  %2708 = vmatprep.mubr.f32.mxu0 0.0
  %v2709 = vand.u32 %v1973, 4294901760
  %2710 = vmatmul.mubr.f32.gmra.mrb[0].mxu0 %v2709
  %v2711 = vpop.f32.mrb[0].mxu0
  %v2712 = vadd.f32 %v2359, %v2711
  %v2713 = vpop.f32.mrb[0].mxu0
  %2714 = vmatprep.mubr.f32.mxu0 0.0
  %v2715 = vand.u32 %v1974, 4294901760
  %2716 = vmatmul.mubr.f32.gmra.mrb[0].mxu0 %v2715
  %v2717 = vpop.f32.mrb[0].mxu0
  %v2718 = vadd.f32 %v2369, %v2717
  %v2719 = vpop.f32.mrb[0].mxu0
  %2720 = vmatprep.mubr.f32.mxu0 0.0
  %v2721 = vand.u32 %v1975, 4294901760
  %2722 = vmatmul.mubr.f32.gmra.mrb[0].mxu0 %v2721
  %v2723 = vpop.f32.mrb[0].mxu0
  %v2724 = vadd.f32 %v2379, %v2723
  %v2725 = vpop.f32.mrb[0].mxu0
  %2726 = vmatprep.mubr.f32.mxu0 0.0
  %v2727 = vand.u32 %v1976, 4294901760
  %2728 = vmatmul.mubr.f32.gmra.mrb[0].mxu0 %v2727
  %v2729 = vpop.f32.mrb[0].mxu0
  %v2730 = vadd.f32 %v2389, %v2729
  %v2731 = vpop.f32.mrb[0].mxu0
  %2732 = vmatprep.mubr.f32.mxu0 0.0
  %v2733 = vand.u32 %v1977, 4294901760
  %2734 = vmatmul.mubr.f32.gmra.mrb[0].mxu0 %v2733
  %v2735 = vpop.f32.mrb[0].mxu0
  %v2736 = vadd.f32 %v2399, %v2735
  %v2737 = vpop.f32.mrb[0].mxu0
  %2738 = vdwg.mxu0
  %2739 = vmatprep.subr.mxu0 0.0
  %v2740 = vand.u32 %v1978, 4294901760
  %v2741 = vsub.f32 %v1978, %v2740
  %2742 = vmatpush1.msra.mxu0 %v2741
  %2743 = vmatprep.subr.mxu0 0.0
  %v2744 = vand.u32 %v1979, 4294901760
  %v2745 = vsub.f32 %v1979, %v2744
  %2746 = vmatpush1.msra.mxu0 %v2745
  %2747 = vmatprep.subr.mxu0 0.0
  %v2748 = vand.u32 %v1980, 4294901760
  %v2749 = vsub.f32 %v1980, %v2748
  %2750 = vmatpush1.msra.mxu0 %v2749
  %2751 = vmatprep.subr.mxu0 0.0
  %v2752 = vand.u32 %v1981, 4294901760
  %v2753 = vsub.f32 %v1981, %v2752
  %2754 = vmatpush1.msra.mxu0 %v2753
  %2755 = vmatprep.subr.mxu0 0.0
  %v2756 = vand.u32 %v1982, 4294901760
  %v2757 = vsub.f32 %v1982, %v2756
  %2758 = vmatpush1.msra.mxu0 %v2757
  %2759 = vmatprep.subr.mxu0 0.0
  %v2760 = vand.u32 %v1983, 4294901760
  %v2761 = vsub.f32 %v1983, %v2760
  %2762 = vmatpush1.msra.mxu0 %v2761
  %2763 = vmatprep.subr.mxu0 0.0
  %v2764 = vand.u32 %v1984, 4294901760
  %v2765 = vsub.f32 %v1984, %v2764
  %2766 = vmatpush1.msra.mxu0 %v2765
  %2767 = vmatprep.subr.mxu0 0.0
  %v2768 = vand.u32 %v1985, 4294901760
  %v2769 = vsub.f32 %v1985, %v2768
  %2770 = vmatpush1.msra.mxu0 %v2769
  %2771 = vmatprep.subr.mxu0 0.0
  %v2772 = vand.u32 %v1986, 4294901760
  %v2773 = vsub.f32 %v1986, %v2772
  %2774 = vmatpush1.msra.mxu0 %v2773
  %2775 = vmatprep.subr.mxu0 0.0
  %v2776 = vand.u32 %v1987, 4294901760
  %v2777 = vsub.f32 %v1987, %v2776
  %2778 = vmatpush1.msra.mxu0 %v2777
  %2779 = vmatprep.subr.mxu0 0.0
  %v2780 = vand.u32 %v1988, 4294901760
  %v2781 = vsub.f32 %v1988, %v2780
  %2782 = vmatpush1.msra.mxu0 %v2781
  %2783 = vmatprep.subr.mxu0 0.0
  %v2784 = vand.u32 %v1989, 4294901760
  %v2785 = vsub.f32 %v1989, %v2784
  %2786 = vmatpush1.msra.mxu0 %v2785
  %2787 = vmatprep.subr.mxu0 0.0
  %v2788 = vand.u32 %v1990, 4294901760
  %v2789 = vsub.f32 %v1990, %v2788
  %2790 = vmatpush1.msra.mxu0 %v2789
  %2791 = vmatprep.subr.mxu0 0.0
  %v2792 = vand.u32 %v1991, 4294901760
  %v2793 = vsub.f32 %v1991, %v2792
  %2794 = vmatpush1.msra.mxu0 %v2793
  %2795 = vmatprep.subr.mxu0 0.0
  %v2796 = vand.u32 %v1992, 4294901760
  %v2797 = vsub.f32 %v1992, %v2796
  %2798 = vmatpush1.msra.mxu0 %v2797
  %2799 = vmatprep.subr.mxu0 0.0
  %v2800 = vand.u32 %v1993, 4294901760
  %v2801 = vsub.f32 %v1993, %v2800
  %2802 = vmatpush1.msra.mxu0 %v2801
  %2803 = vmatprep.subr.mxu0 0.0
  %2804 = vmatpush1.msra.mxu0 0.0
  %2805 = vmatprep.subr.mxu0 0.0
  %2806 = vmatpush1.msra.mxu0 0.0
  %2807 = vmatprep.subr.mxu0 0.0
  %2808 = vmatpush1.msra.mxu0 0.0
  %2809 = vmatprep.subr.mxu0 0.0
  %2810 = vmatpush1.msra.mxu0 0.0
  %2811 = vmatprep.subr.mxu0 0.0
  %2812 = vmatpush1.msra.mxu0 0.0
  %2813 = vmatprep.subr.mxu0 0.0
  %2814 = vmatpush1.msra.mxu0 0.0
  %2815 = vmatprep.subr.mxu0 0.0
  %2816 = vmatpush1.msra.mxu0 0.0
  %2817 = vmatprep.subr.mxu0 0.0
  %2818 = vmatpush1.msra.mxu0 0.0
  %2819 = vmatprep.subr.mxu0 0.0
  %2820 = vmatpush1.msra.mxu0 0.0
  %2821 = vmatprep.subr.mxu0 0.0
  %2822 = vmatpush1.msra.mxu0 0.0
  %2823 = vmatprep.subr.mxu0 0.0
  %2824 = vmatpush1.msra.mxu0 0.0
  %2825 = vmatprep.subr.mxu0 0.0
  %2826 = vmatpush1.msra.mxu0 0.0
  %2827 = vmatprep.subr.mxu0 0.0
  %2828 = vmatpush1.msra.mxu0 0.0
  %2829 = vmatprep.subr.mxu0 0.0
  %2830 = vmatpush1.msra.mxu0 0.0
  %2831 = vmatprep.subr.mxu0 0.0
  %2832 = vmatpush1.msra.mxu0 0.0
  %2833 = vmatprep.subr.mxu0 0.0
  %2834 = vmatpush1.msra.mxu0 0.0
  %2835 = vmatprep.mubr.f32.mxu0 0.0
  %v2836 = vand.u32 %v1946, 4294901760
  %v2837 = vsub.f32 %v1946, %v2836
  %2838 = vmatmul.mubr.f32.gmra.mrb[0].mxu0 %v2837
  %v2839 = vpop.f32.mrb[0].mxu0
  %v2840 = vadd.f32 %v2550, %v2839
  %v2841 = vpop.f32.mrb[0].mxu0
  %2842 = vmatprep.mubr.f32.mxu0 0.0
  %v2843 = vand.u32 %v1947, 4294901760
  %v2844 = vsub.f32 %v1947, %v2843
  %2845 = vmatmul.mubr.f32.gmra.mrb[0].mxu0 %v2844
  %v2846 = vpop.f32.mrb[0].mxu0
  %v2847 = vadd.f32 %v2556, %v2846
  %v2848 = vpop.f32.mrb[0].mxu0
  %2849 = vmatprep.mubr.f32.mxu0 0.0
  %v2850 = vand.u32 %v1948, 4294901760
  %v2851 = vsub.f32 %v1948, %v2850
  %2852 = vmatmul.mubr.f32.gmra.mrb[0].mxu0 %v2851
  %v2853 = vpop.f32.mrb[0].mxu0
  %v2854 = vadd.f32 %v2562, %v2853
  %v2855 = vpop.f32.mrb[0].mxu0
  %2856 = vmatprep.mubr.f32.mxu0 0.0
  %v2857 = vand.u32 %v1949, 4294901760
  %v2858 = vsub.f32 %v1949, %v2857
  %2859 = vmatmul.mubr.f32.gmra.mrb[0].mxu0 %v2858
  %v2860 = vpop.f32.mrb[0].mxu0
  %v2861 = vadd.f32 %v2568, %v2860
  %v2862 = vpop.f32.mrb[0].mxu0
  %2863 = vmatprep.mubr.f32.mxu0 0.0
  %v2864 = vand.u32 %v1950, 4294901760
  %v2865 = vsub.f32 %v1950, %v2864
  %2866 = vmatmul.mubr.f32.gmra.mrb[0].mxu0 %v2865
  %v2867 = vpop.f32.mrb[0].mxu0
  %v2868 = vadd.f32 %v2574, %v2867
  %v2869 = vpop.f32.mrb[0].mxu0
  %2870 = vmatprep.mubr.f32.mxu0 0.0
  %v2871 = vand.u32 %v1951, 4294901760
  %v2872 = vsub.f32 %v1951, %v2871
  %2873 = vmatmul.mubr.f32.gmra.mrb[0].mxu0 %v2872
  %v2874 = vpop.f32.mrb[0].mxu0
  %v2875 = vadd.f32 %v2580, %v2874
  %v2876 = vpop.f32.mrb[0].mxu0
  %2877 = vmatprep.mubr.f32.mxu0 0.0
  %v2878 = vand.u32 %v1952, 4294901760
  %v2879 = vsub.f32 %v1952, %v2878
  %2880 = vmatmul.mubr.f32.gmra.mrb[0].mxu0 %v2879
  %v2881 = vpop.f32.mrb[0].mxu0
  %v2882 = vadd.f32 %v2586, %v2881
  %v2883 = vpop.f32.mrb[0].mxu0
  %2884 = vmatprep.mubr.f32.mxu0 0.0
  %v2885 = vand.u32 %v1953, 4294901760
  %v2886 = vsub.f32 %v1953, %v2885
  %2887 = vmatmul.mubr.f32.gmra.mrb[0].mxu0 %v2886
  %v2888 = vpop.f32.mrb[0].mxu0
  %v2889 = vadd.f32 %v2592, %v2888
  %v2890 = vpop.f32.mrb[0].mxu0
  %2891 = vmatprep.mubr.f32.mxu0 0.0
  %v2892 = vand.u32 %v1954, 4294901760
  %v2893 = vsub.f32 %v1954, %v2892
  %2894 = vmatmul.mubr.f32.gmra.mrb[0].mxu0 %v2893
  %v2895 = vpop.f32.mrb[0].mxu0
  %v2896 = vadd.f32 %v2598, %v2895
  %v2897 = vpop.f32.mrb[0].mxu0
  %2898 = vmatprep.mubr.f32.mxu0 0.0
  %v2899 = vand.u32 %v1955, 4294901760
  %v2900 = vsub.f32 %v1955, %v2899
  %2901 = vmatmul.mubr.f32.gmra.mrb[0].mxu0 %v2900
  %v2902 = vpop.f32.mrb[0].mxu0
  %v2903 = vadd.f32 %v2604, %v2902
  %v2904 = vpop.f32.mrb[0].mxu0
  %2905 = vmatprep.mubr.f32.mxu0 0.0
  %v2906 = vand.u32 %v1956, 4294901760
  %v2907 = vsub.f32 %v1956, %v2906
  %2908 = vmatmul.mubr.f32.gmra.mrb[0].mxu0 %v2907
  %v2909 = vpop.f32.mrb[0].mxu0
  %v2910 = vadd.f32 %v2610, %v2909
  %v2911 = vpop.f32.mrb[0].mxu0
  %2912 = vmatprep.mubr.f32.mxu0 0.0
  %v2913 = vand.u32 %v1957, 4294901760
  %v2914 = vsub.f32 %v1957, %v2913
  %2915 = vmatmul.mubr.f32.gmra.mrb[0].mxu0 %v2914
  %v2916 = vpop.f32.mrb[0].mxu0
  %v2917 = vadd.f32 %v2616, %v2916
  %v2918 = vpop.f32.mrb[0].mxu0
  %2919 = vmatprep.mubr.f32.mxu0 0.0
  %v2920 = vand.u32 %v1958, 4294901760
  %v2921 = vsub.f32 %v1958, %v2920
  %2922 = vmatmul.mubr.f32.gmra.mrb[0].mxu0 %v2921
  %v2923 = vpop.f32.mrb[0].mxu0
  %v2924 = vadd.f32 %v2622, %v2923
  %v2925 = vpop.f32.mrb[0].mxu0
  %2926 = vmatprep.mubr.f32.mxu0 0.0
  %v2927 = vand.u32 %v1959, 4294901760
  %v2928 = vsub.f32 %v1959, %v2927
  %2929 = vmatmul.mubr.f32.gmra.mrb[0].mxu0 %v2928
  %v2930 = vpop.f32.mrb[0].mxu0
  %v2931 = vadd.f32 %v2628, %v2930
  %v2932 = vpop.f32.mrb[0].mxu0
  %2933 = vmatprep.mubr.f32.mxu0 0.0
  %v2934 = vand.u32 %v1960, 4294901760
  %v2935 = vsub.f32 %v1960, %v2934
  %2936 = vmatmul.mubr.f32.gmra.mrb[0].mxu0 %v2935
  %v2937 = vpop.f32.mrb[0].mxu0
  %v2938 = vadd.f32 %v2634, %v2937
  %v2939 = vpop.f32.mrb[0].mxu0
  %2940 = vmatprep.mubr.f32.mxu0 0.0
  %v2941 = vand.u32 %v1961, 4294901760
  %v2942 = vsub.f32 %v1961, %v2941
  %2943 = vmatmul.mubr.f32.gmra.mrb[0].mxu0 %v2942
  %v2944 = vpop.f32.mrb[0].mxu0
  %v2945 = vadd.f32 %v2640, %v2944
  %v2946 = vpop.f32.mrb[0].mxu0
  %2947 = vmatprep.mubr.f32.mxu0 0.0
  %v2948 = vand.u32 %v1962, 4294901760
  %v2949 = vsub.f32 %v1962, %v2948
  %2950 = vmatmul.mubr.f32.gmra.mrb[0].mxu0 %v2949
  %v2951 = vpop.f32.mrb[0].mxu0
  %v2952 = vadd.f32 %v2646, %v2951
  %v2953 = vpop.f32.mrb[0].mxu0
  %2954 = vmatprep.mubr.f32.mxu0 0.0
  %v2955 = vand.u32 %v1963, 4294901760
  %v2956 = vsub.f32 %v1963, %v2955
  %2957 = vmatmul.mubr.f32.gmra.mrb[0].mxu0 %v2956
  %v2958 = vpop.f32.mrb[0].mxu0
  %v2959 = vadd.f32 %v2652, %v2958
  %v2960 = vpop.f32.mrb[0].mxu0
  %2961 = vmatprep.mubr.f32.mxu0 0.0
  %v2962 = vand.u32 %v1964, 4294901760
  %v2963 = vsub.f32 %v1964, %v2962
  %2964 = vmatmul.mubr.f32.gmra.mrb[0].mxu0 %v2963
  %v2965 = vpop.f32.mrb[0].mxu0
  %v2966 = vadd.f32 %v2658, %v2965
  %v2967 = vpop.f32.mrb[0].mxu0
  %2968 = vmatprep.mubr.f32.mxu0 0.0
  %v2969 = vand.u32 %v1965, 4294901760
  %v2970 = vsub.f32 %v1965, %v2969
  %2971 = vmatmul.mubr.f32.gmra.mrb[0].mxu0 %v2970
  %v2972 = vpop.f32.mrb[0].mxu0
  %v2973 = vadd.f32 %v2664, %v2972
  %v2974 = vpop.f32.mrb[0].mxu0
  %2975 = vmatprep.mubr.f32.mxu0 0.0
  %v2976 = vand.u32 %v1966, 4294901760
  %v2977 = vsub.f32 %v1966, %v2976
  %2978 = vmatmul.mubr.f32.gmra.mrb[0].mxu0 %v2977
  %v2979 = vpop.f32.mrb[0].mxu0
  %v2980 = vadd.f32 %v2670, %v2979
  %v2981 = vpop.f32.mrb[0].mxu0
  %2982 = vmatprep.mubr.f32.mxu0 0.0
  %v2983 = vand.u32 %v1967, 4294901760
  %v2984 = vsub.f32 %v1967, %v2983
  %2985 = vmatmul.mubr.f32.gmra.mrb[0].mxu0 %v2984
  %v2986 = vpop.f32.mrb[0].mxu0
  %v2987 = vadd.f32 %v2676, %v2986
  %v2988 = vpop.f32.mrb[0].mxu0
  %2989 = vmatprep.mubr.f32.mxu0 0.0
  %v2990 = vand.u32 %v1968, 4294901760
  %v2991 = vsub.f32 %v1968, %v2990
  %2992 = vmatmul.mubr.f32.gmra.mrb[0].mxu0 %v2991
  %v2993 = vpop.f32.mrb[0].mxu0
  %v2994 = vadd.f32 %v2682, %v2993
  %v2995 = vpop.f32.mrb[0].mxu0
  %2996 = vmatprep.mubr.f32.mxu0 0.0
  %v2997 = vand.u32 %v1969, 4294901760
  %v2998 = vsub.f32 %v1969, %v2997
  %2999 = vmatmul.mubr.f32.gmra.mrb[0].mxu0 %v2998
  %v3000 = vpop.f32.mrb[0].mxu0
  %v3001 = vadd.f32 %v2688, %v3000
  %v3002 = vpop.f32.mrb[0].mxu0
  %3003 = vmatprep.mubr.f32.mxu0 0.0
  %v3004 = vand.u32 %v1970, 4294901760
  %v3005 = vsub.f32 %v1970, %v3004
  %3006 = vmatmul.mubr.f32.gmra.mrb[0].mxu0 %v3005
  %v3007 = vpop.f32.mrb[0].mxu0
  %v3008 = vadd.f32 %v2694, %v3007
  %v3009 = vpop.f32.mrb[0].mxu0
  %3010 = vmatprep.mubr.f32.mxu0 0.0
  %v3011 = vand.u32 %v1971, 4294901760
  %v3012 = vsub.f32 %v1971, %v3011
  %3013 = vmatmul.mubr.f32.gmra.mrb[0].mxu0 %v3012
  %v3014 = vpop.f32.mrb[0].mxu0
  %v3015 = vadd.f32 %v2700, %v3014
  %v3016 = vpop.f32.mrb[0].mxu0
  %3017 = vmatprep.mubr.f32.mxu0 0.0
  %v3018 = vand.u32 %v1972, 4294901760
  %v3019 = vsub.f32 %v1972, %v3018
  %3020 = vmatmul.mubr.f32.gmra.mrb[0].mxu0 %v3019
  %v3021 = vpop.f32.mrb[0].mxu0
  %v3022 = vadd.f32 %v2706, %v3021
  %v3023 = vpop.f32.mrb[0].mxu0
  %3024 = vmatprep.mubr.f32.mxu0 0.0
  %v3025 = vand.u32 %v1973, 4294901760
  %v3026 = vsub.f32 %v1973, %v3025
  %3027 = vmatmul.mubr.f32.gmra.mrb[0].mxu0 %v3026
  %v3028 = vpop.f32.mrb[0].mxu0
  %v3029 = vadd.f32 %v2712, %v3028
  %v3030 = vpop.f32.mrb[0].mxu0
  %3031 = vmatprep.mubr.f32.mxu0 0.0
  %v3032 = vand.u32 %v1974, 4294901760
  %v3033 = vsub.f32 %v1974, %v3032
  %3034 = vmatmul.mubr.f32.gmra.mrb[0].mxu0 %v3033
  %v3035 = vpop.f32.mrb[0].mxu0
  %v3036 = vadd.f32 %v2718, %v3035
  %v3037 = vpop.f32.mrb[0].mxu0
  %3038 = vmatprep.mubr.f32.mxu0 0.0
  %v3039 = vand.u32 %v1975, 4294901760
  %v3040 = vsub.f32 %v1975, %v3039
  %3041 = vmatmul.mubr.f32.gmra.mrb[0].mxu0 %v3040
  %v3042 = vpop.f32.mrb[0].mxu0
  %v3043 = vadd.f32 %v2724, %v3042
  %v3044 = vpop.f32.mrb[0].mxu0
  %3045 = vmatprep.mubr.f32.mxu0 0.0
  %v3046 = vand.u32 %v1976, 4294901760
  %v3047 = vsub.f32 %v1976, %v3046
  %3048 = vmatmul.mubr.f32.gmra.mrb[0].mxu0 %v3047
  %v3049 = vpop.f32.mrb[0].mxu0
  %v3050 = vadd.f32 %v2730, %v3049
  %v3051 = vpop.f32.mrb[0].mxu0
  %3052 = vmatprep.mubr.f32.mxu0 0.0
  %v3053 = vand.u32 %v1977, 4294901760
  %v3054 = vsub.f32 %v1977, %v3053
  %3055 = vmatmul.mubr.f32.gmra.mrb[0].mxu0 %v3054
  %v3056 = vpop.f32.mrb[0].mxu0
  %v3057 = vadd.f32 %v2736, %v3056
  %v3058 = vpop.f32.mrb[0].mxu0
  %3059 = vdwg.mxu0
  %3060 = vmatprep.subr.mxu0 0.0
  %v3061 = vand.u32 %v1978, 4294901760
  %3062 = vmatpush1.msra.mxu0 %v3061
  %3063 = vmatprep.subr.mxu0 0.0
  %v3064 = vand.u32 %v1979, 4294901760
  %3065 = vmatpush1.msra.mxu0 %v3064
  %3066 = vmatprep.subr.mxu0 0.0
  %v3067 = vand.u32 %v1980, 4294901760
  %3068 = vmatpush1.msra.mxu0 %v3067
  %3069 = vmatprep.subr.mxu0 0.0
  %v3070 = vand.u32 %v1981, 4294901760
  %3071 = vmatpush1.msra.mxu0 %v3070
  %3072 = vmatprep.subr.mxu0 0.0
  %v3073 = vand.u32 %v1982, 4294901760
  %3074 = vmatpush1.msra.mxu0 %v3073
  %3075 = vmatprep.subr.mxu0 0.0
  %v3076 = vand.u32 %v1983, 4294901760
  %3077 = vmatpush1.msra.mxu0 %v3076
  %3078 = vmatprep.subr.mxu0 0.0
  %v3079 = vand.u32 %v1984, 4294901760
  %3080 = vmatpush1.msra.mxu0 %v3079
  %3081 = vmatprep.subr.mxu0 0.0
  %v3082 = vand.u32 %v1985, 4294901760
  %3083 = vmatpush1.msra.mxu0 %v3082
  %3084 = vmatprep.subr.mxu0 0.0
  %v3085 = vand.u32 %v1986, 4294901760
  %3086 = vmatpush1.msra.mxu0 %v3085
  %3087 = vmatprep.subr.mxu0 0.0
  %v3088 = vand.u32 %v1987, 4294901760
  %3089 = vmatpush1.msra.mxu0 %v3088
  %3090 = vmatprep.subr.mxu0 0.0
  %v3091 = vand.u32 %v1988, 4294901760
  %3092 = vmatpush1.msra.mxu0 %v3091
  %3093 = vmatprep.subr.mxu0 0.0
  %v3094 = vand.u32 %v1989, 4294901760
  %3095 = vmatpush1.msra.mxu0 %v3094
  %3096 = vmatprep.subr.mxu0 0.0
  %v3097 = vand.u32 %v1990, 4294901760
  %3098 = vmatpush1.msra.mxu0 %v3097
  %3099 = vmatprep.subr.mxu0 0.0
  %v3100 = vand.u32 %v1991, 4294901760
  %3101 = vmatpush1.msra.mxu0 %v3100
  %3102 = vmatprep.subr.mxu0 0.0
  %v3103 = vand.u32 %v1992, 4294901760
  %3104 = vmatpush1.msra.mxu0 %v3103
  %3105 = vmatprep.subr.mxu0 0.0
  %v3106 = vand.u32 %v1993, 4294901760
  %3107 = vmatpush1.msra.mxu0 %v3106
  %3108 = vmatprep.subr.mxu0 0.0
  %3109 = vmatpush1.msra.mxu0 0.0
  %3110 = vmatprep.subr.mxu0 0.0
  %3111 = vmatpush1.msra.mxu0 0.0
  %3112 = vmatprep.subr.mxu0 0.0
  %3113 = vmatpush1.msra.mxu0 0.0
  %3114 = vmatprep.subr.mxu0 0.0
  %3115 = vmatpush1.msra.mxu0 0.0
  %3116 = vmatprep.subr.mxu0 0.0
  %3117 = vmatpush1.msra.mxu0 0.0
  %3118 = vmatprep.subr.mxu0 0.0
  %3119 = vmatpush1.msra.mxu0 0.0
  %3120 = vmatprep.subr.mxu0 0.0
  %3121 = vmatpush1.msra.mxu0 0.0
  %3122 = vmatprep.subr.mxu0 0.0
  %3123 = vmatpush1.msra.mxu0 0.0
  %3124 = vmatprep.subr.mxu0 0.0
  %3125 = vmatpush1.msra.mxu0 0.0
  %3126 = vmatprep.subr.mxu0 0.0
  %3127 = vmatpush1.msra.mxu0 0.0
  %3128 = vmatprep.subr.mxu0 0.0
  %3129 = vmatpush1.msra.mxu0 0.0
  %3130 = vmatprep.subr.mxu0 0.0
  %3131 = vmatpush1.msra.mxu0 0.0
  %3132 = vmatprep.subr.mxu0 0.0
  %3133 = vmatpush1.msra.mxu0 0.0
  %3134 = vmatprep.subr.mxu0 0.0
  %3135 = vmatpush1.msra.mxu0 0.0
  %3136 = vmatprep.subr.mxu0 0.0
  %3137 = vmatpush1.msra.mxu0 0.0
  %3138 = vmatprep.subr.mxu0 0.0
  %3139 = vmatpush1.msra.mxu0 0.0
  %3140 = vmatprep.mubr.f32.mxu0 0.0
  %v3141 = vand.u32 %v1946, 4294901760
  %v3142 = vsub.f32 %v1946, %v3141
  %v3143 = vand.u32 %v3142, 4294901760
  %3144 = vmatmul.mubr.f32.gmra.mrb[0].mxu0 %v3143
  %v3145 = vpop.f32.mrb[0].mxu0
  %v3146 = vadd.f32 %v2840, %v3145
  %v3147 = vpop.f32.mrb[0].mxu0
  %3148 = vmatprep.mubr.f32.mxu0 0.0
  %v3149 = vand.u32 %v1947, 4294901760
  %v3150 = vsub.f32 %v1947, %v3149
  %v3151 = vand.u32 %v3150, 4294901760
  %3152 = vmatmul.mubr.f32.gmra.mrb[0].mxu0 %v3151
  %v3153 = vpop.f32.mrb[0].mxu0
  %v3154 = vadd.f32 %v2847, %v3153
  %v3155 = vpop.f32.mrb[0].mxu0
  %3156 = vmatprep.mubr.f32.mxu0 0.0
  %v3157 = vand.u32 %v1948, 4294901760
  %v3158 = vsub.f32 %v1948, %v3157
  %v3159 = vand.u32 %v3158, 4294901760
  %3160 = vmatmul.mubr.f32.gmra.mrb[0].mxu0 %v3159
  %v3161 = vpop.f32.mrb[0].mxu0
  %v3162 = vadd.f32 %v2854, %v3161
  %v3163 = vpop.f32.mrb[0].mxu0
  %3164 = vmatprep.mubr.f32.mxu0 0.0
  %v3165 = vand.u32 %v1949, 4294901760
  %v3166 = vsub.f32 %v1949, %v3165
  %v3167 = vand.u32 %v3166, 4294901760
  %3168 = vmatmul.mubr.f32.gmra.mrb[0].mxu0 %v3167
  %v3169 = vpop.f32.mrb[0].mxu0
  %v3170 = vadd.f32 %v2861, %v3169
  %v3171 = vpop.f32.mrb[0].mxu0
  %3172 = vmatprep.mubr.f32.mxu0 0.0
  %v3173 = vand.u32 %v1950, 4294901760
  %v3174 = vsub.f32 %v1950, %v3173
  %v3175 = vand.u32 %v3174, 4294901760
  %3176 = vmatmul.mubr.f32.gmra.mrb[0].mxu0 %v3175
  %v3177 = vpop.f32.mrb[0].mxu0
  %v3178 = vadd.f32 %v2868, %v3177
  %v3179 = vpop.f32.mrb[0].mxu0
  %3180 = vmatprep.mubr.f32.mxu0 0.0
  %v3181 = vand.u32 %v1951, 4294901760
  %v3182 = vsub.f32 %v1951, %v3181
  %v3183 = vand.u32 %v3182, 4294901760
  %3184 = vmatmul.mubr.f32.gmra.mrb[0].mxu0 %v3183
  %v3185 = vpop.f32.mrb[0].mxu0
  %v3186 = vadd.f32 %v2875, %v3185
  %v3187 = vpop.f32.mrb[0].mxu0
  %3188 = vmatprep.mubr.f32.mxu0 0.0
  %v3189 = vand.u32 %v1952, 4294901760
  %v3190 = vsub.f32 %v1952, %v3189
  %v3191 = vand.u32 %v3190, 4294901760
  %3192 = vmatmul.mubr.f32.gmra.mrb[0].mxu0 %v3191
  %v3193 = vpop.f32.mrb[0].mxu0
  %v3194 = vadd.f32 %v2882, %v3193
  %v3195 = vpop.f32.mrb[0].mxu0
  %3196 = vmatprep.mubr.f32.mxu0 0.0
  %v3197 = vand.u32 %v1953, 4294901760
  %v3198 = vsub.f32 %v1953, %v3197
  %v3199 = vand.u32 %v3198, 4294901760
  %3200 = vmatmul.mubr.f32.gmra.mrb[0].mxu0 %v3199
  %v3201 = vpop.f32.mrb[0].mxu0
  %v3202 = vadd.f32 %v2889, %v3201
  %v3203 = vpop.f32.mrb[0].mxu0
  %3204 = vmatprep.mubr.f32.mxu0 0.0
  %v3205 = vand.u32 %v1954, 4294901760
  %v3206 = vsub.f32 %v1954, %v3205
  %v3207 = vand.u32 %v3206, 4294901760
  %3208 = vmatmul.mubr.f32.gmra.mrb[0].mxu0 %v3207
  %v3209 = vpop.f32.mrb[0].mxu0
  %v3210 = vadd.f32 %v2896, %v3209
  %v3211 = vpop.f32.mrb[0].mxu0
  %3212 = vmatprep.mubr.f32.mxu0 0.0
  %v3213 = vand.u32 %v1955, 4294901760
  %v3214 = vsub.f32 %v1955, %v3213
  %v3215 = vand.u32 %v3214, 4294901760
  %3216 = vmatmul.mubr.f32.gmra.mrb[0].mxu0 %v3215
  %v3217 = vpop.f32.mrb[0].mxu0
  %v3218 = vadd.f32 %v2903, %v3217
  %v3219 = vpop.f32.mrb[0].mxu0
  %3220 = vmatprep.mubr.f32.mxu0 0.0
  %v3221 = vand.u32 %v1956, 4294901760
  %v3222 = vsub.f32 %v1956, %v3221
  %v3223 = vand.u32 %v3222, 4294901760
  %3224 = vmatmul.mubr.f32.gmra.mrb[0].mxu0 %v3223
  %v3225 = vpop.f32.mrb[0].mxu0
  %v3226 = vadd.f32 %v2910, %v3225
  %v3227 = vpop.f32.mrb[0].mxu0
  %3228 = vmatprep.mubr.f32.mxu0 0.0
  %v3229 = vand.u32 %v1957, 4294901760
  %v3230 = vsub.f32 %v1957, %v3229
  %v3231 = vand.u32 %v3230, 4294901760
  %3232 = vmatmul.mubr.f32.gmra.mrb[0].mxu0 %v3231
  %v3233 = vpop.f32.mrb[0].mxu0
  %v3234 = vadd.f32 %v2917, %v3233
  %v3235 = vpop.f32.mrb[0].mxu0
  %3236 = vmatprep.mubr.f32.mxu0 0.0
  %v3237 = vand.u32 %v1958, 4294901760
  %v3238 = vsub.f32 %v1958, %v3237
  %v3239 = vand.u32 %v3238, 4294901760
  %3240 = vmatmul.mubr.f32.gmra.mrb[0].mxu0 %v3239
  %v3241 = vpop.f32.mrb[0].mxu0
  %v3242 = vadd.f32 %v2924, %v3241
  %v3243 = vpop.f32.mrb[0].mxu0
  %3244 = vmatprep.mubr.f32.mxu0 0.0
  %v3245 = vand.u32 %v1959, 4294901760
  %v3246 = vsub.f32 %v1959, %v3245
  %v3247 = vand.u32 %v3246, 4294901760
  %3248 = vmatmul.mubr.f32.gmra.mrb[0].mxu0 %v3247
  %v3249 = vpop.f32.mrb[0].mxu0
  %v3250 = vadd.f32 %v2931, %v3249
  %v3251 = vpop.f32.mrb[0].mxu0
  %3252 = vmatprep.mubr.f32.mxu0 0.0
  %v3253 = vand.u32 %v1960, 4294901760
  %v3254 = vsub.f32 %v1960, %v3253
  %v3255 = vand.u32 %v3254, 4294901760
  %3256 = vmatmul.mubr.f32.gmra.mrb[0].mxu0 %v3255
  %v3257 = vpop.f32.mrb[0].mxu0
  %v3258 = vadd.f32 %v2938, %v3257
  %v3259 = vpop.f32.mrb[0].mxu0
  %3260 = vmatprep.mubr.f32.mxu0 0.0
  %v3261 = vand.u32 %v1961, 4294901760
  %v3262 = vsub.f32 %v1961, %v3261
  %v3263 = vand.u32 %v3262, 4294901760
  %3264 = vmatmul.mubr.f32.gmra.mrb[0].mxu0 %v3263
  %v3265 = vpop.f32.mrb[0].mxu0
  %v3266 = vadd.f32 %v2945, %v3265
  %v3267 = vpop.f32.mrb[0].mxu0
  %3268 = vmatprep.mubr.f32.mxu0 0.0
  %v3269 = vand.u32 %v1962, 4294901760
  %v3270 = vsub.f32 %v1962, %v3269
  %v3271 = vand.u32 %v3270, 4294901760
  %3272 = vmatmul.mubr.f32.gmra.mrb[0].mxu0 %v3271
  %v3273 = vpop.f32.mrb[0].mxu0
  %v3274 = vadd.f32 %v2952, %v3273
  %v3275 = vpop.f32.mrb[0].mxu0
  %3276 = vmatprep.mubr.f32.mxu0 0.0
  %v3277 = vand.u32 %v1963, 4294901760
  %v3278 = vsub.f32 %v1963, %v3277
  %v3279 = vand.u32 %v3278, 4294901760
  %3280 = vmatmul.mubr.f32.gmra.mrb[0].mxu0 %v3279
  %v3281 = vpop.f32.mrb[0].mxu0
  %v3282 = vadd.f32 %v2959, %v3281
  %v3283 = vpop.f32.mrb[0].mxu0
  %3284 = vmatprep.mubr.f32.mxu0 0.0
  %v3285 = vand.u32 %v1964, 4294901760
  %v3286 = vsub.f32 %v1964, %v3285
  %v3287 = vand.u32 %v3286, 4294901760
  %3288 = vmatmul.mubr.f32.gmra.mrb[0].mxu0 %v3287
  %v3289 = vpop.f32.mrb[0].mxu0
  %v3290 = vadd.f32 %v2966, %v3289
  %v3291 = vpop.f32.mrb[0].mxu0
  %3292 = vmatprep.mubr.f32.mxu0 0.0
  %v3293 = vand.u32 %v1965, 4294901760
  %v3294 = vsub.f32 %v1965, %v3293
  %v3295 = vand.u32 %v3294, 4294901760
  %3296 = vmatmul.mubr.f32.gmra.mrb[0].mxu0 %v3295
  %v3297 = vpop.f32.mrb[0].mxu0
  %v3298 = vadd.f32 %v2973, %v3297
  %v3299 = vpop.f32.mrb[0].mxu0
  %3300 = vmatprep.mubr.f32.mxu0 0.0
  %v3301 = vand.u32 %v1966, 4294901760
  %v3302 = vsub.f32 %v1966, %v3301
  %v3303 = vand.u32 %v3302, 4294901760
  %3304 = vmatmul.mubr.f32.gmra.mrb[0].mxu0 %v3303
  %v3305 = vpop.f32.mrb[0].mxu0
  %v3306 = vadd.f32 %v2980, %v3305
  %v3307 = vpop.f32.mrb[0].mxu0
  %3308 = vmatprep.mubr.f32.mxu0 0.0
  %v3309 = vand.u32 %v1967, 4294901760
  %v3310 = vsub.f32 %v1967, %v3309
  %v3311 = vand.u32 %v3310, 4294901760
  %3312 = vmatmul.mubr.f32.gmra.mrb[0].mxu0 %v3311
  %v3313 = vpop.f32.mrb[0].mxu0
  %v3314 = vadd.f32 %v2987, %v3313
  %v3315 = vpop.f32.mrb[0].mxu0
  %3316 = vmatprep.mubr.f32.mxu0 0.0
  %v3317 = vand.u32 %v1968, 4294901760
  %v3318 = vsub.f32 %v1968, %v3317
  %v3319 = vand.u32 %v3318, 4294901760
  %3320 = vmatmul.mubr.f32.gmra.mrb[0].mxu0 %v3319
  %v3321 = vpop.f32.mrb[0].mxu0
  %v3322 = vadd.f32 %v2994, %v3321
  %v3323 = vpop.f32.mrb[0].mxu0
  %3324 = vmatprep.mubr.f32.mxu0 0.0
  %v3325 = vand.u32 %v1969, 4294901760
  %v3326 = vsub.f32 %v1969, %v3325
  %v3327 = vand.u32 %v3326, 4294901760
  %3328 = vmatmul.mubr.f32.gmra.mrb[0].mxu0 %v3327
  %v3329 = vpop.f32.mrb[0].mxu0
  %v3330 = vadd.f32 %v3001, %v3329
  %v3331 = vpop.f32.mrb[0].mxu0
  %3332 = vmatprep.mubr.f32.mxu0 0.0
  %v3333 = vand.u32 %v1970, 4294901760
  %v3334 = vsub.f32 %v1970, %v3333
  %v3335 = vand.u32 %v3334, 4294901760
  %3336 = vmatmul.mubr.f32.gmra.mrb[0].mxu0 %v3335
  %v3337 = vpop.f32.mrb[0].mxu0
  %v3338 = vadd.f32 %v3008, %v3337
  %v3339 = vpop.f32.mrb[0].mxu0
  %3340 = vmatprep.mubr.f32.mxu0 0.0
  %v3341 = vand.u32 %v1971, 4294901760
  %v3342 = vsub.f32 %v1971, %v3341
  %v3343 = vand.u32 %v3342, 4294901760
  %3344 = vmatmul.mubr.f32.gmra.mrb[0].mxu0 %v3343
  %v3345 = vpop.f32.mrb[0].mxu0
  %v3346 = vadd.f32 %v3015, %v3345
  %v3347 = vpop.f32.mrb[0].mxu0
  %3348 = vmatprep.mubr.f32.mxu0 0.0
  %v3349 = vand.u32 %v1972, 4294901760
  %v3350 = vsub.f32 %v1972, %v3349
  %v3351 = vand.u32 %v3350, 4294901760
  %3352 = vmatmul.mubr.f32.gmra.mrb[0].mxu0 %v3351
  %v3353 = vpop.f32.mrb[0].mxu0
  %v3354 = vadd.f32 %v3022, %v3353
  %v3355 = vpop.f32.mrb[0].mxu0
  %3356 = vmatprep.mubr.f32.mxu0 0.0
  %v3357 = vand.u32 %v1973, 4294901760
  %v3358 = vsub.f32 %v1973, %v3357
  %v3359 = vand.u32 %v3358, 4294901760
  %3360 = vmatmul.mubr.f32.gmra.mrb[0].mxu0 %v3359
  %v3361 = vpop.f32.mrb[0].mxu0
  %v3362 = vadd.f32 %v3029, %v3361
  %v3363 = vpop.f32.mrb[0].mxu0
  %3364 = vmatprep.mubr.f32.mxu0 0.0
  %v3365 = vand.u32 %v1974, 4294901760
  %v3366 = vsub.f32 %v1974, %v3365
  %v3367 = vand.u32 %v3366, 4294901760
  %3368 = vmatmul.mubr.f32.gmra.mrb[0].mxu0 %v3367
  %v3369 = vpop.f32.mrb[0].mxu0
  %v3370 = vadd.f32 %v3036, %v3369
  %v3371 = vpop.f32.mrb[0].mxu0
  %3372 = vmatprep.mubr.f32.mxu0 0.0
  %v3373 = vand.u32 %v1975, 4294901760
  %v3374 = vsub.f32 %v1975, %v3373
  %v3375 = vand.u32 %v3374, 4294901760
  %3376 = vmatmul.mubr.f32.gmra.mrb[0].mxu0 %v3375
  %v3377 = vpop.f32.mrb[0].mxu0
  %v3378 = vadd.f32 %v3043, %v3377
  %v3379 = vpop.f32.mrb[0].mxu0
  %3380 = vmatprep.mubr.f32.mxu0 0.0
  %v3381 = vand.u32 %v1976, 4294901760
  %v3382 = vsub.f32 %v1976, %v3381
  %v3383 = vand.u32 %v3382, 4294901760
  %3384 = vmatmul.mubr.f32.gmra.mrb[0].mxu0 %v3383
  %v3385 = vpop.f32.mrb[0].mxu0
  %v3386 = vadd.f32 %v3050, %v3385
  %v3387 = vpop.f32.mrb[0].mxu0
  %3388 = vmatprep.mubr.f32.mxu0 0.0
  %v3389 = vand.u32 %v1977, 4294901760
  %v3390 = vsub.f32 %v1977, %v3389
  %v3391 = vand.u32 %v3390, 4294901760
  %3392 = vmatmul.mubr.f32.gmra.mrb[0].mxu0 %v3391
  %v3393 = vpop.f32.mrb[0].mxu0
  %v3394 = vadd.f32 %v3057, %v3393
  %v3395 = vpop.f32.mrb[0].mxu0
  %3396 = vdwg.mxu0
  %3397 = vmatprep.subr.mxu0 0.0
  %v3398 = vand.u32 %v1978, 4294901760
  %v3399 = vsub.f32 %v1978, %v3398
  %v3400 = vand.u32 %v3399, 4294901760
  %3401 = vmatpush1.msra.mxu0 %v3400
  %3402 = vmatprep.subr.mxu0 0.0
  %v3403 = vand.u32 %v1979, 4294901760
  %v3404 = vsub.f32 %v1979, %v3403
  %v3405 = vand.u32 %v3404, 4294901760
  %3406 = vmatpush1.msra.mxu0 %v3405
  %3407 = vmatprep.subr.mxu0 0.0
  %v3408 = vand.u32 %v1980, 4294901760
  %v3409 = vsub.f32 %v1980, %v3408
  %v3410 = vand.u32 %v3409, 4294901760
  %3411 = vmatpush1.msra.mxu0 %v3410
  %3412 = vmatprep.subr.mxu0 0.0
  %v3413 = vand.u32 %v1981, 4294901760
  %v3414 = vsub.f32 %v1981, %v3413
  %v3415 = vand.u32 %v3414, 4294901760
  %3416 = vmatpush1.msra.mxu0 %v3415
  %3417 = vmatprep.subr.mxu0 0.0
  %v3418 = vand.u32 %v1982, 4294901760
  %v3419 = vsub.f32 %v1982, %v3418
  %v3420 = vand.u32 %v3419, 4294901760
  %3421 = vmatpush1.msra.mxu0 %v3420
  %3422 = vmatprep.subr.mxu0 0.0
  %v3423 = vand.u32 %v1983, 4294901760
  %v3424 = vsub.f32 %v1983, %v3423
  %v3425 = vand.u32 %v3424, 4294901760
  %3426 = vmatpush1.msra.mxu0 %v3425
  %3427 = vmatprep.subr.mxu0 0.0
  %v3428 = vand.u32 %v1984, 4294901760
  %v3429 = vsub.f32 %v1984, %v3428
  %v3430 = vand.u32 %v3429, 4294901760
  %3431 = vmatpush1.msra.mxu0 %v3430
  %3432 = vmatprep.subr.mxu0 0.0
  %v3433 = vand.u32 %v1985, 4294901760
  %v3434 = vsub.f32 %v1985, %v3433
  %v3435 = vand.u32 %v3434, 4294901760
  %3436 = vmatpush1.msra.mxu0 %v3435
  %3437 = vmatprep.subr.mxu0 0.0
  %v3438 = vand.u32 %v1986, 4294901760
  %v3439 = vsub.f32 %v1986, %v3438
  %v3440 = vand.u32 %v3439, 4294901760
  %3441 = vmatpush1.msra.mxu0 %v3440
  %3442 = vmatprep.subr.mxu0 0.0
  %v3443 = vand.u32 %v1987, 4294901760
  %v3444 = vsub.f32 %v1987, %v3443
  %v3445 = vand.u32 %v3444, 4294901760
  %3446 = vmatpush1.msra.mxu0 %v3445
  %3447 = vmatprep.subr.mxu0 0.0
  %v3448 = vand.u32 %v1988, 4294901760
  %v3449 = vsub.f32 %v1988, %v3448
  %v3450 = vand.u32 %v3449, 4294901760
  %3451 = vmatpush1.msra.mxu0 %v3450
  %3452 = vmatprep.subr.mxu0 0.0
  %v3453 = vand.u32 %v1989, 4294901760
  %v3454 = vsub.f32 %v1989, %v3453
  %v3455 = vand.u32 %v3454, 4294901760
  %3456 = vmatpush1.msra.mxu0 %v3455
  %3457 = vmatprep.subr.mxu0 0.0
  %v3458 = vand.u32 %v1990, 4294901760
  %v3459 = vsub.f32 %v1990, %v3458
  %v3460 = vand.u32 %v3459, 4294901760
  %3461 = vmatpush1.msra.mxu0 %v3460
  %3462 = vmatprep.subr.mxu0 0.0
  %v3463 = vand.u32 %v1991, 4294901760
  %v3464 = vsub.f32 %v1991, %v3463
  %v3465 = vand.u32 %v3464, 4294901760
  %3466 = vmatpush1.msra.mxu0 %v3465
  %3467 = vmatprep.subr.mxu0 0.0
  %v3468 = vand.u32 %v1992, 4294901760
  %v3469 = vsub.f32 %v1992, %v3468
  %v3470 = vand.u32 %v3469, 4294901760
  %3471 = vmatpush1.msra.mxu0 %v3470
  %3472 = vmatprep.subr.mxu0 0.0
  %v3473 = vand.u32 %v1993, 4294901760
  %v3474 = vsub.f32 %v1993, %v3473
  %v3475 = vand.u32 %v3474, 4294901760
  %3476 = vmatpush1.msra.mxu0 %v3475
  %3477 = vmatprep.subr.mxu0 0.0
  %3478 = vmatpush1.msra.mxu0 0.0
  %3479 = vmatprep.subr.mxu0 0.0
  %3480 = vmatpush1.msra.mxu0 0.0
  %3481 = vmatprep.subr.mxu0 0.0
  %3482 = vmatpush1.msra.mxu0 0.0
  %3483 = vmatprep.subr.mxu0 0.0
  %3484 = vmatpush1.msra.mxu0 0.0
  %3485 = vmatprep.subr.mxu0 0.0
  %3486 = vmatpush1.msra.mxu0 0.0
  %3487 = vmatprep.subr.mxu0 0.0
  %3488 = vmatpush1.msra.mxu0 0.0
  %3489 = vmatprep.subr.mxu0 0.0
  %3490 = vmatpush1.msra.mxu0 0.0
  %3491 = vmatprep.subr.mxu0 0.0
  %3492 = vmatpush1.msra.mxu0 0.0
  %3493 = vmatprep.subr.mxu0 0.0
  %3494 = vmatpush1.msra.mxu0 0.0
  %3495 = vmatprep.subr.mxu0 0.0
  %3496 = vmatpush1.msra.mxu0 0.0
  %3497 = vmatprep.subr.mxu0 0.0
  %3498 = vmatpush1.msra.mxu0 0.0
  %3499 = vmatprep.subr.mxu0 0.0
  %3500 = vmatpush1.msra.mxu0 0.0
  %3501 = vmatprep.subr.mxu0 0.0
  %3502 = vmatpush1.msra.mxu0 0.0
  %3503 = vmatprep.subr.mxu0 0.0
  %3504 = vmatpush1.msra.mxu0 0.0
  %3505 = vmatprep.subr.mxu0 0.0
  %3506 = vmatpush1.msra.mxu0 0.0
  %3507 = vmatprep.subr.mxu0 0.0
  %3508 = vmatpush1.msra.mxu0 0.0
  %3509 = vmatprep.mubr.f32.mxu0 0.0
  %v3510 = vand.u32 %v1946, 4294901760
  %3511 = vmatmul.mubr.f32.gmra.mrb[0].mxu0 %v3510
  %v3512 = vpop.f32.mrb[0].mxu0
  %v3513 = vadd.f32 %v3146, %v3512
  %v3514 = vpop.f32.mrb[0].mxu0
  %3515 = vmatprep.mubr.f32.mxu0 0.0
  %v3516 = vand.u32 %v1947, 4294901760
  %3517 = vmatmul.mubr.f32.gmra.mrb[0].mxu0 %v3516
  %v3518 = vpop.f32.mrb[0].mxu0
  %v3519 = vadd.f32 %v3154, %v3518
  %v3520 = vpop.f32.mrb[0].mxu0
  %3521 = vmatprep.mubr.f32.mxu0 0.0
  %v3522 = vand.u32 %v1948, 4294901760
  %3523 = vmatmul.mubr.f32.gmra.mrb[0].mxu0 %v3522
  %v3524 = vpop.f32.mrb[0].mxu0
  %v3525 = vadd.f32 %v3162, %v3524
  %v3526 = vpop.f32.mrb[0].mxu0
  %3527 = vmatprep.mubr.f32.mxu0 0.0
  %v3528 = vand.u32 %v1949, 4294901760
  %3529 = vmatmul.mubr.f32.gmra.mrb[0].mxu0 %v3528
  %v3530 = vpop.f32.mrb[0].mxu0
  %v3531 = vadd.f32 %v3170, %v3530
  %v3532 = vpop.f32.mrb[0].mxu0
  %3533 = vmatprep.mubr.f32.mxu0 0.0
  %v3534 = vand.u32 %v1950, 4294901760
  %3535 = vmatmul.mubr.f32.gmra.mrb[0].mxu0 %v3534
  %v3536 = vpop.f32.mrb[0].mxu0
  %v3537 = vadd.f32 %v3178, %v3536
  %v3538 = vpop.f32.mrb[0].mxu0
  %3539 = vmatprep.mubr.f32.mxu0 0.0
  %v3540 = vand.u32 %v1951, 4294901760
  %3541 = vmatmul.mubr.f32.gmra.mrb[0].mxu0 %v3540
  %v3542 = vpop.f32.mrb[0].mxu0
  %v3543 = vadd.f32 %v3186, %v3542
  %v3544 = vpop.f32.mrb[0].mxu0
  %3545 = vmatprep.mubr.f32.mxu0 0.0
  %v3546 = vand.u32 %v1952, 4294901760
  %3547 = vmatmul.mubr.f32.gmra.mrb[0].mxu0 %v3546
  %v3548 = vpop.f32.mrb[0].mxu0
  %v3549 = vadd.f32 %v3194, %v3548
  %v3550 = vpop.f32.mrb[0].mxu0
  %3551 = vmatprep.mubr.f32.mxu0 0.0
  %v3552 = vand.u32 %v1953, 4294901760
  %3553 = vmatmul.mubr.f32.gmra.mrb[0].mxu0 %v3552
  %v3554 = vpop.f32.mrb[0].mxu0
  %v3555 = vadd.f32 %v3202, %v3554
  %v3556 = vpop.f32.mrb[0].mxu0
  %3557 = vmatprep.mubr.f32.mxu0 0.0
  %v3558 = vand.u32 %v1954, 4294901760
  %3559 = vmatmul.mubr.f32.gmra.mrb[0].mxu0 %v3558
  %v3560 = vpop.f32.mrb[0].mxu0
  %v3561 = vadd.f32 %v3210, %v3560
  %v3562 = vpop.f32.mrb[0].mxu0
  %3563 = vmatprep.mubr.f32.mxu0 0.0
  %v3564 = vand.u32 %v1955, 4294901760
  %3565 = vmatmul.mubr.f32.gmra.mrb[0].mxu0 %v3564
  %v3566 = vpop.f32.mrb[0].mxu0
  %v3567 = vadd.f32 %v3218, %v3566
  %v3568 = vpop.f32.mrb[0].mxu0
  %3569 = vmatprep.mubr.f32.mxu0 0.0
  %v3570 = vand.u32 %v1956, 4294901760
  %3571 = vmatmul.mubr.f32.gmra.mrb[0].mxu0 %v3570
  %v3572 = vpop.f32.mrb[0].mxu0
  %v3573 = vadd.f32 %v3226, %v3572
  %v3574 = vpop.f32.mrb[0].mxu0
  %3575 = vmatprep.mubr.f32.mxu0 0.0
  %v3576 = vand.u32 %v1957, 4294901760
  %3577 = vmatmul.mubr.f32.gmra.mrb[0].mxu0 %v3576
  %v3578 = vpop.f32.mrb[0].mxu0
  %v3579 = vadd.f32 %v3234, %v3578
  %v3580 = vpop.f32.mrb[0].mxu0
  %3581 = vmatprep.mubr.f32.mxu0 0.0
  %v3582 = vand.u32 %v1958, 4294901760
  %3583 = vmatmul.mubr.f32.gmra.mrb[0].mxu0 %v3582
  %v3584 = vpop.f32.mrb[0].mxu0
  %v3585 = vadd.f32 %v3242, %v3584
  %v3586 = vpop.f32.mrb[0].mxu0
  %3587 = vmatprep.mubr.f32.mxu0 0.0
  %v3588 = vand.u32 %v1959, 4294901760
  %3589 = vmatmul.mubr.f32.gmra.mrb[0].mxu0 %v3588
  %v3590 = vpop.f32.mrb[0].mxu0
  %v3591 = vadd.f32 %v3250, %v3590
  %v3592 = vpop.f32.mrb[0].mxu0
  %3593 = vmatprep.mubr.f32.mxu0 0.0
  %v3594 = vand.u32 %v1960, 4294901760
  %3595 = vmatmul.mubr.f32.gmra.mrb[0].mxu0 %v3594
  %v3596 = vpop.f32.mrb[0].mxu0
  %v3597 = vadd.f32 %v3258, %v3596
  %v3598 = vpop.f32.mrb[0].mxu0
  %3599 = vmatprep.mubr.f32.mxu0 0.0
  %v3600 = vand.u32 %v1961, 4294901760
  %3601 = vmatmul.mubr.f32.gmra.mrb[0].mxu0 %v3600
  %v3602 = vpop.f32.mrb[0].mxu0
  %v3603 = vadd.f32 %v3266, %v3602
  %v3604 = vpop.f32.mrb[0].mxu0
  %3605 = vmatprep.mubr.f32.mxu0 0.0
  %v3606 = vand.u32 %v1962, 4294901760
  %3607 = vmatmul.mubr.f32.gmra.mrb[0].mxu0 %v3606
  %v3608 = vpop.f32.mrb[0].mxu0
  %v3609 = vadd.f32 %v3274, %v3608
  %v3610 = vpop.f32.mrb[0].mxu0
  %3611 = vmatprep.mubr.f32.mxu0 0.0
  %v3612 = vand.u32 %v1963, 4294901760
  %3613 = vmatmul.mubr.f32.gmra.mrb[0].mxu0 %v3612
  %v3614 = vpop.f32.mrb[0].mxu0
  %v3615 = vadd.f32 %v3282, %v3614
  %v3616 = vpop.f32.mrb[0].mxu0
  %3617 = vmatprep.mubr.f32.mxu0 0.0
  %v3618 = vand.u32 %v1964, 4294901760
  %3619 = vmatmul.mubr.f32.gmra.mrb[0].mxu0 %v3618
  %v3620 = vpop.f32.mrb[0].mxu0
  %v3621 = vadd.f32 %v3290, %v3620
  %v3622 = vpop.f32.mrb[0].mxu0
  %3623 = vmatprep.mubr.f32.mxu0 0.0
  %v3624 = vand.u32 %v1965, 4294901760
  %3625 = vmatmul.mubr.f32.gmra.mrb[0].mxu0 %v3624
  %v3626 = vpop.f32.mrb[0].mxu0
  %v3627 = vadd.f32 %v3298, %v3626
  %v3628 = vpop.f32.mrb[0].mxu0
  %3629 = vmatprep.mubr.f32.mxu0 0.0
  %v3630 = vand.u32 %v1966, 4294901760
  %3631 = vmatmul.mubr.f32.gmra.mrb[0].mxu0 %v3630
  %v3632 = vpop.f32.mrb[0].mxu0
  %v3633 = vadd.f32 %v3306, %v3632
  %v3634 = vpop.f32.mrb[0].mxu0
  %3635 = vmatprep.mubr.f32.mxu0 0.0
  %v3636 = vand.u32 %v1967, 4294901760
  %3637 = vmatmul.mubr.f32.gmra.mrb[0].mxu0 %v3636
  %v3638 = vpop.f32.mrb[0].mxu0
  %v3639 = vadd.f32 %v3314, %v3638
  %v3640 = vpop.f32.mrb[0].mxu0
  %3641 = vmatprep.mubr.f32.mxu0 0.0
  %v3642 = vand.u32 %v1968, 4294901760
  %3643 = vmatmul.mubr.f32.gmra.mrb[0].mxu0 %v3642
  %v3644 = vpop.f32.mrb[0].mxu0
  %v3645 = vadd.f32 %v3322, %v3644
  %v3646 = vpop.f32.mrb[0].mxu0
  %3647 = vmatprep.mubr.f32.mxu0 0.0
  %v3648 = vand.u32 %v1969, 4294901760
  %3649 = vmatmul.mubr.f32.gmra.mrb[0].mxu0 %v3648
  %v3650 = vpop.f32.mrb[0].mxu0
  %v3651 = vadd.f32 %v3330, %v3650
  %v3652 = vpop.f32.mrb[0].mxu0
  %3653 = vmatprep.mubr.f32.mxu0 0.0
  %v3654 = vand.u32 %v1970, 4294901760
  %3655 = vmatmul.mubr.f32.gmra.mrb[0].mxu0 %v3654
  %v3656 = vpop.f32.mrb[0].mxu0
  %v3657 = vadd.f32 %v3338, %v3656
  %v3658 = vpop.f32.mrb[0].mxu0
  %3659 = vmatprep.mubr.f32.mxu0 0.0
  %v3660 = vand.u32 %v1971, 4294901760
  %3661 = vmatmul.mubr.f32.gmra.mrb[0].mxu0 %v3660
  %v3662 = vpop.f32.mrb[0].mxu0
  %v3663 = vadd.f32 %v3346, %v3662
  %v3664 = vpop.f32.mrb[0].mxu0
  %3665 = vmatprep.mubr.f32.mxu0 0.0
  %v3666 = vand.u32 %v1972, 4294901760
  %3667 = vmatmul.mubr.f32.gmra.mrb[0].mxu0 %v3666
  %v3668 = vpop.f32.mrb[0].mxu0
  %v3669 = vadd.f32 %v3354, %v3668
  %v3670 = vpop.f32.mrb[0].mxu0
  %3671 = vmatprep.mubr.f32.mxu0 0.0
  %v3672 = vand.u32 %v1973, 4294901760
  %3673 = vmatmul.mubr.f32.gmra.mrb[0].mxu0 %v3672
  %v3674 = vpop.f32.mrb[0].mxu0
  %v3675 = vadd.f32 %v3362, %v3674
  %v3676 = vpop.f32.mrb[0].mxu0
  %3677 = vmatprep.mubr.f32.mxu0 0.0
  %v3678 = vand.u32 %v1974, 4294901760
  %3679 = vmatmul.mubr.f32.gmra.mrb[0].mxu0 %v3678
  %v3680 = vpop.f32.mrb[0].mxu0
  %v3681 = vadd.f32 %v3370, %v3680
  %v3682 = vpop.f32.mrb[0].mxu0
  %3683 = vmatprep.mubr.f32.mxu0 0.0
  %v3684 = vand.u32 %v1975, 4294901760
  %3685 = vmatmul.mubr.f32.gmra.mrb[0].mxu0 %v3684
  %v3686 = vpop.f32.mrb[0].mxu0
  %v3687 = vadd.f32 %v3378, %v3686
  %v3688 = vpop.f32.mrb[0].mxu0
  %3689 = vmatprep.mubr.f32.mxu0 0.0
  %v3690 = vand.u32 %v1976, 4294901760
  %3691 = vmatmul.mubr.f32.gmra.mrb[0].mxu0 %v3690
  %v3692 = vpop.f32.mrb[0].mxu0
  %v3693 = vadd.f32 %v3386, %v3692
  %v3694 = vpop.f32.mrb[0].mxu0
  %3695 = vmatprep.mubr.f32.mxu0 0.0
  %v3696 = vand.u32 %v1977, 4294901760
  %3697 = vmatmul.mubr.f32.gmra.mrb[0].mxu0 %v3696
  %v3698 = vpop.f32.mrb[0].mxu0
  %v3699 = vadd.f32 %v3394, %v3698
  %v3700 = vpop.f32.mrb[0].mxu0
  %3701 = vdwg.mxu0
  %3702 = vmatprep.subr.mxu0 0.0
  %v3703 = vand.u32 %v1978, 4294901760
  %3704 = vmatpush1.msra.mxu0 %v3703
  %3705 = vmatprep.subr.mxu0 0.0
  %v3706 = vand.u32 %v1979, 4294901760
  %3707 = vmatpush1.msra.mxu0 %v3706
  %3708 = vmatprep.subr.mxu0 0.0
  %v3709 = vand.u32 %v1980, 4294901760
  %3710 = vmatpush1.msra.mxu0 %v3709
  %3711 = vmatprep.subr.mxu0 0.0
  %v3712 = vand.u32 %v1981, 4294901760
  %3713 = vmatpush1.msra.mxu0 %v3712
  %3714 = vmatprep.subr.mxu0 0.0
  %v3715 = vand.u32 %v1982, 4294901760
  %3716 = vmatpush1.msra.mxu0 %v3715
  %3717 = vmatprep.subr.mxu0 0.0
  %v3718 = vand.u32 %v1983, 4294901760
  %3719 = vmatpush1.msra.mxu0 %v3718
  %3720 = vmatprep.subr.mxu0 0.0
  %v3721 = vand.u32 %v1984, 4294901760
  %3722 = vmatpush1.msra.mxu0 %v3721
  %3723 = vmatprep.subr.mxu0 0.0
  %v3724 = vand.u32 %v1985, 4294901760
  %3725 = vmatpush1.msra.mxu0 %v3724
  %3726 = vmatprep.subr.mxu0 0.0
  %v3727 = vand.u32 %v1986, 4294901760
  %3728 = vmatpush1.msra.mxu0 %v3727
  %3729 = vmatprep.subr.mxu0 0.0
  %v3730 = vand.u32 %v1987, 4294901760
  %3731 = vmatpush1.msra.mxu0 %v3730
  %3732 = vmatprep.subr.mxu0 0.0
  %v3733 = vand.u32 %v1988, 4294901760
  %3734 = vmatpush1.msra.mxu0 %v3733
  %3735 = vmatprep.subr.mxu0 0.0
  %v3736 = vand.u32 %v1989, 4294901760
  %3737 = vmatpush1.msra.mxu0 %v3736
  %3738 = vmatprep.subr.mxu0 0.0
  %v3739 = vand.u32 %v1990, 4294901760
  %3740 = vmatpush1.msra.mxu0 %v3739
  %3741 = vmatprep.subr.mxu0 0.0
  %v3742 = vand.u32 %v1991, 4294901760
  %3743 = vmatpush1.msra.mxu0 %v3742
  %3744 = vmatprep.subr.mxu0 0.0
  %v3745 = vand.u32 %v1992, 4294901760
  %3746 = vmatpush1.msra.mxu0 %v3745
  %3747 = vmatprep.subr.mxu0 0.0
  %v3748 = vand.u32 %v1993, 4294901760
  %3749 = vmatpush1.msra.mxu0 %v3748
  %3750 = vmatprep.subr.mxu0 0.0
  %3751 = vmatpush1.msra.mxu0 0.0
  %3752 = vmatprep.subr.mxu0 0.0
  %3753 = vmatpush1.msra.mxu0 0.0
  %3754 = vmatprep.subr.mxu0 0.0
  %3755 = vmatpush1.msra.mxu0 0.0
  %3756 = vmatprep.subr.mxu0 0.0
  %3757 = vmatpush1.msra.mxu0 0.0
  %3758 = vmatprep.subr.mxu0 0.0
  %3759 = vmatpush1.msra.mxu0 0.0
  %3760 = vmatprep.subr.mxu0 0.0
  %3761 = vmatpush1.msra.mxu0 0.0
  %3762 = vmatprep.subr.mxu0 0.0
  %3763 = vmatpush1.msra.mxu0 0.0
  %3764 = vmatprep.subr.mxu0 0.0
  %3765 = vmatpush1.msra.mxu0 0.0
  %3766 = vmatprep.subr.mxu0 0.0
  %3767 = vmatpush1.msra.mxu0 0.0
  %3768 = vmatprep.subr.mxu0 0.0
  %3769 = vmatpush1.msra.mxu0 0.0
  %3770 = vmatprep.subr.mxu0 0.0
  %3771 = vmatpush1.msra.mxu0 0.0
  %3772 = vmatprep.subr.mxu0 0.0
  %3773 = vmatpush1.msra.mxu0 0.0
  %3774 = vmatprep.subr.mxu0 0.0
  %3775 = vmatpush1.msra.mxu0 0.0
  %3776 = vmatprep.subr.mxu0 0.0
  %3777 = vmatpush1.msra.mxu0 0.0
  %3778 = vmatprep.subr.mxu0 0.0
  %3779 = vmatpush1.msra.mxu0 0.0
  %3780 = vmatprep.subr.mxu0 0.0
  %3781 = vmatpush1.msra.mxu0 0.0
  %3782 = vmatprep.mubr.f32.mxu0 0.0
  %v3783 = vand.u32 %v1946, 4294901760
  %3784 = vmatmul.mubr.f32.gmra.mrb[0].mxu0 %v3783
  %v3785 = vpop.f32.mrb[0].mxu0
  %v3786 = vadd.f32 %v3513, %v3785
  %v3787 = vpop.f32.mrb[0].mxu0
  %3788 = vmatprep.mubr.f32.mxu0 0.0
  %v3789 = vand.u32 %v1947, 4294901760
  %3790 = vmatmul.mubr.f32.gmra.mrb[0].mxu0 %v3789
  %v3791 = vpop.f32.mrb[0].mxu0
  %v3792 = vadd.f32 %v3519, %v3791
  %v3793 = vpop.f32.mrb[0].mxu0
  %3794 = vmatprep.mubr.f32.mxu0 0.0
  %v3795 = vand.u32 %v1948, 4294901760
  %3796 = vmatmul.mubr.f32.gmra.mrb[0].mxu0 %v3795
  %v3797 = vpop.f32.mrb[0].mxu0
  %v3798 = vadd.f32 %v3525, %v3797
  %v3799 = vpop.f32.mrb[0].mxu0
  %3800 = vmatprep.mubr.f32.mxu0 0.0
  %v3801 = vand.u32 %v1949, 4294901760
  %3802 = vmatmul.mubr.f32.gmra.mrb[0].mxu0 %v3801
  %v3803 = vpop.f32.mrb[0].mxu0
  %v3804 = vadd.f32 %v3531, %v3803
  %v3805 = vpop.f32.mrb[0].mxu0
  %3806 = vmatprep.mubr.f32.mxu0 0.0
  %v3807 = vand.u32 %v1950, 4294901760
  %3808 = vmatmul.mubr.f32.gmra.mrb[0].mxu0 %v3807
  %v3809 = vpop.f32.mrb[0].mxu0
  %v3810 = vadd.f32 %v3537, %v3809
  %v3811 = vpop.f32.mrb[0].mxu0
  %3812 = vmatprep.mubr.f32.mxu0 0.0
  %v3813 = vand.u32 %v1951, 4294901760
  %3814 = vmatmul.mubr.f32.gmra.mrb[0].mxu0 %v3813
  %v3815 = vpop.f32.mrb[0].mxu0
  %v3816 = vadd.f32 %v3543, %v3815
  %v3817 = vpop.f32.mrb[0].mxu0
  %3818 = vmatprep.mubr.f32.mxu0 0.0
  %v3819 = vand.u32 %v1952, 4294901760
  %3820 = vmatmul.mubr.f32.gmra.mrb[0].mxu0 %v3819
  %v3821 = vpop.f32.mrb[0].mxu0
  %v3822 = vadd.f32 %v3549, %v3821
  %v3823 = vpop.f32.mrb[0].mxu0
  %3824 = vmatprep.mubr.f32.mxu0 0.0
  %v3825 = vand.u32 %v1953, 4294901760
  %3826 = vmatmul.mubr.f32.gmra.mrb[0].mxu0 %v3825
  %v3827 = vpop.f32.mrb[0].mxu0
  %v3828 = vadd.f32 %v3555, %v3827
  %v3829 = vpop.f32.mrb[0].mxu0
  %3830 = vmatprep.mubr.f32.mxu0 0.0
  %v3831 = vand.u32 %v1954, 4294901760
  %3832 = vmatmul.mubr.f32.gmra.mrb[0].mxu0 %v3831
  %v3833 = vpop.f32.mrb[0].mxu0
  %v3834 = vadd.f32 %v3561, %v3833
  %v3835 = vpop.f32.mrb[0].mxu0
  %3836 = vmatprep.mubr.f32.mxu0 0.0
  %v3837 = vand.u32 %v1955, 4294901760
  %3838 = vmatmul.mubr.f32.gmra.mrb[0].mxu0 %v3837
  %v3839 = vpop.f32.mrb[0].mxu0
  %v3840 = vadd.f32 %v3567, %v3839
  %v3841 = vpop.f32.mrb[0].mxu0
  %3842 = vmatprep.mubr.f32.mxu0 0.0
  %v3843 = vand.u32 %v1956, 4294901760
  %3844 = vmatmul.mubr.f32.gmra.mrb[0].mxu0 %v3843
  %v3845 = vpop.f32.mrb[0].mxu0
  %v3846 = vadd.f32 %v3573, %v3845
  %v3847 = vpop.f32.mrb[0].mxu0
  %3848 = vmatprep.mubr.f32.mxu0 0.0
  %v3849 = vand.u32 %v1957, 4294901760
  %3850 = vmatmul.mubr.f32.gmra.mrb[0].mxu0 %v3849
  %v3851 = vpop.f32.mrb[0].mxu0
  %v3852 = vadd.f32 %v3579, %v3851
  %v3853 = vpop.f32.mrb[0].mxu0
  %3854 = vmatprep.mubr.f32.mxu0 0.0
  %v3855 = vand.u32 %v1958, 4294901760
  %3856 = vmatmul.mubr.f32.gmra.mrb[0].mxu0 %v3855
  %v3857 = vpop.f32.mrb[0].mxu0
  %v3858 = vadd.f32 %v3585, %v3857
  %v3859 = vpop.f32.mrb[0].mxu0
  %3860 = vmatprep.mubr.f32.mxu0 0.0
  %v3861 = vand.u32 %v1959, 4294901760
  %3862 = vmatmul.mubr.f32.gmra.mrb[0].mxu0 %v3861
  %v3863 = vpop.f32.mrb[0].mxu0
  %v3864 = vadd.f32 %v3591, %v3863
  %v3865 = vpop.f32.mrb[0].mxu0
  %3866 = vmatprep.mubr.f32.mxu0 0.0
  %v3867 = vand.u32 %v1960, 4294901760
  %3868 = vmatmul.mubr.f32.gmra.mrb[0].mxu0 %v3867
  %v3869 = vpop.f32.mrb[0].mxu0
  %v3870 = vadd.f32 %v3597, %v3869
  %v3871 = vpop.f32.mrb[0].mxu0
  %3872 = vmatprep.mubr.f32.mxu0 0.0
  %v3873 = vand.u32 %v1961, 4294901760
  %3874 = vmatmul.mubr.f32.gmra.mrb[0].mxu0 %v3873
  %v3875 = vpop.f32.mrb[0].mxu0
  %v3876 = vadd.f32 %v3603, %v3875
  %v3877 = vpop.f32.mrb[0].mxu0
  %3878 = vmatprep.mubr.f32.mxu0 0.0
  %v3879 = vand.u32 %v1962, 4294901760
  %3880 = vmatmul.mubr.f32.gmra.mrb[0].mxu0 %v3879
  %v3881 = vpop.f32.mrb[0].mxu0
  %v3882 = vadd.f32 %v3609, %v3881
  %v3883 = vpop.f32.mrb[0].mxu0
  %3884 = vmatprep.mubr.f32.mxu0 0.0
  %v3885 = vand.u32 %v1963, 4294901760
  %3886 = vmatmul.mubr.f32.gmra.mrb[0].mxu0 %v3885
  %v3887 = vpop.f32.mrb[0].mxu0
  %v3888 = vadd.f32 %v3615, %v3887
  %v3889 = vpop.f32.mrb[0].mxu0
  %3890 = vmatprep.mubr.f32.mxu0 0.0
  %v3891 = vand.u32 %v1964, 4294901760
  %3892 = vmatmul.mubr.f32.gmra.mrb[0].mxu0 %v3891
  %v3893 = vpop.f32.mrb[0].mxu0
  %v3894 = vadd.f32 %v3621, %v3893
  %v3895 = vpop.f32.mrb[0].mxu0
  %3896 = vmatprep.mubr.f32.mxu0 0.0
  %v3897 = vand.u32 %v1965, 4294901760
  %3898 = vmatmul.mubr.f32.gmra.mrb[0].mxu0 %v3897
  %v3899 = vpop.f32.mrb[0].mxu0
  %v3900 = vadd.f32 %v3627, %v3899
  %v3901 = vpop.f32.mrb[0].mxu0
  %3902 = vmatprep.mubr.f32.mxu0 0.0
  %v3903 = vand.u32 %v1966, 4294901760
  %3904 = vmatmul.mubr.f32.gmra.mrb[0].mxu0 %v3903
  %v3905 = vpop.f32.mrb[0].mxu0
  %v3906 = vadd.f32 %v3633, %v3905
  %v3907 = vpop.f32.mrb[0].mxu0
  %3908 = vmatprep.mubr.f32.mxu0 0.0
  %v3909 = vand.u32 %v1967, 4294901760
  %3910 = vmatmul.mubr.f32.gmra.mrb[0].mxu0 %v3909
  %v3911 = vpop.f32.mrb[0].mxu0
  %v3912 = vadd.f32 %v3639, %v3911
  %v3913 = vpop.f32.mrb[0].mxu0
  %3914 = vmatprep.mubr.f32.mxu0 0.0
  %v3915 = vand.u32 %v1968, 4294901760
  %3916 = vmatmul.mubr.f32.gmra.mrb[0].mxu0 %v3915
  %v3917 = vpop.f32.mrb[0].mxu0
  %v3918 = vadd.f32 %v3645, %v3917
  %v3919 = vpop.f32.mrb[0].mxu0
  %3920 = vmatprep.mubr.f32.mxu0 0.0
  %v3921 = vand.u32 %v1969, 4294901760
  %3922 = vmatmul.mubr.f32.gmra.mrb[0].mxu0 %v3921
  %v3923 = vpop.f32.mrb[0].mxu0
  %v3924 = vadd.f32 %v3651, %v3923
  %v3925 = vpop.f32.mrb[0].mxu0
  %3926 = vmatprep.mubr.f32.mxu0 0.0
  %v3927 = vand.u32 %v1970, 4294901760
  %3928 = vmatmul.mubr.f32.gmra.mrb[0].mxu0 %v3927
  %v3929 = vpop.f32.mrb[0].mxu0
  %v3930 = vadd.f32 %v3657, %v3929
  %v3931 = vpop.f32.mrb[0].mxu0
  %3932 = vmatprep.mubr.f32.mxu0 0.0
  %v3933 = vand.u32 %v1971, 4294901760
  %3934 = vmatmul.mubr.f32.gmra.mrb[0].mxu0 %v3933
  %v3935 = vpop.f32.mrb[0].mxu0
  %v3936 = vadd.f32 %v3663, %v3935
  %v3937 = vpop.f32.mrb[0].mxu0
  %3938 = vmatprep.mubr.f32.mxu0 0.0
  %v3939 = vand.u32 %v1972, 4294901760
  %3940 = vmatmul.mubr.f32.gmra.mrb[0].mxu0 %v3939
  %v3941 = vpop.f32.mrb[0].mxu0
  %v3942 = vadd.f32 %v3669, %v3941
  %v3943 = vpop.f32.mrb[0].mxu0
  %3944 = vmatprep.mubr.f32.mxu0 0.0
  %v3945 = vand.u32 %v1973, 4294901760
  %3946 = vmatmul.mubr.f32.gmra.mrb[0].mxu0 %v3945
  %v3947 = vpop.f32.mrb[0].mxu0
  %v3948 = vadd.f32 %v3675, %v3947
  %v3949 = vpop.f32.mrb[0].mxu0
  %3950 = vmatprep.mubr.f32.mxu0 0.0
  %v3951 = vand.u32 %v1974, 4294901760
  %3952 = vmatmul.mubr.f32.gmra.mrb[0].mxu0 %v3951
  %v3953 = vpop.f32.mrb[0].mxu0
  %v3954 = vadd.f32 %v3681, %v3953
  %v3955 = vpop.f32.mrb[0].mxu0
  %3956 = vmatprep.mubr.f32.mxu0 0.0
  %v3957 = vand.u32 %v1975, 4294901760
  %3958 = vmatmul.mubr.f32.gmra.mrb[0].mxu0 %v3957
  %v3959 = vpop.f32.mrb[0].mxu0
  %v3960 = vadd.f32 %v3687, %v3959
  %v3961 = vpop.f32.mrb[0].mxu0
  %3962 = vmatprep.mubr.f32.mxu0 0.0
  %v3963 = vand.u32 %v1976, 4294901760
  %3964 = vmatmul.mubr.f32.gmra.mrb[0].mxu0 %v3963
  %v3965 = vpop.f32.mrb[0].mxu0
  %v3966 = vadd.f32 %v3693, %v3965
  %v3967 = vpop.f32.mrb[0].mxu0
  %3968 = vmatprep.mubr.f32.mxu0 0.0
  %v3969 = vand.u32 %v1977, 4294901760
  %3970 = vmatmul.mubr.f32.gmra.mrb[0].mxu0 %v3969
  %v3971 = vpop.f32.mrb[0].mxu0
  %v3972 = vadd.f32 %v3699, %v3971
  %v3973 = vpop.f32.mrb[0].mxu0
  %3974 = vdwg.mxu0
  %v3975 = vmax.f32 %v3786, 0.0
  %v3976 = vmax.f32 %v3792, 0.0
  %v3977 = vmax.f32 %v3798, 0.0
  %v3978 = vmax.f32 %v3804, 0.0
  %v3979 = vmax.f32 %v3810, 0.0
  %v3980 = vmax.f32 %v3816, 0.0
  %v3981 = vmax.f32 %v3822, 0.0
  %v3982 = vmax.f32 %v3828, 0.0
  %v3983 = vmax.f32 %v3834, 0.0
  %v3984 = vmax.f32 %v3840, 0.0
  %v3985 = vmax.f32 %v3846, 0.0
  %v3986 = vmax.f32 %v3852, 0.0
  %v3987 = vmax.f32 %v3858, 0.0
  %v3988 = vmax.f32 %v3864, 0.0
  %v3989 = vmax.f32 %v3870, 0.0
  %v3990 = vmax.f32 %v3876, 0.0
  %v3991 = vmax.f32 %v3882, 0.0
  %v3992 = vmax.f32 %v3888, 0.0
  %v3993 = vmax.f32 %v3894, 0.0
  %v3994 = vmax.f32 %v3900, 0.0
  %v3995 = vmax.f32 %v3906, 0.0
  %v3996 = vmax.f32 %v3912, 0.0
  %v3997 = vmax.f32 %v3918, 0.0
  %v3998 = vmax.f32 %v3924, 0.0
  %v3999 = vmax.f32 %v3930, 0.0
  %v4000 = vmax.f32 %v3936, 0.0
  %v4001 = vmax.f32 %v3942, 0.0
  %v4002 = vmax.f32 %v3948, 0.0
  %v4003 = vmax.f32 %v3954, 0.0
  %v4004 = vmax.f32 %v3960, 0.0
  %v4005 = vmax.f32 %v3966, 0.0
  %v4006 = vmax.f32 %v3972, 0.0
  %v4007 = vld [vmem:[%s5] sm:$0xff]
  %v4008 = vld [vmem:[%s5 + $0x8] sm:$0xff]
  %v4009 = vld [vmem:[%s5 + $0x10] sm:$0xff]
  %v4010 = vld [vmem:[%s5 + $0x18] sm:$0xff]
  %v4011 = vld [vmem:[%s5 + $0x20] sm:$0xff]
  %v4012 = vld [vmem:[%s5 + $0x28] sm:$0xff]
  %v4013 = vld [vmem:[%s5 + $0x30] sm:$0xff]
  %v4014 = vld [vmem:[%s5 + $0x38] sm:$0xff]
  %v4015 = vld [vmem:[%s5 + $0x40] sm:$0xff]
  %v4016 = vld [vmem:[%s5 + $0x48] sm:$0xff]
  %v4017 = vld [vmem:[%s5 + $0x50] sm:$0xff]
  %v4018 = vld [vmem:[%s5 + $0x58] sm:$0xff]
  %v4019 = vld [vmem:[%s5 + $0x60] sm:$0xff]
  %v4020 = vld [vmem:[%s5 + $0x68] sm:$0xff]
  %v4021 = vld [vmem:[%s5 + $0x70] sm:$0xff]
  %v4022 = vld [vmem:[%s5 + $0x78] sm:$0xff]
  %v4023 = vld [vmem:[%s6] sm:$0x1]
  %v4025 = vlaneseq
  %v4026 = vshrl.u32 %v4025, 7
  %v4027 = vsub.s32 0, %v4026
  %v4028 = vrot.slane %v4023, %v4027
  %4030 = vmatprep.subr.mxu0 0.0
  %v4031 = vand.u32 %v4007, 4294901760
  %4032 = vmatpush1.msra.mxu0 %v4031
  %4033 = vmatprep.subr.mxu0 0.0
  %v4034 = vand.u32 %v4008, 4294901760
  %4035 = vmatpush1.msra.mxu0 %v4034
  %4036 = vmatprep.subr.mxu0 0.0
  %v4037 = vand.u32 %v4009, 4294901760
  %4038 = vmatpush1.msra.mxu0 %v4037
  %4039 = vmatprep.subr.mxu0 0.0
  %v4040 = vand.u32 %v4010, 4294901760
  %4041 = vmatpush1.msra.mxu0 %v4040
  %4042 = vmatprep.subr.mxu0 0.0
  %v4043 = vand.u32 %v4011, 4294901760
  %4044 = vmatpush1.msra.mxu0 %v4043
  %4045 = vmatprep.subr.mxu0 0.0
  %v4046 = vand.u32 %v4012, 4294901760
  %4047 = vmatpush1.msra.mxu0 %v4046
  %4048 = vmatprep.subr.mxu0 0.0
  %v4049 = vand.u32 %v4013, 4294901760
  %4050 = vmatpush1.msra.mxu0 %v4049
  %4051 = vmatprep.subr.mxu0 0.0
  %v4052 = vand.u32 %v4014, 4294901760
  %4053 = vmatpush1.msra.mxu0 %v4052
  %4054 = vmatprep.subr.mxu0 0.0
  %v4055 = vand.u32 %v4015, 4294901760
  %4056 = vmatpush1.msra.mxu0 %v4055
  %4057 = vmatprep.subr.mxu0 0.0
  %v4058 = vand.u32 %v4016, 4294901760
  %4059 = vmatpush1.msra.mxu0 %v4058
  %4060 = vmatprep.subr.mxu0 0.0
  %v4061 = vand.u32 %v4017, 4294901760
  %4062 = vmatpush1.msra.mxu0 %v4061
  %4063 = vmatprep.subr.mxu0 0.0
  %v4064 = vand.u32 %v4018, 4294901760
  %4065 = vmatpush1.msra.mxu0 %v4064
  %4066 = vmatprep.subr.mxu0 0.0
  %v4067 = vand.u32 %v4019, 4294901760
  %4068 = vmatpush1.msra.mxu0 %v4067
  %4069 = vmatprep.subr.mxu0 0.0
  %v4070 = vand.u32 %v4020, 4294901760
  %4071 = vmatpush1.msra.mxu0 %v4070
  %4072 = vmatprep.subr.mxu0 0.0
  %v4073 = vand.u32 %v4021, 4294901760
  %4074 = vmatpush1.msra.mxu0 %v4073
  %4075 = vmatprep.subr.mxu0 0.0
  %v4076 = vand.u32 %v4022, 4294901760
  %4077 = vmatpush1.msra.mxu0 %v4076
  %4078 = vmatprep.subr.mxu0 0.0
  %4079 = vmatpush1.msra.mxu0 0.0
  %4080 = vmatprep.subr.mxu0 0.0
  %4081 = vmatpush1.msra.mxu0 0.0
  %4082 = vmatprep.subr.mxu0 0.0
  %4083 = vmatpush1.msra.mxu0 0.0
  %4084 = vmatprep.subr.mxu0 0.0
  %4085 = vmatpush1.msra.mxu0 0.0
  %4086 = vmatprep.subr.mxu0 0.0
  %4087 = vmatpush1.msra.mxu0 0.0
  %4088 = vmatprep.subr.mxu0 0.0
  %4089 = vmatpush1.msra.mxu0 0.0
  %4090 = vmatprep.subr.mxu0 0.0
  %4091 = vmatpush1.msra.mxu0 0.0
  %4092 = vmatprep.subr.mxu0 0.0
  %4093 = vmatpush1.msra.mxu0 0.0
  %4094 = vmatprep.subr.mxu0 0.0
  %4095 = vmatpush1.msra.mxu0 0.0
  %4096 = vmatprep.subr.mxu0 0.0
  %4097 = vmatpush1.msra.mxu0 0.0
  %4098 = vmatprep.subr.mxu0 0.0
  %4099 = vmatpush1.msra.mxu0 0.0
  %4100 = vmatprep.subr.mxu0 0.0
  %4101 = vmatpush1.msra.mxu0 0.0
  %4102 = vmatprep.subr.mxu0 0.0
  %4103 = vmatpush1.msra.mxu0 0.0
  %4104 = vmatprep.subr.mxu0 0.0
  %4105 = vmatpush1.msra.mxu0 0.0
  %4106 = vmatprep.subr.mxu0 0.0
  %4107 = vmatpush1.msra.mxu0 0.0
  %4108 = vmatprep.subr.mxu0 0.0
  %4109 = vmatpush1.msra.mxu0 0.0
  %4110 = vmatprep.mubr.f32.mxu0 0.0
  %v4111 = vand.u32 %v3975, 4294901760
  %v4112 = vsub.f32 %v3975, %v4111
  %v4113 = vand.u32 %v4112, 4294901760
  %v4114 = vsub.f32 %v4112, %v4113
  %v4115 = vand.u32 %v4114, 4294901760
  %4116 = vmatmul.mubr.f32.gmra.mrb[0].mxu0 %v4115
  %v4117 = vpop.f32.mrb[0].mxu0
  %v4118 = vadd.f32 %v4028, %v4117
  %v4119 = vpop.f32.mrb[0].mxu0
  %4120 = vmatprep.mubr.f32.mxu0 0.0
  %v4121 = vand.u32 %v3976, 4294901760
  %v4122 = vsub.f32 %v3976, %v4121
  %v4123 = vand.u32 %v4122, 4294901760
  %v4124 = vsub.f32 %v4122, %v4123
  %v4125 = vand.u32 %v4124, 4294901760
  %4126 = vmatmul.mubr.f32.gmra.mrb[0].mxu0 %v4125
  %v4127 = vpop.f32.mrb[0].mxu0
  %v4128 = vadd.f32 %v4028, %v4127
  %v4129 = vpop.f32.mrb[0].mxu0
  %4130 = vmatprep.mubr.f32.mxu0 0.0
  %v4131 = vand.u32 %v3977, 4294901760
  %v4132 = vsub.f32 %v3977, %v4131
  %v4133 = vand.u32 %v4132, 4294901760
  %v4134 = vsub.f32 %v4132, %v4133
  %v4135 = vand.u32 %v4134, 4294901760
  %4136 = vmatmul.mubr.f32.gmra.mrb[0].mxu0 %v4135
  %v4137 = vpop.f32.mrb[0].mxu0
  %v4138 = vadd.f32 %v4028, %v4137
  %v4139 = vpop.f32.mrb[0].mxu0
  %4140 = vmatprep.mubr.f32.mxu0 0.0
  %v4141 = vand.u32 %v3978, 4294901760
  %v4142 = vsub.f32 %v3978, %v4141
  %v4143 = vand.u32 %v4142, 4294901760
  %v4144 = vsub.f32 %v4142, %v4143
  %v4145 = vand.u32 %v4144, 4294901760
  %4146 = vmatmul.mubr.f32.gmra.mrb[0].mxu0 %v4145
  %v4147 = vpop.f32.mrb[0].mxu0
  %v4148 = vadd.f32 %v4028, %v4147
  %v4149 = vpop.f32.mrb[0].mxu0
  %4150 = vmatprep.mubr.f32.mxu0 0.0
  %v4151 = vand.u32 %v3979, 4294901760
  %v4152 = vsub.f32 %v3979, %v4151
  %v4153 = vand.u32 %v4152, 4294901760
  %v4154 = vsub.f32 %v4152, %v4153
  %v4155 = vand.u32 %v4154, 4294901760
  %4156 = vmatmul.mubr.f32.gmra.mrb[0].mxu0 %v4155
  %v4157 = vpop.f32.mrb[0].mxu0
  %v4158 = vadd.f32 %v4028, %v4157
  %v4159 = vpop.f32.mrb[0].mxu0
  %4160 = vmatprep.mubr.f32.mxu0 0.0
  %v4161 = vand.u32 %v3980, 4294901760
  %v4162 = vsub.f32 %v3980, %v4161
  %v4163 = vand.u32 %v4162, 4294901760
  %v4164 = vsub.f32 %v4162, %v4163
  %v4165 = vand.u32 %v4164, 4294901760
  %4166 = vmatmul.mubr.f32.gmra.mrb[0].mxu0 %v4165
  %v4167 = vpop.f32.mrb[0].mxu0
  %v4168 = vadd.f32 %v4028, %v4167
  %v4169 = vpop.f32.mrb[0].mxu0
  %4170 = vmatprep.mubr.f32.mxu0 0.0
  %v4171 = vand.u32 %v3981, 4294901760
  %v4172 = vsub.f32 %v3981, %v4171
  %v4173 = vand.u32 %v4172, 4294901760
  %v4174 = vsub.f32 %v4172, %v4173
  %v4175 = vand.u32 %v4174, 4294901760
  %4176 = vmatmul.mubr.f32.gmra.mrb[0].mxu0 %v4175
  %v4177 = vpop.f32.mrb[0].mxu0
  %v4178 = vadd.f32 %v4028, %v4177
  %v4179 = vpop.f32.mrb[0].mxu0
  %4180 = vmatprep.mubr.f32.mxu0 0.0
  %v4181 = vand.u32 %v3982, 4294901760
  %v4182 = vsub.f32 %v3982, %v4181
  %v4183 = vand.u32 %v4182, 4294901760
  %v4184 = vsub.f32 %v4182, %v4183
  %v4185 = vand.u32 %v4184, 4294901760
  %4186 = vmatmul.mubr.f32.gmra.mrb[0].mxu0 %v4185
  %v4187 = vpop.f32.mrb[0].mxu0
  %v4188 = vadd.f32 %v4028, %v4187
  %v4189 = vpop.f32.mrb[0].mxu0
  %4190 = vmatprep.mubr.f32.mxu0 0.0
  %v4191 = vand.u32 %v3983, 4294901760
  %v4192 = vsub.f32 %v3983, %v4191
  %v4193 = vand.u32 %v4192, 4294901760
  %v4194 = vsub.f32 %v4192, %v4193
  %v4195 = vand.u32 %v4194, 4294901760
  %4196 = vmatmul.mubr.f32.gmra.mrb[0].mxu0 %v4195
  %v4197 = vpop.f32.mrb[0].mxu0
  %v4198 = vadd.f32 %v4028, %v4197
  %v4199 = vpop.f32.mrb[0].mxu0
  %4200 = vmatprep.mubr.f32.mxu0 0.0
  %v4201 = vand.u32 %v3984, 4294901760
  %v4202 = vsub.f32 %v3984, %v4201
  %v4203 = vand.u32 %v4202, 4294901760
  %v4204 = vsub.f32 %v4202, %v4203
  %v4205 = vand.u32 %v4204, 4294901760
  %4206 = vmatmul.mubr.f32.gmra.mrb[0].mxu0 %v4205
  %v4207 = vpop.f32.mrb[0].mxu0
  %v4208 = vadd.f32 %v4028, %v4207
  %v4209 = vpop.f32.mrb[0].mxu0
  %4210 = vmatprep.mubr.f32.mxu0 0.0
  %v4211 = vand.u32 %v3985, 4294901760
  %v4212 = vsub.f32 %v3985, %v4211
  %v4213 = vand.u32 %v4212, 4294901760
  %v4214 = vsub.f32 %v4212, %v4213
  %v4215 = vand.u32 %v4214, 4294901760
  %4216 = vmatmul.mubr.f32.gmra.mrb[0].mxu0 %v4215
  %v4217 = vpop.f32.mrb[0].mxu0
  %v4218 = vadd.f32 %v4028, %v4217
  %v4219 = vpop.f32.mrb[0].mxu0
  %4220 = vmatprep.mubr.f32.mxu0 0.0
  %v4221 = vand.u32 %v3986, 4294901760
  %v4222 = vsub.f32 %v3986, %v4221
  %v4223 = vand.u32 %v4222, 4294901760
  %v4224 = vsub.f32 %v4222, %v4223
  %v4225 = vand.u32 %v4224, 4294901760
  %4226 = vmatmul.mubr.f32.gmra.mrb[0].mxu0 %v4225
  %v4227 = vpop.f32.mrb[0].mxu0
  %v4228 = vadd.f32 %v4028, %v4227
  %v4229 = vpop.f32.mrb[0].mxu0
  %4230 = vmatprep.mubr.f32.mxu0 0.0
  %v4231 = vand.u32 %v3987, 4294901760
  %v4232 = vsub.f32 %v3987, %v4231
  %v4233 = vand.u32 %v4232, 4294901760
  %v4234 = vsub.f32 %v4232, %v4233
  %v4235 = vand.u32 %v4234, 4294901760
  %4236 = vmatmul.mubr.f32.gmra.mrb[0].mxu0 %v4235
  %v4237 = vpop.f32.mrb[0].mxu0
  %v4238 = vadd.f32 %v4028, %v4237
  %v4239 = vpop.f32.mrb[0].mxu0
  %4240 = vmatprep.mubr.f32.mxu0 0.0
  %v4241 = vand.u32 %v3988, 4294901760
  %v4242 = vsub.f32 %v3988, %v4241
  %v4243 = vand.u32 %v4242, 4294901760
  %v4244 = vsub.f32 %v4242, %v4243
  %v4245 = vand.u32 %v4244, 4294901760
  %4246 = vmatmul.mubr.f32.gmra.mrb[0].mxu0 %v4245
  %v4247 = vpop.f32.mrb[0].mxu0
  %v4248 = vadd.f32 %v4028, %v4247
  %v4249 = vpop.f32.mrb[0].mxu0
  %4250 = vmatprep.mubr.f32.mxu0 0.0
  %v4251 = vand.u32 %v3989, 4294901760
  %v4252 = vsub.f32 %v3989, %v4251
  %v4253 = vand.u32 %v4252, 4294901760
  %v4254 = vsub.f32 %v4252, %v4253
  %v4255 = vand.u32 %v4254, 4294901760
  %4256 = vmatmul.mubr.f32.gmra.mrb[0].mxu0 %v4255
  %v4257 = vpop.f32.mrb[0].mxu0
  %v4258 = vadd.f32 %v4028, %v4257
  %v4259 = vpop.f32.mrb[0].mxu0
  %4260 = vmatprep.mubr.f32.mxu0 0.0
  %v4261 = vand.u32 %v3990, 4294901760
  %v4262 = vsub.f32 %v3990, %v4261
  %v4263 = vand.u32 %v4262, 4294901760
  %v4264 = vsub.f32 %v4262, %v4263
  %v4265 = vand.u32 %v4264, 4294901760
  %4266 = vmatmul.mubr.f32.gmra.mrb[0].mxu0 %v4265
  %v4267 = vpop.f32.mrb[0].mxu0
  %v4268 = vadd.f32 %v4028, %v4267
  %v4269 = vpop.f32.mrb[0].mxu0
  %4270 = vmatprep.mubr.f32.mxu0 0.0
  %v4271 = vand.u32 %v3991, 4294901760
  %v4272 = vsub.f32 %v3991, %v4271
  %v4273 = vand.u32 %v4272, 4294901760
  %v4274 = vsub.f32 %v4272, %v4273
  %v4275 = vand.u32 %v4274, 4294901760
  %4276 = vmatmul.mubr.f32.gmra.mrb[0].mxu0 %v4275
  %v4277 = vpop.f32.mrb[0].mxu0
  %v4278 = vadd.f32 %v4028, %v4277
  %v4279 = vpop.f32.mrb[0].mxu0
  %4280 = vmatprep.mubr.f32.mxu0 0.0
  %v4281 = vand.u32 %v3992, 4294901760
  %v4282 = vsub.f32 %v3992, %v4281
  %v4283 = vand.u32 %v4282, 4294901760
  %v4284 = vsub.f32 %v4282, %v4283
  %v4285 = vand.u32 %v4284, 4294901760
  %4286 = vmatmul.mubr.f32.gmra.mrb[0].mxu0 %v4285
  %v4287 = vpop.f32.mrb[0].mxu0
  %v4288 = vadd.f32 %v4028, %v4287
  %v4289 = vpop.f32.mrb[0].mxu0
  %4290 = vmatprep.mubr.f32.mxu0 0.0
  %v4291 = vand.u32 %v3993, 4294901760
  %v4292 = vsub.f32 %v3993, %v4291
  %v4293 = vand.u32 %v4292, 4294901760
  %v4294 = vsub.f32 %v4292, %v4293
  %v4295 = vand.u32 %v4294, 4294901760
  %4296 = vmatmul.mubr.f32.gmra.mrb[0].mxu0 %v4295
  %v4297 = vpop.f32.mrb[0].mxu0
  %v4298 = vadd.f32 %v4028, %v4297
  %v4299 = vpop.f32.mrb[0].mxu0
  %4300 = vmatprep.mubr.f32.mxu0 0.0
  %v4301 = vand.u32 %v3994, 4294901760
  %v4302 = vsub.f32 %v3994, %v4301
  %v4303 = vand.u32 %v4302, 4294901760
  %v4304 = vsub.f32 %v4302, %v4303
  %v4305 = vand.u32 %v4304, 4294901760
  %4306 = vmatmul.mubr.f32.gmra.mrb[0].mxu0 %v4305
  %v4307 = vpop.f32.mrb[0].mxu0
  %v4308 = vadd.f32 %v4028, %v4307
  %v4309 = vpop.f32.mrb[0].mxu0
  %4310 = vmatprep.mubr.f32.mxu0 0.0
  %v4311 = vand.u32 %v3995, 4294901760
  %v4312 = vsub.f32 %v3995, %v4311
  %v4313 = vand.u32 %v4312, 4294901760
  %v4314 = vsub.f32 %v4312, %v4313
  %v4315 = vand.u32 %v4314, 4294901760
  %4316 = vmatmul.mubr.f32.gmra.mrb[0].mxu0 %v4315
  %v4317 = vpop.f32.mrb[0].mxu0
  %v4318 = vadd.f32 %v4028, %v4317
  %v4319 = vpop.f32.mrb[0].mxu0
  %4320 = vmatprep.mubr.f32.mxu0 0.0
  %v4321 = vand.u32 %v3996, 4294901760
  %v4322 = vsub.f32 %v3996, %v4321
  %v4323 = vand.u32 %v4322, 4294901760
  %v4324 = vsub.f32 %v4322, %v4323
  %v4325 = vand.u32 %v4324, 4294901760
  %4326 = vmatmul.mubr.f32.gmra.mrb[0].mxu0 %v4325
  %v4327 = vpop.f32.mrb[0].mxu0
  %v4328 = vadd.f32 %v4028, %v4327
  %v4329 = vpop.f32.mrb[0].mxu0
  %4330 = vmatprep.mubr.f32.mxu0 0.0
  %v4331 = vand.u32 %v3997, 4294901760
  %v4332 = vsub.f32 %v3997, %v4331
  %v4333 = vand.u32 %v4332, 4294901760
  %v4334 = vsub.f32 %v4332, %v4333
  %v4335 = vand.u32 %v4334, 4294901760
  %4336 = vmatmul.mubr.f32.gmra.mrb[0].mxu0 %v4335
  %v4337 = vpop.f32.mrb[0].mxu0
  %v4338 = vadd.f32 %v4028, %v4337
  %v4339 = vpop.f32.mrb[0].mxu0
  %4340 = vmatprep.mubr.f32.mxu0 0.0
  %v4341 = vand.u32 %v3998, 4294901760
  %v4342 = vsub.f32 %v3998, %v4341
  %v4343 = vand.u32 %v4342, 4294901760
  %v4344 = vsub.f32 %v4342, %v4343
  %v4345 = vand.u32 %v4344, 4294901760
  %4346 = vmatmul.mubr.f32.gmra.mrb[0].mxu0 %v4345
  %v4347 = vpop.f32.mrb[0].mxu0
  %v4348 = vadd.f32 %v4028, %v4347
  %v4349 = vpop.f32.mrb[0].mxu0
  %4350 = vmatprep.mubr.f32.mxu0 0.0
  %v4351 = vand.u32 %v3999, 4294901760
  %v4352 = vsub.f32 %v3999, %v4351
  %v4353 = vand.u32 %v4352, 4294901760
  %v4354 = vsub.f32 %v4352, %v4353
  %v4355 = vand.u32 %v4354, 4294901760
  %4356 = vmatmul.mubr.f32.gmra.mrb[0].mxu0 %v4355
  %v4357 = vpop.f32.mrb[0].mxu0
  %v4358 = vadd.f32 %v4028, %v4357
  %v4359 = vpop.f32.mrb[0].mxu0
  %4360 = vmatprep.mubr.f32.mxu0 0.0
  %v4361 = vand.u32 %v4000, 4294901760
  %v4362 = vsub.f32 %v4000, %v4361
  %v4363 = vand.u32 %v4362, 4294901760
  %v4364 = vsub.f32 %v4362, %v4363
  %v4365 = vand.u32 %v4364, 4294901760
  %4366 = vmatmul.mubr.f32.gmra.mrb[0].mxu0 %v4365
  %v4367 = vpop.f32.mrb[0].mxu0
  %v4368 = vadd.f32 %v4028, %v4367
  %v4369 = vpop.f32.mrb[0].mxu0
  %4370 = vmatprep.mubr.f32.mxu0 0.0
  %v4371 = vand.u32 %v4001, 4294901760
  %v4372 = vsub.f32 %v4001, %v4371
  %v4373 = vand.u32 %v4372, 4294901760
  %v4374 = vsub.f32 %v4372, %v4373
  %v4375 = vand.u32 %v4374, 4294901760
  %4376 = vmatmul.mubr.f32.gmra.mrb[0].mxu0 %v4375
  %v4377 = vpop.f32.mrb[0].mxu0
  %v4378 = vadd.f32 %v4028, %v4377
  %v4379 = vpop.f32.mrb[0].mxu0
  %4380 = vmatprep.mubr.f32.mxu0 0.0
  %v4381 = vand.u32 %v4002, 4294901760
  %v4382 = vsub.f32 %v4002, %v4381
  %v4383 = vand.u32 %v4382, 4294901760
  %v4384 = vsub.f32 %v4382, %v4383
  %v4385 = vand.u32 %v4384, 4294901760
  %4386 = vmatmul.mubr.f32.gmra.mrb[0].mxu0 %v4385
  %v4387 = vpop.f32.mrb[0].mxu0
  %v4388 = vadd.f32 %v4028, %v4387
  %v4389 = vpop.f32.mrb[0].mxu0
  %4390 = vmatprep.mubr.f32.mxu0 0.0
  %v4391 = vand.u32 %v4003, 4294901760
  %v4392 = vsub.f32 %v4003, %v4391
  %v4393 = vand.u32 %v4392, 4294901760
  %v4394 = vsub.f32 %v4392, %v4393
  %v4395 = vand.u32 %v4394, 4294901760
  %4396 = vmatmul.mubr.f32.gmra.mrb[0].mxu0 %v4395
  %v4397 = vpop.f32.mrb[0].mxu0
  %v4398 = vadd.f32 %v4028, %v4397
  %v4399 = vpop.f32.mrb[0].mxu0
  %4400 = vmatprep.mubr.f32.mxu0 0.0
  %v4401 = vand.u32 %v4004, 4294901760
  %v4402 = vsub.f32 %v4004, %v4401
  %v4403 = vand.u32 %v4402, 4294901760
  %v4404 = vsub.f32 %v4402, %v4403
  %v4405 = vand.u32 %v4404, 4294901760
  %4406 = vmatmul.mubr.f32.gmra.mrb[0].mxu0 %v4405
  %v4407 = vpop.f32.mrb[0].mxu0
  %v4408 = vadd.f32 %v4028, %v4407
  %v4409 = vpop.f32.mrb[0].mxu0
  %4410 = vmatprep.mubr.f32.mxu0 0.0
  %v4411 = vand.u32 %v4005, 4294901760
  %v4412 = vsub.f32 %v4005, %v4411
  %v4413 = vand.u32 %v4412, 4294901760
  %v4414 = vsub.f32 %v4412, %v4413
  %v4415 = vand.u32 %v4414, 4294901760
  %4416 = vmatmul.mubr.f32.gmra.mrb[0].mxu0 %v4415
  %v4417 = vpop.f32.mrb[0].mxu0
  %v4418 = vadd.f32 %v4028, %v4417
  %v4419 = vpop.f32.mrb[0].mxu0
  %4420 = vmatprep.mubr.f32.mxu0 0.0
  %v4421 = vand.u32 %v4006, 4294901760
  %v4422 = vsub.f32 %v4006, %v4421
  %v4423 = vand.u32 %v4422, 4294901760
  %v4424 = vsub.f32 %v4422, %v4423
  %v4425 = vand.u32 %v4424, 4294901760
  %4426 = vmatmul.mubr.f32.gmra.mrb[0].mxu0 %v4425
  %v4427 = vpop.f32.mrb[0].mxu0
  %v4428 = vadd.f32 %v4028, %v4427
  %v4429 = vpop.f32.mrb[0].mxu0
  %4430 = vdwg.mxu0
  %4431 = vmatprep.subr.mxu0 0.0
  %v4432 = vand.u32 %v4007, 4294901760
  %v4433 = vsub.f32 %v4007, %v4432
  %v4434 = vand.u32 %v4433, 4294901760
  %v4435 = vsub.f32 %v4433, %v4434
  %v4436 = vand.u32 %v4435, 4294901760
  %4437 = vmatpush1.msra.mxu0 %v4436
  %4438 = vmatprep.subr.mxu0 0.0
  %v4439 = vand.u32 %v4008, 4294901760
  %v4440 = vsub.f32 %v4008, %v4439
  %v4441 = vand.u32 %v4440, 4294901760
  %v4442 = vsub.f32 %v4440, %v4441
  %v4443 = vand.u32 %v4442, 4294901760
  %4444 = vmatpush1.msra.mxu0 %v4443
  %4445 = vmatprep.subr.mxu0 0.0
  %v4446 = vand.u32 %v4009, 4294901760
  %v4447 = vsub.f32 %v4009, %v4446
  %v4448 = vand.u32 %v4447, 4294901760
  %v4449 = vsub.f32 %v4447, %v4448
  %v4450 = vand.u32 %v4449, 4294901760
  %4451 = vmatpush1.msra.mxu0 %v4450
  %4452 = vmatprep.subr.mxu0 0.0
  %v4453 = vand.u32 %v4010, 4294901760
  %v4454 = vsub.f32 %v4010, %v4453
  %v4455 = vand.u32 %v4454, 4294901760
  %v4456 = vsub.f32 %v4454, %v4455
  %v4457 = vand.u32 %v4456, 4294901760
  %4458 = vmatpush1.msra.mxu0 %v4457
  %4459 = vmatprep.subr.mxu0 0.0
  %v4460 = vand.u32 %v4011, 4294901760
  %v4461 = vsub.f32 %v4011, %v4460
  %v4462 = vand.u32 %v4461, 4294901760
  %v4463 = vsub.f32 %v4461, %v4462
  %v4464 = vand.u32 %v4463, 4294901760
  %4465 = vmatpush1.msra.mxu0 %v4464
  %4466 = vmatprep.subr.mxu0 0.0
  %v4467 = vand.u32 %v4012, 4294901760
  %v4468 = vsub.f32 %v4012, %v4467
  %v4469 = vand.u32 %v4468, 4294901760
  %v4470 = vsub.f32 %v4468, %v4469
  %v4471 = vand.u32 %v4470, 4294901760
  %4472 = vmatpush1.msra.mxu0 %v4471
  %4473 = vmatprep.subr.mxu0 0.0
  %v4474 = vand.u32 %v4013, 4294901760
  %v4475 = vsub.f32 %v4013, %v4474
  %v4476 = vand.u32 %v4475, 4294901760
  %v4477 = vsub.f32 %v4475, %v4476
  %v4478 = vand.u32 %v4477, 4294901760
  %4479 = vmatpush1.msra.mxu0 %v4478
  %4480 = vmatprep.subr.mxu0 0.0
  %v4481 = vand.u32 %v4014, 4294901760
  %v4482 = vsub.f32 %v4014, %v4481
  %v4483 = vand.u32 %v4482, 4294901760
  %v4484 = vsub.f32 %v4482, %v4483
  %v4485 = vand.u32 %v4484, 4294901760
  %4486 = vmatpush1.msra.mxu0 %v4485
  %4487 = vmatprep.subr.mxu0 0.0
  %v4488 = vand.u32 %v4015, 4294901760
  %v4489 = vsub.f32 %v4015, %v4488
  %v4490 = vand.u32 %v4489, 4294901760
  %v4491 = vsub.f32 %v4489, %v4490
  %v4492 = vand.u32 %v4491, 4294901760
  %4493 = vmatpush1.msra.mxu0 %v4492
  %4494 = vmatprep.subr.mxu0 0.0
  %v4495 = vand.u32 %v4016, 4294901760
  %v4496 = vsub.f32 %v4016, %v4495
  %v4497 = vand.u32 %v4496, 4294901760
  %v4498 = vsub.f32 %v4496, %v4497
  %v4499 = vand.u32 %v4498, 4294901760
  %4500 = vmatpush1.msra.mxu0 %v4499
  %4501 = vmatprep.subr.mxu0 0.0
  %v4502 = vand.u32 %v4017, 4294901760
  %v4503 = vsub.f32 %v4017, %v4502
  %v4504 = vand.u32 %v4503, 4294901760
  %v4505 = vsub.f32 %v4503, %v4504
  %v4506 = vand.u32 %v4505, 4294901760
  %4507 = vmatpush1.msra.mxu0 %v4506
  %4508 = vmatprep.subr.mxu0 0.0
  %v4509 = vand.u32 %v4018, 4294901760
  %v4510 = vsub.f32 %v4018, %v4509
  %v4511 = vand.u32 %v4510, 4294901760
  %v4512 = vsub.f32 %v4510, %v4511
  %v4513 = vand.u32 %v4512, 4294901760
  %4514 = vmatpush1.msra.mxu0 %v4513
  %4515 = vmatprep.subr.mxu0 0.0
  %v4516 = vand.u32 %v4019, 4294901760
  %v4517 = vsub.f32 %v4019, %v4516
  %v4518 = vand.u32 %v4517, 4294901760
  %v4519 = vsub.f32 %v4517, %v4518
  %v4520 = vand.u32 %v4519, 4294901760
  %4521 = vmatpush1.msra.mxu0 %v4520
  %4522 = vmatprep.subr.mxu0 0.0
  %v4523 = vand.u32 %v4020, 4294901760
  %v4524 = vsub.f32 %v4020, %v4523
  %v4525 = vand.u32 %v4524, 4294901760
  %v4526 = vsub.f32 %v4524, %v4525
  %v4527 = vand.u32 %v4526, 4294901760
  %4528 = vmatpush1.msra.mxu0 %v4527
  %4529 = vmatprep.subr.mxu0 0.0
  %v4530 = vand.u32 %v4021, 4294901760
  %v4531 = vsub.f32 %v4021, %v4530
  %v4532 = vand.u32 %v4531, 4294901760
  %v4533 = vsub.f32 %v4531, %v4532
  %v4534 = vand.u32 %v4533, 4294901760
  %4535 = vmatpush1.msra.mxu0 %v4534
  %4536 = vmatprep.subr.mxu0 0.0
  %v4537 = vand.u32 %v4022, 4294901760
  %v4538 = vsub.f32 %v4022, %v4537
  %v4539 = vand.u32 %v4538, 4294901760
  %v4540 = vsub.f32 %v4538, %v4539
  %v4541 = vand.u32 %v4540, 4294901760
  %4542 = vmatpush1.msra.mxu0 %v4541
  %4543 = vmatprep.subr.mxu0 0.0
  %4544 = vmatpush1.msra.mxu0 0.0
  %4545 = vmatprep.subr.mxu0 0.0
  %4546 = vmatpush1.msra.mxu0 0.0
  %4547 = vmatprep.subr.mxu0 0.0
  %4548 = vmatpush1.msra.mxu0 0.0
  %4549 = vmatprep.subr.mxu0 0.0
  %4550 = vmatpush1.msra.mxu0 0.0
  %4551 = vmatprep.subr.mxu0 0.0
  %4552 = vmatpush1.msra.mxu0 0.0
  %4553 = vmatprep.subr.mxu0 0.0
  %4554 = vmatpush1.msra.mxu0 0.0
  %4555 = vmatprep.subr.mxu0 0.0
  %4556 = vmatpush1.msra.mxu0 0.0
  %4557 = vmatprep.subr.mxu0 0.0
  %4558 = vmatpush1.msra.mxu0 0.0
  %4559 = vmatprep.subr.mxu0 0.0
  %4560 = vmatpush1.msra.mxu0 0.0
  %4561 = vmatprep.subr.mxu0 0.0
  %4562 = vmatpush1.msra.mxu0 0.0
  %4563 = vmatprep.subr.mxu0 0.0
  %4564 = vmatpush1.msra.mxu0 0.0
  %4565 = vmatprep.subr.mxu0 0.0
  %4566 = vmatpush1.msra.mxu0 0.0
  %4567 = vmatprep.subr.mxu0 0.0
  %4568 = vmatpush1.msra.mxu0 0.0
  %4569 = vmatprep.subr.mxu0 0.0
  %4570 = vmatpush1.msra.mxu0 0.0
  %4571 = vmatprep.subr.mxu0 0.0
  %4572 = vmatpush1.msra.mxu0 0.0
  %4573 = vmatprep.subr.mxu0 0.0
  %4574 = vmatpush1.msra.mxu0 0.0
  %4575 = vmatprep.mubr.f32.mxu0 0.0
  %v4576 = vand.u32 %v3975, 4294901760
  %4577 = vmatmul.mubr.f32.gmra.mrb[0].mxu0 %v4576
  %v4578 = vpop.f32.mrb[0].mxu0
  %v4579 = vadd.f32 %v4118, %v4578
  %v4580 = vpop.f32.mrb[0].mxu0
  %4581 = vmatprep.mubr.f32.mxu0 0.0
  %v4582 = vand.u32 %v3976, 4294901760
  %4583 = vmatmul.mubr.f32.gmra.mrb[0].mxu0 %v4582
  %v4584 = vpop.f32.mrb[0].mxu0
  %v4585 = vadd.f32 %v4128, %v4584
  %v4586 = vpop.f32.mrb[0].mxu0
  %4587 = vmatprep.mubr.f32.mxu0 0.0
  %v4588 = vand.u32 %v3977, 4294901760
  %4589 = vmatmul.mubr.f32.gmra.mrb[0].mxu0 %v4588
  %v4590 = vpop.f32.mrb[0].mxu0
  %v4591 = vadd.f32 %v4138, %v4590
  %v4592 = vpop.f32.mrb[0].mxu0
  %4593 = vmatprep.mubr.f32.mxu0 0.0
  %v4594 = vand.u32 %v3978, 4294901760
  %4595 = vmatmul.mubr.f32.gmra.mrb[0].mxu0 %v4594
  %v4596 = vpop.f32.mrb[0].mxu0
  %v4597 = vadd.f32 %v4148, %v4596
  %v4598 = vpop.f32.mrb[0].mxu0
  %4599 = vmatprep.mubr.f32.mxu0 0.0
  %v4600 = vand.u32 %v3979, 4294901760
  %4601 = vmatmul.mubr.f32.gmra.mrb[0].mxu0 %v4600
  %v4602 = vpop.f32.mrb[0].mxu0
  %v4603 = vadd.f32 %v4158, %v4602
  %v4604 = vpop.f32.mrb[0].mxu0
  %4605 = vmatprep.mubr.f32.mxu0 0.0
  %v4606 = vand.u32 %v3980, 4294901760
  %4607 = vmatmul.mubr.f32.gmra.mrb[0].mxu0 %v4606
  %v4608 = vpop.f32.mrb[0].mxu0
  %v4609 = vadd.f32 %v4168, %v4608
  %v4610 = vpop.f32.mrb[0].mxu0
  %4611 = vmatprep.mubr.f32.mxu0 0.0
  %v4612 = vand.u32 %v3981, 4294901760
  %4613 = vmatmul.mubr.f32.gmra.mrb[0].mxu0 %v4612
  %v4614 = vpop.f32.mrb[0].mxu0
  %v4615 = vadd.f32 %v4178, %v4614
  %v4616 = vpop.f32.mrb[0].mxu0
  %4617 = vmatprep.mubr.f32.mxu0 0.0
  %v4618 = vand.u32 %v3982, 4294901760
  %4619 = vmatmul.mubr.f32.gmra.mrb[0].mxu0 %v4618
  %v4620 = vpop.f32.mrb[0].mxu0
  %v4621 = vadd.f32 %v4188, %v4620
  %v4622 = vpop.f32.mrb[0].mxu0
  %4623 = vmatprep.mubr.f32.mxu0 0.0
  %v4624 = vand.u32 %v3983, 4294901760
  %4625 = vmatmul.mubr.f32.gmra.mrb[0].mxu0 %v4624
  %v4626 = vpop.f32.mrb[0].mxu0
  %v4627 = vadd.f32 %v4198, %v4626
  %v4628 = vpop.f32.mrb[0].mxu0
  %4629 = vmatprep.mubr.f32.mxu0 0.0
  %v4630 = vand.u32 %v3984, 4294901760
  %4631 = vmatmul.mubr.f32.gmra.mrb[0].mxu0 %v4630
  %v4632 = vpop.f32.mrb[0].mxu0
  %v4633 = vadd.f32 %v4208, %v4632
  %v4634 = vpop.f32.mrb[0].mxu0
  %4635 = vmatprep.mubr.f32.mxu0 0.0
  %v4636 = vand.u32 %v3985, 4294901760
  %4637 = vmatmul.mubr.f32.gmra.mrb[0].mxu0 %v4636
  %v4638 = vpop.f32.mrb[0].mxu0
  %v4639 = vadd.f32 %v4218, %v4638
  %v4640 = vpop.f32.mrb[0].mxu0
  %4641 = vmatprep.mubr.f32.mxu0 0.0
  %v4642 = vand.u32 %v3986, 4294901760
  %4643 = vmatmul.mubr.f32.gmra.mrb[0].mxu0 %v4642
  %v4644 = vpop.f32.mrb[0].mxu0
  %v4645 = vadd.f32 %v4228, %v4644
  %v4646 = vpop.f32.mrb[0].mxu0
  %4647 = vmatprep.mubr.f32.mxu0 0.0
  %v4648 = vand.u32 %v3987, 4294901760
  %4649 = vmatmul.mubr.f32.gmra.mrb[0].mxu0 %v4648
  %v4650 = vpop.f32.mrb[0].mxu0
  %v4651 = vadd.f32 %v4238, %v4650
  %v4652 = vpop.f32.mrb[0].mxu0
  %4653 = vmatprep.mubr.f32.mxu0 0.0
  %v4654 = vand.u32 %v3988, 4294901760
  %4655 = vmatmul.mubr.f32.gmra.mrb[0].mxu0 %v4654
  %v4656 = vpop.f32.mrb[0].mxu0
  %v4657 = vadd.f32 %v4248, %v4656
  %v4658 = vpop.f32.mrb[0].mxu0
  %4659 = vmatprep.mubr.f32.mxu0 0.0
  %v4660 = vand.u32 %v3989, 4294901760
  %4661 = vmatmul.mubr.f32.gmra.mrb[0].mxu0 %v4660
  %v4662 = vpop.f32.mrb[0].mxu0
  %v4663 = vadd.f32 %v4258, %v4662
  %v4664 = vpop.f32.mrb[0].mxu0
  %4665 = vmatprep.mubr.f32.mxu0 0.0
  %v4666 = vand.u32 %v3990, 4294901760
  %4667 = vmatmul.mubr.f32.gmra.mrb[0].mxu0 %v4666
  %v4668 = vpop.f32.mrb[0].mxu0
  %v4669 = vadd.f32 %v4268, %v4668
  %v4670 = vpop.f32.mrb[0].mxu0
  %4671 = vmatprep.mubr.f32.mxu0 0.0
  %v4672 = vand.u32 %v3991, 4294901760
  %4673 = vmatmul.mubr.f32.gmra.mrb[0].mxu0 %v4672
  %v4674 = vpop.f32.mrb[0].mxu0
  %v4675 = vadd.f32 %v4278, %v4674
  %v4676 = vpop.f32.mrb[0].mxu0
  %4677 = vmatprep.mubr.f32.mxu0 0.0
  %v4678 = vand.u32 %v3992, 4294901760
  %4679 = vmatmul.mubr.f32.gmra.mrb[0].mxu0 %v4678
  %v4680 = vpop.f32.mrb[0].mxu0
  %v4681 = vadd.f32 %v4288, %v4680
  %v4682 = vpop.f32.mrb[0].mxu0
  %4683 = vmatprep.mubr.f32.mxu0 0.0
  %v4684 = vand.u32 %v3993, 4294901760
  %4685 = vmatmul.mubr.f32.gmra.mrb[0].mxu0 %v4684
  %v4686 = vpop.f32.mrb[0].mxu0
  %v4687 = vadd.f32 %v4298, %v4686
  %v4688 = vpop.f32.mrb[0].mxu0
  %4689 = vmatprep.mubr.f32.mxu0 0.0
  %v4690 = vand.u32 %v3994, 4294901760
  %4691 = vmatmul.mubr.f32.gmra.mrb[0].mxu0 %v4690
  %v4692 = vpop.f32.mrb[0].mxu0
  %v4693 = vadd.f32 %v4308, %v4692
  %v4694 = vpop.f32.mrb[0].mxu0
  %4695 = vmatprep.mubr.f32.mxu0 0.0
  %v4696 = vand.u32 %v3995, 4294901760
  %4697 = vmatmul.mubr.f32.gmra.mrb[0].mxu0 %v4696
  %v4698 = vpop.f32.mrb[0].mxu0
  %v4699 = vadd.f32 %v4318, %v4698
  %v4700 = vpop.f32.mrb[0].mxu0
  %4701 = vmatprep.mubr.f32.mxu0 0.0
  %v4702 = vand.u32 %v3996, 4294901760
  %4703 = vmatmul.mubr.f32.gmra.mrb[0].mxu0 %v4702
  %v4704 = vpop.f32.mrb[0].mxu0
  %v4705 = vadd.f32 %v4328, %v4704
  %v4706 = vpop.f32.mrb[0].mxu0
  %4707 = vmatprep.mubr.f32.mxu0 0.0
  %v4708 = vand.u32 %v3997, 4294901760
  %4709 = vmatmul.mubr.f32.gmra.mrb[0].mxu0 %v4708
  %v4710 = vpop.f32.mrb[0].mxu0
  %v4711 = vadd.f32 %v4338, %v4710
  %v4712 = vpop.f32.mrb[0].mxu0
  %4713 = vmatprep.mubr.f32.mxu0 0.0
  %v4714 = vand.u32 %v3998, 4294901760
  %4715 = vmatmul.mubr.f32.gmra.mrb[0].mxu0 %v4714
  %v4716 = vpop.f32.mrb[0].mxu0
  %v4717 = vadd.f32 %v4348, %v4716
  %v4718 = vpop.f32.mrb[0].mxu0
  %4719 = vmatprep.mubr.f32.mxu0 0.0
  %v4720 = vand.u32 %v3999, 4294901760
  %4721 = vmatmul.mubr.f32.gmra.mrb[0].mxu0 %v4720
  %v4722 = vpop.f32.mrb[0].mxu0
  %v4723 = vadd.f32 %v4358, %v4722
  %v4724 = vpop.f32.mrb[0].mxu0
  %4725 = vmatprep.mubr.f32.mxu0 0.0
  %v4726 = vand.u32 %v4000, 4294901760
  %4727 = vmatmul.mubr.f32.gmra.mrb[0].mxu0 %v4726
  %v4728 = vpop.f32.mrb[0].mxu0
  %v4729 = vadd.f32 %v4368, %v4728
  %v4730 = vpop.f32.mrb[0].mxu0
  %4731 = vmatprep.mubr.f32.mxu0 0.0
  %v4732 = vand.u32 %v4001, 4294901760
  %4733 = vmatmul.mubr.f32.gmra.mrb[0].mxu0 %v4732
  %v4734 = vpop.f32.mrb[0].mxu0
  %v4735 = vadd.f32 %v4378, %v4734
  %v4736 = vpop.f32.mrb[0].mxu0
  %4737 = vmatprep.mubr.f32.mxu0 0.0
  %v4738 = vand.u32 %v4002, 4294901760
  %4739 = vmatmul.mubr.f32.gmra.mrb[0].mxu0 %v4738
  %v4740 = vpop.f32.mrb[0].mxu0
  %v4741 = vadd.f32 %v4388, %v4740
  %v4742 = vpop.f32.mrb[0].mxu0
  %4743 = vmatprep.mubr.f32.mxu0 0.0
  %v4744 = vand.u32 %v4003, 4294901760
  %4745 = vmatmul.mubr.f32.gmra.mrb[0].mxu0 %v4744
  %v4746 = vpop.f32.mrb[0].mxu0
  %v4747 = vadd.f32 %v4398, %v4746
  %v4748 = vpop.f32.mrb[0].mxu0
  %4749 = vmatprep.mubr.f32.mxu0 0.0
  %v4750 = vand.u32 %v4004, 4294901760
  %4751 = vmatmul.mubr.f32.gmra.mrb[0].mxu0 %v4750
  %v4752 = vpop.f32.mrb[0].mxu0
  %v4753 = vadd.f32 %v4408, %v4752
  %v4754 = vpop.f32.mrb[0].mxu0
  %4755 = vmatprep.mubr.f32.mxu0 0.0
  %v4756 = vand.u32 %v4005, 4294901760
  %4757 = vmatmul.mubr.f32.gmra.mrb[0].mxu0 %v4756
  %v4758 = vpop.f32.mrb[0].mxu0
  %v4759 = vadd.f32 %v4418, %v4758
  %v4760 = vpop.f32.mrb[0].mxu0
  %4761 = vmatprep.mubr.f32.mxu0 0.0
  %v4762 = vand.u32 %v4006, 4294901760
  %4763 = vmatmul.mubr.f32.gmra.mrb[0].mxu0 %v4762
  %v4764 = vpop.f32.mrb[0].mxu0
  %v4765 = vadd.f32 %v4428, %v4764
  %v4766 = vpop.f32.mrb[0].mxu0
  %4767 = vdwg.mxu0
  %4768 = vmatprep.subr.mxu0 0.0
  %v4769 = vand.u32 %v4007, 4294901760
  %v4770 = vsub.f32 %v4007, %v4769
  %4771 = vmatpush1.msra.mxu0 %v4770
  %4772 = vmatprep.subr.mxu0 0.0
  %v4773 = vand.u32 %v4008, 4294901760
  %v4774 = vsub.f32 %v4008, %v4773
  %4775 = vmatpush1.msra.mxu0 %v4774
  %4776 = vmatprep.subr.mxu0 0.0
  %v4777 = vand.u32 %v4009, 4294901760
  %v4778 = vsub.f32 %v4009, %v4777
  %4779 = vmatpush1.msra.mxu0 %v4778
  %4780 = vmatprep.subr.mxu0 0.0
  %v4781 = vand.u32 %v4010, 4294901760
  %v4782 = vsub.f32 %v4010, %v4781
  %4783 = vmatpush1.msra.mxu0 %v4782
  %4784 = vmatprep.subr.mxu0 0.0
  %v4785 = vand.u32 %v4011, 4294901760
  %v4786 = vsub.f32 %v4011, %v4785
  %4787 = vmatpush1.msra.mxu0 %v4786
  %4788 = vmatprep.subr.mxu0 0.0
  %v4789 = vand.u32 %v4012, 4294901760
  %v4790 = vsub.f32 %v4012, %v4789
  %4791 = vmatpush1.msra.mxu0 %v4790
  %4792 = vmatprep.subr.mxu0 0.0
  %v4793 = vand.u32 %v4013, 4294901760
  %v4794 = vsub.f32 %v4013, %v4793
  %4795 = vmatpush1.msra.mxu0 %v4794
  %4796 = vmatprep.subr.mxu0 0.0
  %v4797 = vand.u32 %v4014, 4294901760
  %v4798 = vsub.f32 %v4014, %v4797
  %4799 = vmatpush1.msra.mxu0 %v4798
  %4800 = vmatprep.subr.mxu0 0.0
  %v4801 = vand.u32 %v4015, 4294901760
  %v4802 = vsub.f32 %v4015, %v4801
  %4803 = vmatpush1.msra.mxu0 %v4802
  %4804 = vmatprep.subr.mxu0 0.0
  %v4805 = vand.u32 %v4016, 4294901760
  %v4806 = vsub.f32 %v4016, %v4805
  %4807 = vmatpush1.msra.mxu0 %v4806
  %4808 = vmatprep.subr.mxu0 0.0
  %v4809 = vand.u32 %v4017, 4294901760
  %v4810 = vsub.f32 %v4017, %v4809
  %4811 = vmatpush1.msra.mxu0 %v4810
  %4812 = vmatprep.subr.mxu0 0.0
  %v4813 = vand.u32 %v4018, 4294901760
  %v4814 = vsub.f32 %v4018, %v4813
  %4815 = vmatpush1.msra.mxu0 %v4814
  %4816 = vmatprep.subr.mxu0 0.0
  %v4817 = vand.u32 %v4019, 4294901760
  %v4818 = vsub.f32 %v4019, %v4817
  %4819 = vmatpush1.msra.mxu0 %v4818
  %4820 = vmatprep.subr.mxu0 0.0
  %v4821 = vand.u32 %v4020, 4294901760
  %v4822 = vsub.f32 %v4020, %v4821
  %4823 = vmatpush1.msra.mxu0 %v4822
  %4824 = vmatprep.subr.mxu0 0.0
  %v4825 = vand.u32 %v4021, 4294901760
  %v4826 = vsub.f32 %v4021, %v4825
  %4827 = vmatpush1.msra.mxu0 %v4826
  %4828 = vmatprep.subr.mxu0 0.0
  %v4829 = vand.u32 %v4022, 4294901760
  %v4830 = vsub.f32 %v4022, %v4829
  %4831 = vmatpush1.msra.mxu0 %v4830
  %4832 = vmatprep.subr.mxu0 0.0
  %4833 = vmatpush1.msra.mxu0 0.0
  %4834 = vmatprep.subr.mxu0 0.0
  %4835 = vmatpush1.msra.mxu0 0.0
  %4836 = vmatprep.subr.mxu0 0.0
  %4837 = vmatpush1.msra.mxu0 0.0
  %4838 = vmatprep.subr.mxu0 0.0
  %4839 = vmatpush1.msra.mxu0 0.0
  %4840 = vmatprep.subr.mxu0 0.0
  %4841 = vmatpush1.msra.mxu0 0.0
  %4842 = vmatprep.subr.mxu0 0.0
  %4843 = vmatpush1.msra.mxu0 0.0
  %4844 = vmatprep.subr.mxu0 0.0
  %4845 = vmatpush1.msra.mxu0 0.0
  %4846 = vmatprep.subr.mxu0 0.0
  %4847 = vmatpush1.msra.mxu0 0.0
  %4848 = vmatprep.subr.mxu0 0.0
  %4849 = vmatpush1.msra.mxu0 0.0
  %4850 = vmatprep.subr.mxu0 0.0
  %4851 = vmatpush1.msra.mxu0 0.0
  %4852 = vmatprep.subr.mxu0 0.0
  %4853 = vmatpush1.msra.mxu0 0.0
  %4854 = vmatprep.subr.mxu0 0.0
  %4855 = vmatpush1.msra.mxu0 0.0
  %4856 = vmatprep.subr.mxu0 0.0
  %4857 = vmatpush1.msra.mxu0 0.0
  %4858 = vmatprep.subr.mxu0 0.0
  %4859 = vmatpush1.msra.mxu0 0.0
  %4860 = vmatprep.subr.mxu0 0.0
  %4861 = vmatpush1.msra.mxu0 0.0
  %4862 = vmatprep.subr.mxu0 0.0
  %4863 = vmatpush1.msra.mxu0 0.0
  %4864 = vmatprep.mubr.f32.mxu0 0.0
  %v4865 = vand.u32 %v3975, 4294901760
  %v4866 = vsub.f32 %v3975, %v4865
  %4867 = vmatmul.mubr.f32.gmra.mrb[0].mxu0 %v4866
  %v4868 = vpop.f32.mrb[0].mxu0
  %v4869 = vadd.f32 %v4579, %v4868
  %v4870 = vpop.f32.mrb[0].mxu0
  %4871 = vmatprep.mubr.f32.mxu0 0.0
  %v4872 = vand.u32 %v3976, 4294901760
  %v4873 = vsub.f32 %v3976, %v4872
  %4874 = vmatmul.mubr.f32.gmra.mrb[0].mxu0 %v4873
  %v4875 = vpop.f32.mrb[0].mxu0
  %v4876 = vadd.f32 %v4585, %v4875
  %v4877 = vpop.f32.mrb[0].mxu0
  %4878 = vmatprep.mubr.f32.mxu0 0.0
  %v4879 = vand.u32 %v3977, 4294901760
  %v4880 = vsub.f32 %v3977, %v4879
  %4881 = vmatmul.mubr.f32.gmra.mrb[0].mxu0 %v4880
  %v4882 = vpop.f32.mrb[0].mxu0
  %v4883 = vadd.f32 %v4591, %v4882
  %v4884 = vpop.f32.mrb[0].mxu0
  %4885 = vmatprep.mubr.f32.mxu0 0.0
  %v4886 = vand.u32 %v3978, 4294901760
  %v4887 = vsub.f32 %v3978, %v4886
  %4888 = vmatmul.mubr.f32.gmra.mrb[0].mxu0 %v4887
  %v4889 = vpop.f32.mrb[0].mxu0
  %v4890 = vadd.f32 %v4597, %v4889
  %v4891 = vpop.f32.mrb[0].mxu0
  %4892 = vmatprep.mubr.f32.mxu0 0.0
  %v4893 = vand.u32 %v3979, 4294901760
  %v4894 = vsub.f32 %v3979, %v4893
  %4895 = vmatmul.mubr.f32.gmra.mrb[0].mxu0 %v4894
  %v4896 = vpop.f32.mrb[0].mxu0
  %v4897 = vadd.f32 %v4603, %v4896
  %v4898 = vpop.f32.mrb[0].mxu0
  %4899 = vmatprep.mubr.f32.mxu0 0.0
  %v4900 = vand.u32 %v3980, 4294901760
  %v4901 = vsub.f32 %v3980, %v4900
  %4902 = vmatmul.mubr.f32.gmra.mrb[0].mxu0 %v4901
  %v4903 = vpop.f32.mrb[0].mxu0
  %v4904 = vadd.f32 %v4609, %v4903
  %v4905 = vpop.f32.mrb[0].mxu0
  %4906 = vmatprep.mubr.f32.mxu0 0.0
  %v4907 = vand.u32 %v3981, 4294901760
  %v4908 = vsub.f32 %v3981, %v4907
  %4909 = vmatmul.mubr.f32.gmra.mrb[0].mxu0 %v4908
  %v4910 = vpop.f32.mrb[0].mxu0
  %v4911 = vadd.f32 %v4615, %v4910
  %v4912 = vpop.f32.mrb[0].mxu0
  %4913 = vmatprep.mubr.f32.mxu0 0.0
  %v4914 = vand.u32 %v3982, 4294901760
  %v4915 = vsub.f32 %v3982, %v4914
  %4916 = vmatmul.mubr.f32.gmra.mrb[0].mxu0 %v4915
  %v4917 = vpop.f32.mrb[0].mxu0
  %v4918 = vadd.f32 %v4621, %v4917
  %v4919 = vpop.f32.mrb[0].mxu0
  %4920 = vmatprep.mubr.f32.mxu0 0.0
  %v4921 = vand.u32 %v3983, 4294901760
  %v4922 = vsub.f32 %v3983, %v4921
  %4923 = vmatmul.mubr.f32.gmra.mrb[0].mxu0 %v4922
  %v4924 = vpop.f32.mrb[0].mxu0
  %v4925 = vadd.f32 %v4627, %v4924
  %v4926 = vpop.f32.mrb[0].mxu0
  %4927 = vmatprep.mubr.f32.mxu0 0.0
  %v4928 = vand.u32 %v3984, 4294901760
  %v4929 = vsub.f32 %v3984, %v4928
  %4930 = vmatmul.mubr.f32.gmra.mrb[0].mxu0 %v4929
  %v4931 = vpop.f32.mrb[0].mxu0
  %v4932 = vadd.f32 %v4633, %v4931
  %v4933 = vpop.f32.mrb[0].mxu0
  %4934 = vmatprep.mubr.f32.mxu0 0.0
  %v4935 = vand.u32 %v3985, 4294901760
  %v4936 = vsub.f32 %v3985, %v4935
  %4937 = vmatmul.mubr.f32.gmra.mrb[0].mxu0 %v4936
  %v4938 = vpop.f32.mrb[0].mxu0
  %v4939 = vadd.f32 %v4639, %v4938
  %v4940 = vpop.f32.mrb[0].mxu0
  %4941 = vmatprep.mubr.f32.mxu0 0.0
  %v4942 = vand.u32 %v3986, 4294901760
  %v4943 = vsub.f32 %v3986, %v4942
  %4944 = vmatmul.mubr.f32.gmra.mrb[0].mxu0 %v4943
  %v4945 = vpop.f32.mrb[0].mxu0
  %v4946 = vadd.f32 %v4645, %v4945
  %v4947 = vpop.f32.mrb[0].mxu0
  %4948 = vmatprep.mubr.f32.mxu0 0.0
  %v4949 = vand.u32 %v3987, 4294901760
  %v4950 = vsub.f32 %v3987, %v4949
  %4951 = vmatmul.mubr.f32.gmra.mrb[0].mxu0 %v4950
  %v4952 = vpop.f32.mrb[0].mxu0
  %v4953 = vadd.f32 %v4651, %v4952
  %v4954 = vpop.f32.mrb[0].mxu0
  %4955 = vmatprep.mubr.f32.mxu0 0.0
  %v4956 = vand.u32 %v3988, 4294901760
  %v4957 = vsub.f32 %v3988, %v4956
  %4958 = vmatmul.mubr.f32.gmra.mrb[0].mxu0 %v4957
  %v4959 = vpop.f32.mrb[0].mxu0
  %v4960 = vadd.f32 %v4657, %v4959
  %v4961 = vpop.f32.mrb[0].mxu0
  %4962 = vmatprep.mubr.f32.mxu0 0.0
  %v4963 = vand.u32 %v3989, 4294901760
  %v4964 = vsub.f32 %v3989, %v4963
  %4965 = vmatmul.mubr.f32.gmra.mrb[0].mxu0 %v4964
  %v4966 = vpop.f32.mrb[0].mxu0
  %v4967 = vadd.f32 %v4663, %v4966
  %v4968 = vpop.f32.mrb[0].mxu0
  %4969 = vmatprep.mubr.f32.mxu0 0.0
  %v4970 = vand.u32 %v3990, 4294901760
  %v4971 = vsub.f32 %v3990, %v4970
  %4972 = vmatmul.mubr.f32.gmra.mrb[0].mxu0 %v4971
  %v4973 = vpop.f32.mrb[0].mxu0
  %v4974 = vadd.f32 %v4669, %v4973
  %v4975 = vpop.f32.mrb[0].mxu0
  %4976 = vmatprep.mubr.f32.mxu0 0.0
  %v4977 = vand.u32 %v3991, 4294901760
  %v4978 = vsub.f32 %v3991, %v4977
  %4979 = vmatmul.mubr.f32.gmra.mrb[0].mxu0 %v4978
  %v4980 = vpop.f32.mrb[0].mxu0
  %v4981 = vadd.f32 %v4675, %v4980
  %v4982 = vpop.f32.mrb[0].mxu0
  %4983 = vmatprep.mubr.f32.mxu0 0.0
  %v4984 = vand.u32 %v3992, 4294901760
  %v4985 = vsub.f32 %v3992, %v4984
  %4986 = vmatmul.mubr.f32.gmra.mrb[0].mxu0 %v4985
  %v4987 = vpop.f32.mrb[0].mxu0
  %v4988 = vadd.f32 %v4681, %v4987
  %v4989 = vpop.f32.mrb[0].mxu0
  %4990 = vmatprep.mubr.f32.mxu0 0.0
  %v4991 = vand.u32 %v3993, 4294901760
  %v4992 = vsub.f32 %v3993, %v4991
  %4993 = vmatmul.mubr.f32.gmra.mrb[0].mxu0 %v4992
  %v4994 = vpop.f32.mrb[0].mxu0
  %v4995 = vadd.f32 %v4687, %v4994
  %v4996 = vpop.f32.mrb[0].mxu0
  %4997 = vmatprep.mubr.f32.mxu0 0.0
  %v4998 = vand.u32 %v3994, 4294901760
  %v4999 = vsub.f32 %v3994, %v4998
  %5000 = vmatmul.mubr.f32.gmra.mrb[0].mxu0 %v4999
  %v5001 = vpop.f32.mrb[0].mxu0
  %v5002 = vadd.f32 %v4693, %v5001
  %v5003 = vpop.f32.mrb[0].mxu0
  %5004 = vmatprep.mubr.f32.mxu0 0.0
  %v5005 = vand.u32 %v3995, 4294901760
  %v5006 = vsub.f32 %v3995, %v5005
  %5007 = vmatmul.mubr.f32.gmra.mrb[0].mxu0 %v5006
  %v5008 = vpop.f32.mrb[0].mxu0
  %v5009 = vadd.f32 %v4699, %v5008
  %v5010 = vpop.f32.mrb[0].mxu0
  %5011 = vmatprep.mubr.f32.mxu0 0.0
  %v5012 = vand.u32 %v3996, 4294901760
  %v5013 = vsub.f32 %v3996, %v5012
  %5014 = vmatmul.mubr.f32.gmra.mrb[0].mxu0 %v5013
  %v5015 = vpop.f32.mrb[0].mxu0
  %v5016 = vadd.f32 %v4705, %v5015
  %v5017 = vpop.f32.mrb[0].mxu0
  %5018 = vmatprep.mubr.f32.mxu0 0.0
  %v5019 = vand.u32 %v3997, 4294901760
  %v5020 = vsub.f32 %v3997, %v5019
  %5021 = vmatmul.mubr.f32.gmra.mrb[0].mxu0 %v5020
  %v5022 = vpop.f32.mrb[0].mxu0
  %v5023 = vadd.f32 %v4711, %v5022
  %v5024 = vpop.f32.mrb[0].mxu0
  %5025 = vmatprep.mubr.f32.mxu0 0.0
  %v5026 = vand.u32 %v3998, 4294901760
  %v5027 = vsub.f32 %v3998, %v5026
  %5028 = vmatmul.mubr.f32.gmra.mrb[0].mxu0 %v5027
  %v5029 = vpop.f32.mrb[0].mxu0
  %v5030 = vadd.f32 %v4717, %v5029
  %v5031 = vpop.f32.mrb[0].mxu0
  %5032 = vmatprep.mubr.f32.mxu0 0.0
  %v5033 = vand.u32 %v3999, 4294901760
  %v5034 = vsub.f32 %v3999, %v5033
  %5035 = vmatmul.mubr.f32.gmra.mrb[0].mxu0 %v5034
  %v5036 = vpop.f32.mrb[0].mxu0
  %v5037 = vadd.f32 %v4723, %v5036
  %v5038 = vpop.f32.mrb[0].mxu0
  %5039 = vmatprep.mubr.f32.mxu0 0.0
  %v5040 = vand.u32 %v4000, 4294901760
  %v5041 = vsub.f32 %v4000, %v5040
  %5042 = vmatmul.mubr.f32.gmra.mrb[0].mxu0 %v5041
  %v5043 = vpop.f32.mrb[0].mxu0
  %v5044 = vadd.f32 %v4729, %v5043
  %v5045 = vpop.f32.mrb[0].mxu0
  %5046 = vmatprep.mubr.f32.mxu0 0.0
  %v5047 = vand.u32 %v4001, 4294901760
  %v5048 = vsub.f32 %v4001, %v5047
  %5049 = vmatmul.mubr.f32.gmra.mrb[0].mxu0 %v5048
  %v5050 = vpop.f32.mrb[0].mxu0
  %v5051 = vadd.f32 %v4735, %v5050
  %v5052 = vpop.f32.mrb[0].mxu0
  %5053 = vmatprep.mubr.f32.mxu0 0.0
  %v5054 = vand.u32 %v4002, 4294901760
  %v5055 = vsub.f32 %v4002, %v5054
  %5056 = vmatmul.mubr.f32.gmra.mrb[0].mxu0 %v5055
  %v5057 = vpop.f32.mrb[0].mxu0
  %v5058 = vadd.f32 %v4741, %v5057
  %v5059 = vpop.f32.mrb[0].mxu0
  %5060 = vmatprep.mubr.f32.mxu0 0.0
  %v5061 = vand.u32 %v4003, 4294901760
  %v5062 = vsub.f32 %v4003, %v5061
  %5063 = vmatmul.mubr.f32.gmra.mrb[0].mxu0 %v5062
  %v5064 = vpop.f32.mrb[0].mxu0
  %v5065 = vadd.f32 %v4747, %v5064
  %v5066 = vpop.f32.mrb[0].mxu0
  %5067 = vmatprep.mubr.f32.mxu0 0.0
  %v5068 = vand.u32 %v4004, 4294901760
  %v5069 = vsub.f32 %v4004, %v5068
  %5070 = vmatmul.mubr.f32.gmra.mrb[0].mxu0 %v5069
  %v5071 = vpop.f32.mrb[0].mxu0
  %v5072 = vadd.f32 %v4753, %v5071
  %v5073 = vpop.f32.mrb[0].mxu0
  %5074 = vmatprep.mubr.f32.mxu0 0.0
  %v5075 = vand.u32 %v4005, 4294901760
  %v5076 = vsub.f32 %v4005, %v5075
  %5077 = vmatmul.mubr.f32.gmra.mrb[0].mxu0 %v5076
  %v5078 = vpop.f32.mrb[0].mxu0
  %v5079 = vadd.f32 %v4759, %v5078
  %v5080 = vpop.f32.mrb[0].mxu0
  %5081 = vmatprep.mubr.f32.mxu0 0.0
  %v5082 = vand.u32 %v4006, 4294901760
  %v5083 = vsub.f32 %v4006, %v5082
  %5084 = vmatmul.mubr.f32.gmra.mrb[0].mxu0 %v5083
  %v5085 = vpop.f32.mrb[0].mxu0
  %v5086 = vadd.f32 %v4765, %v5085
  %v5087 = vpop.f32.mrb[0].mxu0
  %5088 = vdwg.mxu0
  %5089 = vmatprep.subr.mxu0 0.0
  %v5090 = vand.u32 %v4007, 4294901760
  %5091 = vmatpush1.msra.mxu0 %v5090
  %5092 = vmatprep.subr.mxu0 0.0
  %v5093 = vand.u32 %v4008, 4294901760
  %5094 = vmatpush1.msra.mxu0 %v5093
  %5095 = vmatprep.subr.mxu0 0.0
  %v5096 = vand.u32 %v4009, 4294901760
  %5097 = vmatpush1.msra.mxu0 %v5096
  %5098 = vmatprep.subr.mxu0 0.0
  %v5099 = vand.u32 %v4010, 4294901760
  %5100 = vmatpush1.msra.mxu0 %v5099
  %5101 = vmatprep.subr.mxu0 0.0
  %v5102 = vand.u32 %v4011, 4294901760
  %5103 = vmatpush1.msra.mxu0 %v5102
  %5104 = vmatprep.subr.mxu0 0.0
  %v5105 = vand.u32 %v4012, 4294901760
  %5106 = vmatpush1.msra.mxu0 %v5105
  %5107 = vmatprep.subr.mxu0 0.0
  %v5108 = vand.u32 %v4013, 4294901760
  %5109 = vmatpush1.msra.mxu0 %v5108
  %5110 = vmatprep.subr.mxu0 0.0
  %v5111 = vand.u32 %v4014, 4294901760
  %5112 = vmatpush1.msra.mxu0 %v5111
  %5113 = vmatprep.subr.mxu0 0.0
  %v5114 = vand.u32 %v4015, 4294901760
  %5115 = vmatpush1.msra.mxu0 %v5114
  %5116 = vmatprep.subr.mxu0 0.0
  %v5117 = vand.u32 %v4016, 4294901760
  %5118 = vmatpush1.msra.mxu0 %v5117
  %5119 = vmatprep.subr.mxu0 0.0
  %v5120 = vand.u32 %v4017, 4294901760
  %5121 = vmatpush1.msra.mxu0 %v5120
  %5122 = vmatprep.subr.mxu0 0.0
  %v5123 = vand.u32 %v4018, 4294901760
  %5124 = vmatpush1.msra.mxu0 %v5123
  %5125 = vmatprep.subr.mxu0 0.0
  %v5126 = vand.u32 %v4019, 4294901760
  %5127 = vmatpush1.msra.mxu0 %v5126
  %5128 = vmatprep.subr.mxu0 0.0
  %v5129 = vand.u32 %v4020, 4294901760
  %5130 = vmatpush1.msra.mxu0 %v5129
  %5131 = vmatprep.subr.mxu0 0.0
  %v5132 = vand.u32 %v4021, 4294901760
  %5133 = vmatpush1.msra.mxu0 %v5132
  %5134 = vmatprep.subr.mxu0 0.0
  %v5135 = vand.u32 %v4022, 4294901760
  %5136 = vmatpush1.msra.mxu0 %v5135
  %5137 = vmatprep.subr.mxu0 0.0
  %5138 = vmatpush1.msra.mxu0 0.0
  %5139 = vmatprep.subr.mxu0 0.0
  %5140 = vmatpush1.msra.mxu0 0.0
  %5141 = vmatprep.subr.mxu0 0.0
  %5142 = vmatpush1.msra.mxu0 0.0
  %5143 = vmatprep.subr.mxu0 0.0
  %5144 = vmatpush1.msra.mxu0 0.0
  %5145 = vmatprep.subr.mxu0 0.0
  %5146 = vmatpush1.msra.mxu0 0.0
  %5147 = vmatprep.subr.mxu0 0.0
  %5148 = vmatpush1.msra.mxu0 0.0
  %5149 = vmatprep.subr.mxu0 0.0
  %5150 = vmatpush1.msra.mxu0 0.0
  %5151 = vmatprep.subr.mxu0 0.0
  %5152 = vmatpush1.msra.mxu0 0.0
  %5153 = vmatprep.subr.mxu0 0.0
  %5154 = vmatpush1.msra.mxu0 0.0
  %5155 = vmatprep.subr.mxu0 0.0
  %5156 = vmatpush1.msra.mxu0 0.0
  %5157 = vmatprep.subr.mxu0 0.0
  %5158 = vmatpush1.msra.mxu0 0.0
  %5159 = vmatprep.subr.mxu0 0.0
  %5160 = vmatpush1.msra.mxu0 0.0
  %5161 = vmatprep.subr.mxu0 0.0
  %5162 = vmatpush1.msra.mxu0 0.0
  %5163 = vmatprep.subr.mxu0 0.0
  %5164 = vmatpush1.msra.mxu0 0.0
  %5165 = vmatprep.subr.mxu0 0.0
  %5166 = vmatpush1.msra.mxu0 0.0
  %5167 = vmatprep.subr.mxu0 0.0
  %5168 = vmatpush1.msra.mxu0 0.0
  %5169 = vmatprep.mubr.f32.mxu0 0.0
  %v5170 = vand.u32 %v3975, 4294901760
  %v5171 = vsub.f32 %v3975, %v5170
  %v5172 = vand.u32 %v5171, 4294901760
  %5173 = vmatmul.mubr.f32.gmra.mrb[0].mxu0 %v5172
  %v5174 = vpop.f32.mrb[0].mxu0
  %v5175 = vadd.f32 %v4869, %v5174
  %v5176 = vpop.f32.mrb[0].mxu0
  %5177 = vmatprep.mubr.f32.mxu0 0.0
  %v5178 = vand.u32 %v3976, 4294901760
  %v5179 = vsub.f32 %v3976, %v5178
  %v5180 = vand.u32 %v5179, 4294901760
  %5181 = vmatmul.mubr.f32.gmra.mrb[0].mxu0 %v5180
  %v5182 = vpop.f32.mrb[0].mxu0
  %v5183 = vadd.f32 %v4876, %v5182
  %v5184 = vpop.f32.mrb[0].mxu0
  %5185 = vmatprep.mubr.f32.mxu0 0.0
  %v5186 = vand.u32 %v3977, 4294901760
  %v5187 = vsub.f32 %v3977, %v5186
  %v5188 = vand.u32 %v5187, 4294901760
  %5189 = vmatmul.mubr.f32.gmra.mrb[0].mxu0 %v5188
  %v5190 = vpop.f32.mrb[0].mxu0
  %v5191 = vadd.f32 %v4883, %v5190
  %v5192 = vpop.f32.mrb[0].mxu0
  %5193 = vmatprep.mubr.f32.mxu0 0.0
  %v5194 = vand.u32 %v3978, 4294901760
  %v5195 = vsub.f32 %v3978, %v5194
  %v5196 = vand.u32 %v5195, 4294901760
  %5197 = vmatmul.mubr.f32.gmra.mrb[0].mxu0 %v5196
  %v5198 = vpop.f32.mrb[0].mxu0
  %v5199 = vadd.f32 %v4890, %v5198
  %v5200 = vpop.f32.mrb[0].mxu0
  %5201 = vmatprep.mubr.f32.mxu0 0.0
  %v5202 = vand.u32 %v3979, 4294901760
  %v5203 = vsub.f32 %v3979, %v5202
  %v5204 = vand.u32 %v5203, 4294901760
  %5205 = vmatmul.mubr.f32.gmra.mrb[0].mxu0 %v5204
  %v5206 = vpop.f32.mrb[0].mxu0
  %v5207 = vadd.f32 %v4897, %v5206
  %v5208 = vpop.f32.mrb[0].mxu0
  %5209 = vmatprep.mubr.f32.mxu0 0.0
  %v5210 = vand.u32 %v3980, 4294901760
  %v5211 = vsub.f32 %v3980, %v5210
  %v5212 = vand.u32 %v5211, 4294901760
  %5213 = vmatmul.mubr.f32.gmra.mrb[0].mxu0 %v5212
  %v5214 = vpop.f32.mrb[0].mxu0
  %v5215 = vadd.f32 %v4904, %v5214
  %v5216 = vpop.f32.mrb[0].mxu0
  %5217 = vmatprep.mubr.f32.mxu0 0.0
  %v5218 = vand.u32 %v3981, 4294901760
  %v5219 = vsub.f32 %v3981, %v5218
  %v5220 = vand.u32 %v5219, 4294901760
  %5221 = vmatmul.mubr.f32.gmra.mrb[0].mxu0 %v5220
  %v5222 = vpop.f32.mrb[0].mxu0
  %v5223 = vadd.f32 %v4911, %v5222
  %v5224 = vpop.f32.mrb[0].mxu0
  %5225 = vmatprep.mubr.f32.mxu0 0.0
  %v5226 = vand.u32 %v3982, 4294901760
  %v5227 = vsub.f32 %v3982, %v5226
  %v5228 = vand.u32 %v5227, 4294901760
  %5229 = vmatmul.mubr.f32.gmra.mrb[0].mxu0 %v5228
  %v5230 = vpop.f32.mrb[0].mxu0
  %v5231 = vadd.f32 %v4918, %v5230
  %v5232 = vpop.f32.mrb[0].mxu0
  %5233 = vmatprep.mubr.f32.mxu0 0.0
  %v5234 = vand.u32 %v3983, 4294901760
  %v5235 = vsub.f32 %v3983, %v5234
  %v5236 = vand.u32 %v5235, 4294901760
  %5237 = vmatmul.mubr.f32.gmra.mrb[0].mxu0 %v5236
  %v5238 = vpop.f32.mrb[0].mxu0
  %v5239 = vadd.f32 %v4925, %v5238
  %v5240 = vpop.f32.mrb[0].mxu0
  %5241 = vmatprep.mubr.f32.mxu0 0.0
  %v5242 = vand.u32 %v3984, 4294901760
  %v5243 = vsub.f32 %v3984, %v5242
  %v5244 = vand.u32 %v5243, 4294901760
  %5245 = vmatmul.mubr.f32.gmra.mrb[0].mxu0 %v5244
  %v5246 = vpop.f32.mrb[0].mxu0
  %v5247 = vadd.f32 %v4932, %v5246
  %v5248 = vpop.f32.mrb[0].mxu0
  %5249 = vmatprep.mubr.f32.mxu0 0.0
  %v5250 = vand.u32 %v3985, 4294901760
  %v5251 = vsub.f32 %v3985, %v5250
  %v5252 = vand.u32 %v5251, 4294901760
  %5253 = vmatmul.mubr.f32.gmra.mrb[0].mxu0 %v5252
  %v5254 = vpop.f32.mrb[0].mxu0
  %v5255 = vadd.f32 %v4939, %v5254
  %v5256 = vpop.f32.mrb[0].mxu0
  %5257 = vmatprep.mubr.f32.mxu0 0.0
  %v5258 = vand.u32 %v3986, 4294901760
  %v5259 = vsub.f32 %v3986, %v5258
  %v5260 = vand.u32 %v5259, 4294901760
  %5261 = vmatmul.mubr.f32.gmra.mrb[0].mxu0 %v5260
  %v5262 = vpop.f32.mrb[0].mxu0
  %v5263 = vadd.f32 %v4946, %v5262
  %v5264 = vpop.f32.mrb[0].mxu0
  %5265 = vmatprep.mubr.f32.mxu0 0.0
  %v5266 = vand.u32 %v3987, 4294901760
  %v5267 = vsub.f32 %v3987, %v5266
  %v5268 = vand.u32 %v5267, 4294901760
  %5269 = vmatmul.mubr.f32.gmra.mrb[0].mxu0 %v5268
  %v5270 = vpop.f32.mrb[0].mxu0
  %v5271 = vadd.f32 %v4953, %v5270
  %v5272 = vpop.f32.mrb[0].mxu0
  %5273 = vmatprep.mubr.f32.mxu0 0.0
  %v5274 = vand.u32 %v3988, 4294901760
  %v5275 = vsub.f32 %v3988, %v5274
  %v5276 = vand.u32 %v5275, 4294901760
  %5277 = vmatmul.mubr.f32.gmra.mrb[0].mxu0 %v5276
  %v5278 = vpop.f32.mrb[0].mxu0
  %v5279 = vadd.f32 %v4960, %v5278
  %v5280 = vpop.f32.mrb[0].mxu0
  %5281 = vmatprep.mubr.f32.mxu0 0.0
  %v5282 = vand.u32 %v3989, 4294901760
  %v5283 = vsub.f32 %v3989, %v5282
  %v5284 = vand.u32 %v5283, 4294901760
  %5285 = vmatmul.mubr.f32.gmra.mrb[0].mxu0 %v5284
  %v5286 = vpop.f32.mrb[0].mxu0
  %v5287 = vadd.f32 %v4967, %v5286
  %v5288 = vpop.f32.mrb[0].mxu0
  %5289 = vmatprep.mubr.f32.mxu0 0.0
  %v5290 = vand.u32 %v3990, 4294901760
  %v5291 = vsub.f32 %v3990, %v5290
  %v5292 = vand.u32 %v5291, 4294901760
  %5293 = vmatmul.mubr.f32.gmra.mrb[0].mxu0 %v5292
  %v5294 = vpop.f32.mrb[0].mxu0
  %v5295 = vadd.f32 %v4974, %v5294
  %v5296 = vpop.f32.mrb[0].mxu0
  %5297 = vmatprep.mubr.f32.mxu0 0.0
  %v5298 = vand.u32 %v3991, 4294901760
  %v5299 = vsub.f32 %v3991, %v5298
  %v5300 = vand.u32 %v5299, 4294901760
  %5301 = vmatmul.mubr.f32.gmra.mrb[0].mxu0 %v5300
  %v5302 = vpop.f32.mrb[0].mxu0
  %v5303 = vadd.f32 %v4981, %v5302
  %v5304 = vpop.f32.mrb[0].mxu0
  %5305 = vmatprep.mubr.f32.mxu0 0.0
  %v5306 = vand.u32 %v3992, 4294901760
  %v5307 = vsub.f32 %v3992, %v5306
  %v5308 = vand.u32 %v5307, 4294901760
  %5309 = vmatmul.mubr.f32.gmra.mrb[0].mxu0 %v5308
  %v5310 = vpop.f32.mrb[0].mxu0
  %v5311 = vadd.f32 %v4988, %v5310
  %v5312 = vpop.f32.mrb[0].mxu0
  %5313 = vmatprep.mubr.f32.mxu0 0.0
  %v5314 = vand.u32 %v3993, 4294901760
  %v5315 = vsub.f32 %v3993, %v5314
  %v5316 = vand.u32 %v5315, 4294901760
  %5317 = vmatmul.mubr.f32.gmra.mrb[0].mxu0 %v5316
  %v5318 = vpop.f32.mrb[0].mxu0
  %v5319 = vadd.f32 %v4995, %v5318
  %v5320 = vpop.f32.mrb[0].mxu0
  %5321 = vmatprep.mubr.f32.mxu0 0.0
  %v5322 = vand.u32 %v3994, 4294901760
  %v5323 = vsub.f32 %v3994, %v5322
  %v5324 = vand.u32 %v5323, 4294901760
  %5325 = vmatmul.mubr.f32.gmra.mrb[0].mxu0 %v5324
  %v5326 = vpop.f32.mrb[0].mxu0
  %v5327 = vadd.f32 %v5002, %v5326
  %v5328 = vpop.f32.mrb[0].mxu0
  %5329 = vmatprep.mubr.f32.mxu0 0.0
  %v5330 = vand.u32 %v3995, 4294901760
  %v5331 = vsub.f32 %v3995, %v5330
  %v5332 = vand.u32 %v5331, 4294901760
  %5333 = vmatmul.mubr.f32.gmra.mrb[0].mxu0 %v5332
  %v5334 = vpop.f32.mrb[0].mxu0
  %v5335 = vadd.f32 %v5009, %v5334
  %v5336 = vpop.f32.mrb[0].mxu0
  %5337 = vmatprep.mubr.f32.mxu0 0.0
  %v5338 = vand.u32 %v3996, 4294901760
  %v5339 = vsub.f32 %v3996, %v5338
  %v5340 = vand.u32 %v5339, 4294901760
  %5341 = vmatmul.mubr.f32.gmra.mrb[0].mxu0 %v5340
  %v5342 = vpop.f32.mrb[0].mxu0
  %v5343 = vadd.f32 %v5016, %v5342
  %v5344 = vpop.f32.mrb[0].mxu0
  %5345 = vmatprep.mubr.f32.mxu0 0.0
  %v5346 = vand.u32 %v3997, 4294901760
  %v5347 = vsub.f32 %v3997, %v5346
  %v5348 = vand.u32 %v5347, 4294901760
  %5349 = vmatmul.mubr.f32.gmra.mrb[0].mxu0 %v5348
  %v5350 = vpop.f32.mrb[0].mxu0
  %v5351 = vadd.f32 %v5023, %v5350
  %v5352 = vpop.f32.mrb[0].mxu0
  %5353 = vmatprep.mubr.f32.mxu0 0.0
  %v5354 = vand.u32 %v3998, 4294901760
  %v5355 = vsub.f32 %v3998, %v5354
  %v5356 = vand.u32 %v5355, 4294901760
  %5357 = vmatmul.mubr.f32.gmra.mrb[0].mxu0 %v5356
  %v5358 = vpop.f32.mrb[0].mxu0
  %v5359 = vadd.f32 %v5030, %v5358
  %v5360 = vpop.f32.mrb[0].mxu0
  %5361 = vmatprep.mubr.f32.mxu0 0.0
  %v5362 = vand.u32 %v3999, 4294901760
  %v5363 = vsub.f32 %v3999, %v5362
  %v5364 = vand.u32 %v5363, 4294901760
  %5365 = vmatmul.mubr.f32.gmra.mrb[0].mxu0 %v5364
  %v5366 = vpop.f32.mrb[0].mxu0
  %v5367 = vadd.f32 %v5037, %v5366
  %v5368 = vpop.f32.mrb[0].mxu0
  %5369 = vmatprep.mubr.f32.mxu0 0.0
  %v5370 = vand.u32 %v4000, 4294901760
  %v5371 = vsub.f32 %v4000, %v5370
  %v5372 = vand.u32 %v5371, 4294901760
  %5373 = vmatmul.mubr.f32.gmra.mrb[0].mxu0 %v5372
  %v5374 = vpop.f32.mrb[0].mxu0
  %v5375 = vadd.f32 %v5044, %v5374
  %v5376 = vpop.f32.mrb[0].mxu0
  %5377 = vmatprep.mubr.f32.mxu0 0.0
  %v5378 = vand.u32 %v4001, 4294901760
  %v5379 = vsub.f32 %v4001, %v5378
  %v5380 = vand.u32 %v5379, 4294901760
  %5381 = vmatmul.mubr.f32.gmra.mrb[0].mxu0 %v5380
  %v5382 = vpop.f32.mrb[0].mxu0
  %v5383 = vadd.f32 %v5051, %v5382
  %v5384 = vpop.f32.mrb[0].mxu0
  %5385 = vmatprep.mubr.f32.mxu0 0.0
  %v5386 = vand.u32 %v4002, 4294901760
  %v5387 = vsub.f32 %v4002, %v5386
  %v5388 = vand.u32 %v5387, 4294901760
  %5389 = vmatmul.mubr.f32.gmra.mrb[0].mxu0 %v5388
  %v5390 = vpop.f32.mrb[0].mxu0
  %v5391 = vadd.f32 %v5058, %v5390
  %v5392 = vpop.f32.mrb[0].mxu0
  %5393 = vmatprep.mubr.f32.mxu0 0.0
  %v5394 = vand.u32 %v4003, 4294901760
  %v5395 = vsub.f32 %v4003, %v5394
  %v5396 = vand.u32 %v5395, 4294901760
  %5397 = vmatmul.mubr.f32.gmra.mrb[0].mxu0 %v5396
  %v5398 = vpop.f32.mrb[0].mxu0
  %v5399 = vadd.f32 %v5065, %v5398
  %v5400 = vpop.f32.mrb[0].mxu0
  %5401 = vmatprep.mubr.f32.mxu0 0.0
  %v5402 = vand.u32 %v4004, 4294901760
  %v5403 = vsub.f32 %v4004, %v5402
  %v5404 = vand.u32 %v5403, 4294901760
  %5405 = vmatmul.mubr.f32.gmra.mrb[0].mxu0 %v5404
  %v5406 = vpop.f32.mrb[0].mxu0
  %v5407 = vadd.f32 %v5072, %v5406
  %v5408 = vpop.f32.mrb[0].mxu0
  %5409 = vmatprep.mubr.f32.mxu0 0.0
  %v5410 = vand.u32 %v4005, 4294901760
  %v5411 = vsub.f32 %v4005, %v5410
  %v5412 = vand.u32 %v5411, 4294901760
  %5413 = vmatmul.mubr.f32.gmra.mrb[0].mxu0 %v5412
  %v5414 = vpop.f32.mrb[0].mxu0
  %v5415 = vadd.f32 %v5079, %v5414
  %v5416 = vpop.f32.mrb[0].mxu0
  %5417 = vmatprep.mubr.f32.mxu0 0.0
  %v5418 = vand.u32 %v4006, 4294901760
  %v5419 = vsub.f32 %v4006, %v5418
  %v5420 = vand.u32 %v5419, 4294901760
  %5421 = vmatmul.mubr.f32.gmra.mrb[0].mxu0 %v5420
  %v5422 = vpop.f32.mrb[0].mxu0
  %v5423 = vadd.f32 %v5086, %v5422
  %v5424 = vpop.f32.mrb[0].mxu0
  %5425 = vdwg.mxu0
  %5426 = vmatprep.subr.mxu0 0.0
  %v5427 = vand.u32 %v4007, 4294901760
  %v5428 = vsub.f32 %v4007, %v5427
  %v5429 = vand.u32 %v5428, 4294901760
  %5430 = vmatpush1.msra.mxu0 %v5429
  %5431 = vmatprep.subr.mxu0 0.0
  %v5432 = vand.u32 %v4008, 4294901760
  %v5433 = vsub.f32 %v4008, %v5432
  %v5434 = vand.u32 %v5433, 4294901760
  %5435 = vmatpush1.msra.mxu0 %v5434
  %5436 = vmatprep.subr.mxu0 0.0
  %v5437 = vand.u32 %v4009, 4294901760
  %v5438 = vsub.f32 %v4009, %v5437
  %v5439 = vand.u32 %v5438, 4294901760
  %5440 = vmatpush1.msra.mxu0 %v5439
  %5441 = vmatprep.subr.mxu0 0.0
  %v5442 = vand.u32 %v4010, 4294901760
  %v5443 = vsub.f32 %v4010, %v5442
  %v5444 = vand.u32 %v5443, 4294901760
  %5445 = vmatpush1.msra.mxu0 %v5444
  %5446 = vmatprep.subr.mxu0 0.0
  %v5447 = vand.u32 %v4011, 4294901760
  %v5448 = vsub.f32 %v4011, %v5447
  %v5449 = vand.u32 %v5448, 4294901760
  %5450 = vmatpush1.msra.mxu0 %v5449
  %5451 = vmatprep.subr.mxu0 0.0
  %v5452 = vand.u32 %v4012, 4294901760
  %v5453 = vsub.f32 %v4012, %v5452
  %v5454 = vand.u32 %v5453, 4294901760
  %5455 = vmatpush1.msra.mxu0 %v5454
  %5456 = vmatprep.subr.mxu0 0.0
  %v5457 = vand.u32 %v4013, 4294901760
  %v5458 = vsub.f32 %v4013, %v5457
  %v5459 = vand.u32 %v5458, 4294901760
  %5460 = vmatpush1.msra.mxu0 %v5459
  %5461 = vmatprep.subr.mxu0 0.0
  %v5462 = vand.u32 %v4014, 4294901760
  %v5463 = vsub.f32 %v4014, %v5462
  %v5464 = vand.u32 %v5463, 4294901760
  %5465 = vmatpush1.msra.mxu0 %v5464
  %5466 = vmatprep.subr.mxu0 0.0
  %v5467 = vand.u32 %v4015, 4294901760
  %v5468 = vsub.f32 %v4015, %v5467
  %v5469 = vand.u32 %v5468, 4294901760
  %5470 = vmatpush1.msra.mxu0 %v5469
  %5471 = vmatprep.subr.mxu0 0.0
  %v5472 = vand.u32 %v4016, 4294901760
  %v5473 = vsub.f32 %v4016, %v5472
  %v5474 = vand.u32 %v5473, 4294901760
  %5475 = vmatpush1.msra.mxu0 %v5474
  %5476 = vmatprep.subr.mxu0 0.0
  %v5477 = vand.u32 %v4017, 4294901760
  %v5478 = vsub.f32 %v4017, %v5477
  %v5479 = vand.u32 %v5478, 4294901760
  %5480 = vmatpush1.msra.mxu0 %v5479
  %5481 = vmatprep.subr.mxu0 0.0
  %v5482 = vand.u32 %v4018, 4294901760
  %v5483 = vsub.f32 %v4018, %v5482
  %v5484 = vand.u32 %v5483, 4294901760
  %5485 = vmatpush1.msra.mxu0 %v5484
  %5486 = vmatprep.subr.mxu0 0.0
  %v5487 = vand.u32 %v4019, 4294901760
  %v5488 = vsub.f32 %v4019, %v5487
  %v5489 = vand.u32 %v5488, 4294901760
  %5490 = vmatpush1.msra.mxu0 %v5489
  %5491 = vmatprep.subr.mxu0 0.0
  %v5492 = vand.u32 %v4020, 4294901760
  %v5493 = vsub.f32 %v4020, %v5492
  %v5494 = vand.u32 %v5493, 4294901760
  %5495 = vmatpush1.msra.mxu0 %v5494
  %5496 = vmatprep.subr.mxu0 0.0
  %v5497 = vand.u32 %v4021, 4294901760
  %v5498 = vsub.f32 %v4021, %v5497
  %v5499 = vand.u32 %v5498, 4294901760
  %5500 = vmatpush1.msra.mxu0 %v5499
  %5501 = vmatprep.subr.mxu0 0.0
  %v5502 = vand.u32 %v4022, 4294901760
  %v5503 = vsub.f32 %v4022, %v5502
  %v5504 = vand.u32 %v5503, 4294901760
  %5505 = vmatpush1.msra.mxu0 %v5504
  %5506 = vmatprep.subr.mxu0 0.0
  %5507 = vmatpush1.msra.mxu0 0.0
  %5508 = vmatprep.subr.mxu0 0.0
  %5509 = vmatpush1.msra.mxu0 0.0
  %5510 = vmatprep.subr.mxu0 0.0
  %5511 = vmatpush1.msra.mxu0 0.0
  %5512 = vmatprep.subr.mxu0 0.0
  %5513 = vmatpush1.msra.mxu0 0.0
  %5514 = vmatprep.subr.mxu0 0.0
  %5515 = vmatpush1.msra.mxu0 0.0
  %5516 = vmatprep.subr.mxu0 0.0
  %5517 = vmatpush1.msra.mxu0 0.0
  %5518 = vmatprep.subr.mxu0 0.0
  %5519 = vmatpush1.msra.mxu0 0.0
  %5520 = vmatprep.subr.mxu0 0.0
  %5521 = vmatpush1.msra.mxu0 0.0
  %5522 = vmatprep.subr.mxu0 0.0
  %5523 = vmatpush1.msra.mxu0 0.0
  %5524 = vmatprep.subr.mxu0 0.0
  %5525 = vmatpush1.msra.mxu0 0.0
  %5526 = vmatprep.subr.mxu0 0.0
  %5527 = vmatpush1.msra.mxu0 0.0
  %5528 = vmatprep.subr.mxu0 0.0
  %5529 = vmatpush1.msra.mxu0 0.0
  %5530 = vmatprep.subr.mxu0 0.0
  %5531 = vmatpush1.msra.mxu0 0.0
  %5532 = vmatprep.subr.mxu0 0.0
  %5533 = vmatpush1.msra.mxu0 0.0
  %5534 = vmatprep.subr.mxu0 0.0
  %5535 = vmatpush1.msra.mxu0 0.0
  %5536 = vmatprep.subr.mxu0 0.0
  %5537 = vmatpush1.msra.mxu0 0.0
  %5538 = vmatprep.mubr.f32.mxu0 0.0
  %v5539 = vand.u32 %v3975, 4294901760
  %5540 = vmatmul.mubr.f32.gmra.mrb[0].mxu0 %v5539
  %v5541 = vpop.f32.mrb[0].mxu0
  %v5542 = vadd.f32 %v5175, %v5541
  %v5543 = vpop.f32.mrb[0].mxu0
  %5544 = vmatprep.mubr.f32.mxu0 0.0
  %v5545 = vand.u32 %v3976, 4294901760
  %5546 = vmatmul.mubr.f32.gmra.mrb[0].mxu0 %v5545
  %v5547 = vpop.f32.mrb[0].mxu0
  %v5548 = vadd.f32 %v5183, %v5547
  %v5549 = vpop.f32.mrb[0].mxu0
  %5550 = vmatprep.mubr.f32.mxu0 0.0
  %v5551 = vand.u32 %v3977, 4294901760
  %5552 = vmatmul.mubr.f32.gmra.mrb[0].mxu0 %v5551
  %v5553 = vpop.f32.mrb[0].mxu0
  %v5554 = vadd.f32 %v5191, %v5553
  %v5555 = vpop.f32.mrb[0].mxu0
  %5556 = vmatprep.mubr.f32.mxu0 0.0
  %v5557 = vand.u32 %v3978, 4294901760
  %5558 = vmatmul.mubr.f32.gmra.mrb[0].mxu0 %v5557
  %v5559 = vpop.f32.mrb[0].mxu0
  %v5560 = vadd.f32 %v5199, %v5559
  %v5561 = vpop.f32.mrb[0].mxu0
  %5562 = vmatprep.mubr.f32.mxu0 0.0
  %v5563 = vand.u32 %v3979, 4294901760
  %5564 = vmatmul.mubr.f32.gmra.mrb[0].mxu0 %v5563
  %v5565 = vpop.f32.mrb[0].mxu0
  %v5566 = vadd.f32 %v5207, %v5565
  %v5567 = vpop.f32.mrb[0].mxu0
  %5568 = vmatprep.mubr.f32.mxu0 0.0
  %v5569 = vand.u32 %v3980, 4294901760
  %5570 = vmatmul.mubr.f32.gmra.mrb[0].mxu0 %v5569
  %v5571 = vpop.f32.mrb[0].mxu0
  %v5572 = vadd.f32 %v5215, %v5571
  %v5573 = vpop.f32.mrb[0].mxu0
  %5574 = vmatprep.mubr.f32.mxu0 0.0
  %v5575 = vand.u32 %v3981, 4294901760
  %5576 = vmatmul.mubr.f32.gmra.mrb[0].mxu0 %v5575
  %v5577 = vpop.f32.mrb[0].mxu0
  %v5578 = vadd.f32 %v5223, %v5577
  %v5579 = vpop.f32.mrb[0].mxu0
  %5580 = vmatprep.mubr.f32.mxu0 0.0
  %v5581 = vand.u32 %v3982, 4294901760
  %5582 = vmatmul.mubr.f32.gmra.mrb[0].mxu0 %v5581
  %v5583 = vpop.f32.mrb[0].mxu0
  %v5584 = vadd.f32 %v5231, %v5583
  %v5585 = vpop.f32.mrb[0].mxu0
  %5586 = vmatprep.mubr.f32.mxu0 0.0
  %v5587 = vand.u32 %v3983, 4294901760
  %5588 = vmatmul.mubr.f32.gmra.mrb[0].mxu0 %v5587
  %v5589 = vpop.f32.mrb[0].mxu0
  %v5590 = vadd.f32 %v5239, %v5589
  %v5591 = vpop.f32.mrb[0].mxu0
  %5592 = vmatprep.mubr.f32.mxu0 0.0
  %v5593 = vand.u32 %v3984, 4294901760
  %5594 = vmatmul.mubr.f32.gmra.mrb[0].mxu0 %v5593
  %v5595 = vpop.f32.mrb[0].mxu0
  %v5596 = vadd.f32 %v5247, %v5595
  %v5597 = vpop.f32.mrb[0].mxu0
  %5598 = vmatprep.mubr.f32.mxu0 0.0
  %v5599 = vand.u32 %v3985, 4294901760
  %5600 = vmatmul.mubr.f32.gmra.mrb[0].mxu0 %v5599
  %v5601 = vpop.f32.mrb[0].mxu0
  %v5602 = vadd.f32 %v5255, %v5601
  %v5603 = vpop.f32.mrb[0].mxu0
  %5604 = vmatprep.mubr.f32.mxu0 0.0
  %v5605 = vand.u32 %v3986, 4294901760
  %5606 = vmatmul.mubr.f32.gmra.mrb[0].mxu0 %v5605
  %v5607 = vpop.f32.mrb[0].mxu0
  %v5608 = vadd.f32 %v5263, %v5607
  %v5609 = vpop.f32.mrb[0].mxu0
  %5610 = vmatprep.mubr.f32.mxu0 0.0
  %v5611 = vand.u32 %v3987, 4294901760
  %5612 = vmatmul.mubr.f32.gmra.mrb[0].mxu0 %v5611
  %v5613 = vpop.f32.mrb[0].mxu0
  %v5614 = vadd.f32 %v5271, %v5613
  %v5615 = vpop.f32.mrb[0].mxu0
  %5616 = vmatprep.mubr.f32.mxu0 0.0
  %v5617 = vand.u32 %v3988, 4294901760
  %5618 = vmatmul.mubr.f32.gmra.mrb[0].mxu0 %v5617
  %v5619 = vpop.f32.mrb[0].mxu0
  %v5620 = vadd.f32 %v5279, %v5619
  %v5621 = vpop.f32.mrb[0].mxu0
  %5622 = vmatprep.mubr.f32.mxu0 0.0
  %v5623 = vand.u32 %v3989, 4294901760
  %5624 = vmatmul.mubr.f32.gmra.mrb[0].mxu0 %v5623
  %v5625 = vpop.f32.mrb[0].mxu0
  %v5626 = vadd.f32 %v5287, %v5625
  %v5627 = vpop.f32.mrb[0].mxu0
  %5628 = vmatprep.mubr.f32.mxu0 0.0
  %v5629 = vand.u32 %v3990, 4294901760
  %5630 = vmatmul.mubr.f32.gmra.mrb[0].mxu0 %v5629
  %v5631 = vpop.f32.mrb[0].mxu0
  %v5632 = vadd.f32 %v5295, %v5631
  %v5633 = vpop.f32.mrb[0].mxu0
  %5634 = vmatprep.mubr.f32.mxu0 0.0
  %v5635 = vand.u32 %v3991, 4294901760
  %5636 = vmatmul.mubr.f32.gmra.mrb[0].mxu0 %v5635
  %v5637 = vpop.f32.mrb[0].mxu0
  %v5638 = vadd.f32 %v5303, %v5637
  %v5639 = vpop.f32.mrb[0].mxu0
  %5640 = vmatprep.mubr.f32.mxu0 0.0
  %v5641 = vand.u32 %v3992, 4294901760
  %5642 = vmatmul.mubr.f32.gmra.mrb[0].mxu0 %v5641
  %v5643 = vpop.f32.mrb[0].mxu0
  %v5644 = vadd.f32 %v5311, %v5643
  %v5645 = vpop.f32.mrb[0].mxu0
  %5646 = vmatprep.mubr.f32.mxu0 0.0
  %v5647 = vand.u32 %v3993, 4294901760
  %5648 = vmatmul.mubr.f32.gmra.mrb[0].mxu0 %v5647
  %v5649 = vpop.f32.mrb[0].mxu0
  %v5650 = vadd.f32 %v5319, %v5649
  %v5651 = vpop.f32.mrb[0].mxu0
  %5652 = vmatprep.mubr.f32.mxu0 0.0
  %v5653 = vand.u32 %v3994, 4294901760
  %5654 = vmatmul.mubr.f32.gmra.mrb[0].mxu0 %v5653
  %v5655 = vpop.f32.mrb[0].mxu0
  %v5656 = vadd.f32 %v5327, %v5655
  %v5657 = vpop.f32.mrb[0].mxu0
  %5658 = vmatprep.mubr.f32.mxu0 0.0
  %v5659 = vand.u32 %v3995, 4294901760
  %5660 = vmatmul.mubr.f32.gmra.mrb[0].mxu0 %v5659
  %v5661 = vpop.f32.mrb[0].mxu0
  %v5662 = vadd.f32 %v5335, %v5661
  %v5663 = vpop.f32.mrb[0].mxu0
  %5664 = vmatprep.mubr.f32.mxu0 0.0
  %v5665 = vand.u32 %v3996, 4294901760
  %5666 = vmatmul.mubr.f32.gmra.mrb[0].mxu0 %v5665
  %v5667 = vpop.f32.mrb[0].mxu0
  %v5668 = vadd.f32 %v5343, %v5667
  %v5669 = vpop.f32.mrb[0].mxu0
  %5670 = vmatprep.mubr.f32.mxu0 0.0
  %v5671 = vand.u32 %v3997, 4294901760
  %5672 = vmatmul.mubr.f32.gmra.mrb[0].mxu0 %v5671
  %v5673 = vpop.f32.mrb[0].mxu0
  %v5674 = vadd.f32 %v5351, %v5673
  %v5675 = vpop.f32.mrb[0].mxu0
  %5676 = vmatprep.mubr.f32.mxu0 0.0
  %v5677 = vand.u32 %v3998, 4294901760
  %5678 = vmatmul.mubr.f32.gmra.mrb[0].mxu0 %v5677
  %v5679 = vpop.f32.mrb[0].mxu0
  %v5680 = vadd.f32 %v5359, %v5679
  %v5681 = vpop.f32.mrb[0].mxu0
  %5682 = vmatprep.mubr.f32.mxu0 0.0
  %v5683 = vand.u32 %v3999, 4294901760
  %5684 = vmatmul.mubr.f32.gmra.mrb[0].mxu0 %v5683
  %v5685 = vpop.f32.mrb[0].mxu0
  %v5686 = vadd.f32 %v5367, %v5685
  %v5687 = vpop.f32.mrb[0].mxu0
  %5688 = vmatprep.mubr.f32.mxu0 0.0
  %v5689 = vand.u32 %v4000, 4294901760
  %5690 = vmatmul.mubr.f32.gmra.mrb[0].mxu0 %v5689
  %v5691 = vpop.f32.mrb[0].mxu0
  %v5692 = vadd.f32 %v5375, %v5691
  %v5693 = vpop.f32.mrb[0].mxu0
  %5694 = vmatprep.mubr.f32.mxu0 0.0
  %v5695 = vand.u32 %v4001, 4294901760
  %5696 = vmatmul.mubr.f32.gmra.mrb[0].mxu0 %v5695
  %v5697 = vpop.f32.mrb[0].mxu0
  %v5698 = vadd.f32 %v5383, %v5697
  %v5699 = vpop.f32.mrb[0].mxu0
  %5700 = vmatprep.mubr.f32.mxu0 0.0
  %v5701 = vand.u32 %v4002, 4294901760
  %5702 = vmatmul.mubr.f32.gmra.mrb[0].mxu0 %v5701
  %v5703 = vpop.f32.mrb[0].mxu0
  %v5704 = vadd.f32 %v5391, %v5703
  %v5705 = vpop.f32.mrb[0].mxu0
  %5706 = vmatprep.mubr.f32.mxu0 0.0
  %v5707 = vand.u32 %v4003, 4294901760
  %5708 = vmatmul.mubr.f32.gmra.mrb[0].mxu0 %v5707
  %v5709 = vpop.f32.mrb[0].mxu0
  %v5710 = vadd.f32 %v5399, %v5709
  %v5711 = vpop.f32.mrb[0].mxu0
  %5712 = vmatprep.mubr.f32.mxu0 0.0
  %v5713 = vand.u32 %v4004, 4294901760
  %5714 = vmatmul.mubr.f32.gmra.mrb[0].mxu0 %v5713
  %v5715 = vpop.f32.mrb[0].mxu0
  %v5716 = vadd.f32 %v5407, %v5715
  %v5717 = vpop.f32.mrb[0].mxu0
  %5718 = vmatprep.mubr.f32.mxu0 0.0
  %v5719 = vand.u32 %v4005, 4294901760
  %5720 = vmatmul.mubr.f32.gmra.mrb[0].mxu0 %v5719
  %v5721 = vpop.f32.mrb[0].mxu0
  %v5722 = vadd.f32 %v5415, %v5721
  %v5723 = vpop.f32.mrb[0].mxu0
  %5724 = vmatprep.mubr.f32.mxu0 0.0
  %v5725 = vand.u32 %v4006, 4294901760
  %5726 = vmatmul.mubr.f32.gmra.mrb[0].mxu0 %v5725
  %v5727 = vpop.f32.mrb[0].mxu0
  %v5728 = vadd.f32 %v5423, %v5727
  %v5729 = vpop.f32.mrb[0].mxu0
  %5730 = vdwg.mxu0
  %5731 = vmatprep.subr.mxu0 0.0
  %v5732 = vand.u32 %v4007, 4294901760
  %5733 = vmatpush1.msra.mxu0 %v5732
  %5734 = vmatprep.subr.mxu0 0.0
  %v5735 = vand.u32 %v4008, 4294901760
  %5736 = vmatpush1.msra.mxu0 %v5735
  %5737 = vmatprep.subr.mxu0 0.0
  %v5738 = vand.u32 %v4009, 4294901760
  %5739 = vmatpush1.msra.mxu0 %v5738
  %5740 = vmatprep.subr.mxu0 0.0
  %v5741 = vand.u32 %v4010, 4294901760
  %5742 = vmatpush1.msra.mxu0 %v5741
  %5743 = vmatprep.subr.mxu0 0.0
  %v5744 = vand.u32 %v4011, 4294901760
  %5745 = vmatpush1.msra.mxu0 %v5744
  %5746 = vmatprep.subr.mxu0 0.0
  %v5747 = vand.u32 %v4012, 4294901760
  %5748 = vmatpush1.msra.mxu0 %v5747
  %5749 = vmatprep.subr.mxu0 0.0
  %v5750 = vand.u32 %v4013, 4294901760
  %5751 = vmatpush1.msra.mxu0 %v5750
  %5752 = vmatprep.subr.mxu0 0.0
  %v5753 = vand.u32 %v4014, 4294901760
  %5754 = vmatpush1.msra.mxu0 %v5753
  %5755 = vmatprep.subr.mxu0 0.0
  %v5756 = vand.u32 %v4015, 4294901760
  %5757 = vmatpush1.msra.mxu0 %v5756
  %5758 = vmatprep.subr.mxu0 0.0
  %v5759 = vand.u32 %v4016, 4294901760
  %5760 = vmatpush1.msra.mxu0 %v5759
  %5761 = vmatprep.subr.mxu0 0.0
  %v5762 = vand.u32 %v4017, 4294901760
  %5763 = vmatpush1.msra.mxu0 %v5762
  %5764 = vmatprep.subr.mxu0 0.0
  %v5765 = vand.u32 %v4018, 4294901760
  %5766 = vmatpush1.msra.mxu0 %v5765
  %5767 = vmatprep.subr.mxu0 0.0
  %v5768 = vand.u32 %v4019, 4294901760
  %5769 = vmatpush1.msra.mxu0 %v5768
  %5770 = vmatprep.subr.mxu0 0.0
  %v5771 = vand.u32 %v4020, 4294901760
  %5772 = vmatpush1.msra.mxu0 %v5771
  %5773 = vmatprep.subr.mxu0 0.0
  %v5774 = vand.u32 %v4021, 4294901760
  %5775 = vmatpush1.msra.mxu0 %v5774
  %5776 = vmatprep.subr.mxu0 0.0
  %v5777 = vand.u32 %v4022, 4294901760
  %5778 = vmatpush1.msra.mxu0 %v5777
  %5779 = vmatprep.subr.mxu0 0.0
  %5780 = vmatpush1.msra.mxu0 0.0
  %5781 = vmatprep.subr.mxu0 0.0
  %5782 = vmatpush1.msra.mxu0 0.0
  %5783 = vmatprep.subr.mxu0 0.0
  %5784 = vmatpush1.msra.mxu0 0.0
  %5785 = vmatprep.subr.mxu0 0.0
  %5786 = vmatpush1.msra.mxu0 0.0
  %5787 = vmatprep.subr.mxu0 0.0
  %5788 = vmatpush1.msra.mxu0 0.0
  %5789 = vmatprep.subr.mxu0 0.0
  %5790 = vmatpush1.msra.mxu0 0.0
  %5791 = vmatprep.subr.mxu0 0.0
  %5792 = vmatpush1.msra.mxu0 0.0
  %5793 = vmatprep.subr.mxu0 0.0
  %5794 = vmatpush1.msra.mxu0 0.0
  %5795 = vmatprep.subr.mxu0 0.0
  %5796 = vmatpush1.msra.mxu0 0.0
  %5797 = vmatprep.subr.mxu0 0.0
  %5798 = vmatpush1.msra.mxu0 0.0
  %5799 = vmatprep.subr.mxu0 0.0
  %5800 = vmatpush1.msra.mxu0 0.0
  %5801 = vmatprep.subr.mxu0 0.0
  %5802 = vmatpush1.msra.mxu0 0.0
  %5803 = vmatprep.subr.mxu0 0.0
  %5804 = vmatpush1.msra.mxu0 0.0
  %5805 = vmatprep.subr.mxu0 0.0
  %5806 = vmatpush1.msra.mxu0 0.0
  %5807 = vmatprep.subr.mxu0 0.0
  %5808 = vmatpush1.msra.mxu0 0.0
  %5809 = vmatprep.subr.mxu0 0.0
  %5810 = vmatpush1.msra.mxu0 0.0
  %5811 = vmatprep.mubr.f32.mxu0 0.0
  %v5812 = vand.u32 %v3975, 4294901760
  %5813 = vmatmul.mubr.f32.gmra.mrb[0].mxu0 %v5812
  %v5814 = vpop.f32.mrb[0].mxu0
  %v5815 = vadd.f32 %v5542, %v5814
  %v5816 = vpop.f32.mrb[0].mxu0
  %5817 = vmatprep.mubr.f32.mxu0 0.0
  %v5818 = vand.u32 %v3976, 4294901760
  %5819 = vmatmul.mubr.f32.gmra.mrb[0].mxu0 %v5818
  %v5820 = vpop.f32.mrb[0].mxu0
  %v5821 = vadd.f32 %v5548, %v5820
  %v5822 = vpop.f32.mrb[0].mxu0
  %5823 = vmatprep.mubr.f32.mxu0 0.0
  %v5824 = vand.u32 %v3977, 4294901760
  %5825 = vmatmul.mubr.f32.gmra.mrb[0].mxu0 %v5824
  %v5826 = vpop.f32.mrb[0].mxu0
  %v5827 = vadd.f32 %v5554, %v5826
  %v5828 = vpop.f32.mrb[0].mxu0
  %5829 = vmatprep.mubr.f32.mxu0 0.0
  %v5830 = vand.u32 %v3978, 4294901760
  %5831 = vmatmul.mubr.f32.gmra.mrb[0].mxu0 %v5830
  %v5832 = vpop.f32.mrb[0].mxu0
  %v5833 = vadd.f32 %v5560, %v5832
  %v5834 = vpop.f32.mrb[0].mxu0
  %5835 = vmatprep.mubr.f32.mxu0 0.0
  %v5836 = vand.u32 %v3979, 4294901760
  %5837 = vmatmul.mubr.f32.gmra.mrb[0].mxu0 %v5836
  %v5838 = vpop.f32.mrb[0].mxu0
  %v5839 = vadd.f32 %v5566, %v5838
  %v5840 = vpop.f32.mrb[0].mxu0
  %5841 = vmatprep.mubr.f32.mxu0 0.0
  %v5842 = vand.u32 %v3980, 4294901760
  %5843 = vmatmul.mubr.f32.gmra.mrb[0].mxu0 %v5842
  %v5844 = vpop.f32.mrb[0].mxu0
  %v5845 = vadd.f32 %v5572, %v5844
  %v5846 = vpop.f32.mrb[0].mxu0
  %5847 = vmatprep.mubr.f32.mxu0 0.0
  %v5848 = vand.u32 %v3981, 4294901760
  %5849 = vmatmul.mubr.f32.gmra.mrb[0].mxu0 %v5848
  %v5850 = vpop.f32.mrb[0].mxu0
  %v5851 = vadd.f32 %v5578, %v5850
  %v5852 = vpop.f32.mrb[0].mxu0
  %5853 = vmatprep.mubr.f32.mxu0 0.0
  %v5854 = vand.u32 %v3982, 4294901760
  %5855 = vmatmul.mubr.f32.gmra.mrb[0].mxu0 %v5854
  %v5856 = vpop.f32.mrb[0].mxu0
  %v5857 = vadd.f32 %v5584, %v5856
  %v5858 = vpop.f32.mrb[0].mxu0
  %5859 = vmatprep.mubr.f32.mxu0 0.0
  %v5860 = vand.u32 %v3983, 4294901760
  %5861 = vmatmul.mubr.f32.gmra.mrb[0].mxu0 %v5860
  %v5862 = vpop.f32.mrb[0].mxu0
  %v5863 = vadd.f32 %v5590, %v5862
  %v5864 = vpop.f32.mrb[0].mxu0
  %5865 = vmatprep.mubr.f32.mxu0 0.0
  %v5866 = vand.u32 %v3984, 4294901760
  %5867 = vmatmul.mubr.f32.gmra.mrb[0].mxu0 %v5866
  %v5868 = vpop.f32.mrb[0].mxu0
  %v5869 = vadd.f32 %v5596, %v5868
  %v5870 = vpop.f32.mrb[0].mxu0
  %5871 = vmatprep.mubr.f32.mxu0 0.0
  %v5872 = vand.u32 %v3985, 4294901760
  %5873 = vmatmul.mubr.f32.gmra.mrb[0].mxu0 %v5872
  %v5874 = vpop.f32.mrb[0].mxu0
  %v5875 = vadd.f32 %v5602, %v5874
  %v5876 = vpop.f32.mrb[0].mxu0
  %5877 = vmatprep.mubr.f32.mxu0 0.0
  %v5878 = vand.u32 %v3986, 4294901760
  %5879 = vmatmul.mubr.f32.gmra.mrb[0].mxu0 %v5878
  %v5880 = vpop.f32.mrb[0].mxu0
  %v5881 = vadd.f32 %v5608, %v5880
  %v5882 = vpop.f32.mrb[0].mxu0
  %5883 = vmatprep.mubr.f32.mxu0 0.0
  %v5884 = vand.u32 %v3987, 4294901760
  %5885 = vmatmul.mubr.f32.gmra.mrb[0].mxu0 %v5884
  %v5886 = vpop.f32.mrb[0].mxu0
  %v5887 = vadd.f32 %v5614, %v5886
  %v5888 = vpop.f32.mrb[0].mxu0
  %5889 = vmatprep.mubr.f32.mxu0 0.0
  %v5890 = vand.u32 %v3988, 4294901760
  %5891 = vmatmul.mubr.f32.gmra.mrb[0].mxu0 %v5890
  %v5892 = vpop.f32.mrb[0].mxu0
  %v5893 = vadd.f32 %v5620, %v5892
  %v5894 = vpop.f32.mrb[0].mxu0
  %5895 = vmatprep.mubr.f32.mxu0 0.0
  %v5896 = vand.u32 %v3989, 4294901760
  %5897 = vmatmul.mubr.f32.gmra.mrb[0].mxu0 %v5896
  %v5898 = vpop.f32.mrb[0].mxu0
  %v5899 = vadd.f32 %v5626, %v5898
  %v5900 = vpop.f32.mrb[0].mxu0
  %5901 = vmatprep.mubr.f32.mxu0 0.0
  %v5902 = vand.u32 %v3990, 4294901760
  %5903 = vmatmul.mubr.f32.gmra.mrb[0].mxu0 %v5902
  %v5904 = vpop.f32.mrb[0].mxu0
  %v5905 = vadd.f32 %v5632, %v5904
  %v5906 = vpop.f32.mrb[0].mxu0
  %5907 = vmatprep.mubr.f32.mxu0 0.0
  %v5908 = vand.u32 %v3991, 4294901760
  %5909 = vmatmul.mubr.f32.gmra.mrb[0].mxu0 %v5908
  %v5910 = vpop.f32.mrb[0].mxu0
  %v5911 = vadd.f32 %v5638, %v5910
  %v5912 = vpop.f32.mrb[0].mxu0
  %5913 = vmatprep.mubr.f32.mxu0 0.0
  %v5914 = vand.u32 %v3992, 4294901760
  %5915 = vmatmul.mubr.f32.gmra.mrb[0].mxu0 %v5914
  %v5916 = vpop.f32.mrb[0].mxu0
  %v5917 = vadd.f32 %v5644, %v5916
  %v5918 = vpop.f32.mrb[0].mxu0
  %5919 = vmatprep.mubr.f32.mxu0 0.0
  %v5920 = vand.u32 %v3993, 4294901760
  %5921 = vmatmul.mubr.f32.gmra.mrb[0].mxu0 %v5920
  %v5922 = vpop.f32.mrb[0].mxu0
  %v5923 = vadd.f32 %v5650, %v5922
  %v5924 = vpop.f32.mrb[0].mxu0
  %5925 = vmatprep.mubr.f32.mxu0 0.0
  %v5926 = vand.u32 %v3994, 4294901760
  %5927 = vmatmul.mubr.f32.gmra.mrb[0].mxu0 %v5926
  %v5928 = vpop.f32.mrb[0].mxu0
  %v5929 = vadd.f32 %v5656, %v5928
  %v5930 = vpop.f32.mrb[0].mxu0
  %5931 = vmatprep.mubr.f32.mxu0 0.0
  %v5932 = vand.u32 %v3995, 4294901760
  %5933 = vmatmul.mubr.f32.gmra.mrb[0].mxu0 %v5932
  %v5934 = vpop.f32.mrb[0].mxu0
  %v5935 = vadd.f32 %v5662, %v5934
  %v5936 = vpop.f32.mrb[0].mxu0
  %5937 = vmatprep.mubr.f32.mxu0 0.0
  %v5938 = vand.u32 %v3996, 4294901760
  %5939 = vmatmul.mubr.f32.gmra.mrb[0].mxu0 %v5938
  %v5940 = vpop.f32.mrb[0].mxu0
  %v5941 = vadd.f32 %v5668, %v5940
  %v5942 = vpop.f32.mrb[0].mxu0
  %5943 = vmatprep.mubr.f32.mxu0 0.0
  %v5944 = vand.u32 %v3997, 4294901760
  %5945 = vmatmul.mubr.f32.gmra.mrb[0].mxu0 %v5944
  %v5946 = vpop.f32.mrb[0].mxu0
  %v5947 = vadd.f32 %v5674, %v5946
  %v5948 = vpop.f32.mrb[0].mxu0
  %5949 = vmatprep.mubr.f32.mxu0 0.0
  %v5950 = vand.u32 %v3998, 4294901760
  %5951 = vmatmul.mubr.f32.gmra.mrb[0].mxu0 %v5950
  %v5952 = vpop.f32.mrb[0].mxu0
  %v5953 = vadd.f32 %v5680, %v5952
  %v5954 = vpop.f32.mrb[0].mxu0
  %5955 = vmatprep.mubr.f32.mxu0 0.0
  %v5956 = vand.u32 %v3999, 4294901760
  %5957 = vmatmul.mubr.f32.gmra.mrb[0].mxu0 %v5956
  %v5958 = vpop.f32.mrb[0].mxu0
  %v5959 = vadd.f32 %v5686, %v5958
  %v5960 = vpop.f32.mrb[0].mxu0
  %5961 = vmatprep.mubr.f32.mxu0 0.0
  %v5962 = vand.u32 %v4000, 4294901760
  %5963 = vmatmul.mubr.f32.gmra.mrb[0].mxu0 %v5962
  %v5964 = vpop.f32.mrb[0].mxu0
  %v5965 = vadd.f32 %v5692, %v5964
  %v5966 = vpop.f32.mrb[0].mxu0
  %5967 = vmatprep.mubr.f32.mxu0 0.0
  %v5968 = vand.u32 %v4001, 4294901760
  %5969 = vmatmul.mubr.f32.gmra.mrb[0].mxu0 %v5968
  %v5970 = vpop.f32.mrb[0].mxu0
  %v5971 = vadd.f32 %v5698, %v5970
  %v5972 = vpop.f32.mrb[0].mxu0
  %5973 = vmatprep.mubr.f32.mxu0 0.0
  %v5974 = vand.u32 %v4002, 4294901760
  %5975 = vmatmul.mubr.f32.gmra.mrb[0].mxu0 %v5974
  %v5976 = vpop.f32.mrb[0].mxu0
  %v5977 = vadd.f32 %v5704, %v5976
  %v5978 = vpop.f32.mrb[0].mxu0
  %5979 = vmatprep.mubr.f32.mxu0 0.0
  %v5980 = vand.u32 %v4003, 4294901760
  %5981 = vmatmul.mubr.f32.gmra.mrb[0].mxu0 %v5980
  %v5982 = vpop.f32.mrb[0].mxu0
  %v5983 = vadd.f32 %v5710, %v5982
  %v5984 = vpop.f32.mrb[0].mxu0
  %5985 = vmatprep.mubr.f32.mxu0 0.0
  %v5986 = vand.u32 %v4004, 4294901760
  %5987 = vmatmul.mubr.f32.gmra.mrb[0].mxu0 %v5986
  %v5988 = vpop.f32.mrb[0].mxu0
  %v5989 = vadd.f32 %v5716, %v5988
  %v5990 = vpop.f32.mrb[0].mxu0
  %5991 = vmatprep.mubr.f32.mxu0 0.0
  %v5992 = vand.u32 %v4005, 4294901760
  %5993 = vmatmul.mubr.f32.gmra.mrb[0].mxu0 %v5992
  %v5994 = vpop.f32.mrb[0].mxu0
  %v5995 = vadd.f32 %v5722, %v5994
  %v5996 = vpop.f32.mrb[0].mxu0
  %5997 = vmatprep.mubr.f32.mxu0 0.0
  %v5998 = vand.u32 %v4006, 4294901760
  %5999 = vmatmul.mubr.f32.gmra.mrb[0].mxu0 %v5998
  %v6000 = vpop.f32.mrb[0].mxu0
  %v6001 = vadd.f32 %v5728, %v6000
  %v6002 = vpop.f32.mrb[0].mxu0
  %6003 = vdwg.mxu0
  %v6004 = vtanh.pop %v5815
  %v6005 = vtanh.pop %v5821
  %v6006 = vtanh.pop %v5827
  %v6007 = vtanh.pop %v5833
  %v6008 = vtanh.pop %v5839
  %v6009 = vtanh.pop %v5845
  %v6010 = vtanh.pop %v5851
  %v6011 = vtanh.pop %v5857
  %v6012 = vtanh.pop %v5863
  %v6013 = vtanh.pop %v5869
  %v6014 = vtanh.pop %v5875
  %v6015 = vtanh.pop %v5881
  %v6016 = vtanh.pop %v5887
  %v6017 = vtanh.pop %v5893
  %v6018 = vtanh.pop %v5899
  %v6019 = vtanh.pop %v5905
  %v6020 = vtanh.pop %v5911
  %v6021 = vtanh.pop %v5917
  %v6022 = vtanh.pop %v5923
  %v6023 = vtanh.pop %v5929
  %v6024 = vtanh.pop %v5935
  %v6025 = vtanh.pop %v5941
  %v6026 = vtanh.pop %v5947
  %v6027 = vtanh.pop %v5953
  %v6028 = vtanh.pop %v5959
  %v6029 = vtanh.pop %v5965
  %v6030 = vtanh.pop %v5971
  %v6031 = vtanh.pop %v5977
  %v6032 = vtanh.pop %v5983
  %v6033 = vtanh.pop %v5989
  %v6034 = vtanh.pop %v5995
  %v6035 = vtanh.pop %v6001
  %vm6036 = vcmask 523264
  %6037 = vst.msk [vmem:[%s7] sm:$0xff] %vm6036, %v6004
  %6038 = vst.msk [vmem:[%s7 + $0x8] sm:$0xff] %vm6036, %v6005
  %6039 = vst.msk [vmem:[%s7 + $0x10] sm:$0xff] %vm6036, %v6006
  %6040 = vst.msk [vmem:[%s7 + $0x18] sm:$0xff] %vm6036, %v6007
  %6041 = vst.msk [vmem:[%s7 + $0x20] sm:$0xff] %vm6036, %v6008
  %6042 = vst.msk [vmem:[%s7 + $0x28] sm:$0xff] %vm6036, %v6009
  %6043 = vst.msk [vmem:[%s7 + $0x30] sm:$0xff] %vm6036, %v6010
  %6044 = vst.msk [vmem:[%s7 + $0x38] sm:$0xff] %vm6036, %v6011
  %6045 = vst.msk [vmem:[%s7 + $0x40] sm:$0xff] %vm6036, %v6012
  %6046 = vst.msk [vmem:[%s7 + $0x48] sm:$0xff] %vm6036, %v6013
  %6047 = vst.msk [vmem:[%s7 + $0x50] sm:$0xff] %vm6036, %v6014
  %6048 = vst.msk [vmem:[%s7 + $0x58] sm:$0xff] %vm6036, %v6015
  %6049 = vst.msk [vmem:[%s7 + $0x60] sm:$0xff] %vm6036, %v6016
  %6050 = vst.msk [vmem:[%s7 + $0x68] sm:$0xff] %vm6036, %v6017
  %6051 = vst.msk [vmem:[%s7 + $0x70] sm:$0xff] %vm6036, %v6018
  %6052 = vst.msk [vmem:[%s7 + $0x78] sm:$0xff] %vm6036, %v6019
  %6053 = vst.msk [vmem:[%s7 + $0x80] sm:$0xff] %vm6036, %v6020
  %6054 = vst.msk [vmem:[%s7 + $0x88] sm:$0xff] %vm6036, %v6021
  %6055 = vst.msk [vmem:[%s7 + $0x90] sm:$0xff] %vm6036, %v6022
  %6056 = vst.msk [vmem:[%s7 + $0x98] sm:$0xff] %vm6036, %v6023
  %6057 = vst.msk [vmem:[%s7 + $0xa0] sm:$0xff] %vm6036, %v6024
  %6058 = vst.msk [vmem:[%s7 + $0xa8] sm:$0xff] %vm6036, %v6025
  %6059 = vst.msk [vmem:[%s7 + $0xb0] sm:$0xff] %vm6036, %v6026
  %6060 = vst.msk [vmem:[%s7 + $0xb8] sm:$0xff] %vm6036, %v6027
  %6061 = vst.msk [vmem:[%s7 + $0xc0] sm:$0xff] %vm6036, %v6028
  %6062 = vst.msk [vmem:[%s7 + $0xc8] sm:$0xff] %vm6036, %v6029
  %6063 = vst.msk [vmem:[%s7 + $0xd0] sm:$0xff] %vm6036, %v6030
  %6064 = vst.msk [vmem:[%s7 + $0xd8] sm:$0xff] %vm6036, %v6031
  %6065 = vst.msk [vmem:[%s7 + $0xe0] sm:$0xff] %vm6036, %v6032
  %6066 = vst.msk [vmem:[%s7 + $0xe8] sm:$0xff] %vm6036, %v6033
  %6067 = vst.msk [vmem:[%s7 + $0xf0] sm:$0xff] %vm6036, %v6034
  %6068 = vst.msk [vmem:[%s7 + $0xf8] sm:$0xff] %vm6036, %v6035
  // Predicated region
  $region30: #{tpu_custom_call.1} parent=0 // pred_check
    _
  $region31: #{tpu_custom_call.1} parent=0 // pred_check_branch
    %6070 = sbr.rel (0) target = $region33
  $region32: #{tpu_custom_call.1} parent=0 // pred_region
    _
  $region33: #{tpu_custom_call.1} parent=0 // pred_fallthru
    _
  // Predicated region
  $region34: #{tpu_custom_call.1} parent=0 // pred_check
    _
  $region35: #{tpu_custom_call.1} parent=0 // pred_check_branch
    %6072 = sbr.rel (0) target = $region37
  $region36: #{tpu_custom_call.1} parent=0 // pred_region
    _
  $region37: #{tpu_custom_call.1} parent=0 // pred_fallthru
    _

</llo_original>
